<compile_context>
chip_gen: v6e
topology: v6e:2x2x1
jax: 0.10.0
libtpu: 0.0.40
codegen_flags: <defaults>
</compile_context>

<pallas_src>
import math

import jax
import jax.numpy as jnp
from jax import lax
from jax.experimental import pallas as pl
from jax.experimental.pallas import tpu as pltpu  # noqa: F401  (TPU backend)

# --- Config (matches the PyTorch Config dataclass) ---
D_MODEL = 128
NUM_HEADS = 4
HEAD_DIM = D_MODEL // NUM_HEADS
SEQ_LEN = 64
MULTIPLE_OF = 4
_hidden = 4 * D_MODEL
_hidden = int(2 * _hidden / 3)
HIDDEN = MULTIPLE_OF * ((_hidden + MULTIPLE_OF - 1) // MULTIPLE_OF)  # 344
HIDDEN_PAD = 384          # 3 * 128: fully aligned lanes / full MXU tiles
LN_EPS = 1e-5             # torch.nn.LayerNorm default
_SCALE = 1.0 / math.sqrt(HEAD_DIM)
_NEG_INF = -1e30          # large finite negative (robust causal masking)


def _layernorm(x, gamma, beta):
    mu = jnp.mean(x, axis=-1, keepdims=True)
    var = jnp.mean((x - mu) ** 2, axis=-1, keepdims=True)
    return (x - mu) * lax.rsqrt(var + LN_EPS) * gamma + beta


def block_kernel(x_ref, sp_ref, wqkv_ref, wp_ref, w13_ref, w2_ref, o_ref):
    """Fused transformer block (see module docstring). All math f32."""
    x = x_ref[...]                                           # (S, D) f32
    sp = sp_ref[...]                                         # (8, D) packed small params
    h1 = _layernorm(x, sp[0:1, :], sp[1:2, :])

    # Fused QKV projection (f32). Q columns already scaled by 1/sqrt(hd),
    # V columns already permuted per-head [even dims | odd dims] at pack time.
    qkv = jnp.dot(h1, wqkv_ref[...], preferred_element_type=jnp.float32)   # (S, 3D)
    q = qkv[:, 0:D_MODEL] + sp[5:6, :]
    k = qkv[:, D_MODEL:2 * D_MODEL] + sp[6:7, :]
    v = qkv[:, 2 * D_MODEL:3 * D_MODEL] + sp[7:8, :]

    s_len = x.shape[0]
    row = lax.broadcasted_iota(jnp.int32, (s_len, s_len), 0)
    col = lax.broadcasted_iota(jnp.int32, (s_len, s_len), 1)
    causal_add = jnp.where(row >= col, 0.0, _NEG_INF).astype(jnp.float32)  # hoisted

    half = HEAD_DIM // 2
    evens, odds = [], []
    for hh in range(NUM_HEADS):                              # static 4-head loop
        lo = hh * HEAD_DIM
        qh = q[:, lo:lo + HEAD_DIM]                          # (S, hd)
        kh = k[:, lo:lo + HEAD_DIM]                          # (S, hd)
        vh = v[:, lo:lo + HEAD_DIM]                          # (S, hd) permuted feats
        # scores: contract feature dims directly (no K transpose).
        sc = lax.dot_general(qh, kh, (((1,), (1,)), ((), ())),
                             preferred_element_type=jnp.float32)           # (S, S)
        sc = sc + causal_add
        m = jnp.max(sc, axis=-1, keepdims=True)
        p = jnp.exp(sc - m)
        p = p / jnp.sum(p, axis=-1, keepdims=True)
        # per-head output, directly transposed: (hd, S) without jnp.transpose.
        ohT = lax.dot_general(vh, p, (((0,), (1,)), ((), ())),
                              preferred_element_type=jnp.float32)          # (hd, S)
        evens.append(ohT[:half, :])                          # even original dims
        odds.append(ohT[half:, :])                           # odd original dims

    # Reference re-interleave (H,S,hd)->transpose(1,2)->view(S,D):
    # scrambled = hstack(E, O); fold the hstack into the proj by splitting Wp.
    E = jnp.concatenate(evens, axis=0)                       # (S, S)
    O = jnp.concatenate(odds, axis=0)                        # (S, S)
    attn = (jnp.dot(E, wp_ref[0:D_MODEL // 2, :], preferred_element_type=jnp.float32)
            + jnp.dot(O, wp_ref[D_MODEL // 2:D_MODEL, :], preferred_element_type=jnp.float32)
            + sp[4:5, :])
    x2 = x + attn                                            # residual 1

    h2 = _layernorm(x2, sp[2:3, :], sp[3:4, :])
    # SwiGLU MLP, chunked over three 128-lane slices of the padded hidden so
    # the (S, 768) f32 intermediate is never fully live (no vreg spills).
    ff = jnp.zeros((s_len, D_MODEL), jnp.float32)
    for c in range(HIDDEN_PAD // 128):
        u = jnp.dot(h2, w13_ref[:, c * 128:(c + 1) * 128],
                    preferred_element_type=jnp.float32)                    # (S, 128)
        g = jnp.dot(h2, w13_ref[:, HIDDEN_PAD + c * 128:HIDDEN_PAD + (c + 1) * 128],
                    preferred_element_type=jnp.float32)                    # (S, 128)
        act = (u * jax.nn.sigmoid(u)) * g                    # silu(w1 x) * w3 x
        ff = ff + jnp.dot(act, w2_ref[c * 128:(c + 1) * 128, :],
                          preferred_element_type=jnp.float32)
    o_ref[...] = x2 + ff                                     # residual 2


def pack_params(params):
    """Fuse / permute / pad torch-layout params for the fused kernel (all f32)."""
    # V-feature permutation that folds the reference's batch-dropping
    # transpose(1,2).view() re-interleave into the V projection columns:
    # per head, even feature dims first, then odd feature dims.
    perm = []
    for h in range(NUM_HEADS):
        base = h * HEAD_DIM
        perm += [base + 2 * j for j in range(HEAD_DIM // 2)]
        perm += [base + 2 * j + 1 for j in range(HEAD_DIM // 2)]
    perm = jnp.asarray(perm, jnp.int32)

    # Fold 1/sqrt(head_dim) into the Q weight & bias columns.
    wqkv = jnp.concatenate([params["wq_t"] * _SCALE, params["wk_t"],
                            params["wv_t"][:, perm]], axis=1)            # (D, 3D)

    # Pack the small row parameters into a single (8, D) array (one DMA):
    # rows: ln1_g, ln1_b, ln2_g, ln2_b, bp, bq*scale, bk, bv_perm.
    sp = jnp.concatenate([params["ln1_g"], params["ln1_b"],
                          params["ln2_g"], params["ln2_b"],
                          params["bp"],
                          params["bq"] * _SCALE, params["bk"],
                          params["bv"][:, perm]], axis=0)                # (8, D)

    pad_h = HIDDEN_PAD - HIDDEN
    w1p = jnp.pad(params["w1_t"], ((0, 0), (0, pad_h)))                  # zero cols
    w3p = jnp.pad(params["w3_t"], ((0, 0), (0, pad_h)))
    w13 = jnp.concatenate([w1p, w3p], axis=1)                            # (D, 2*HP)
    w2p = jnp.pad(params["w2_t"], ((0, pad_h), (0, 0)))                  # (HP, D)

    return dict(sp=sp.astype(jnp.float32), wqkv=wqkv.astype(jnp.float32),
                wp=params["wp_t"].astype(jnp.float32),
                w13=w13.astype(jnp.float32), w2=w2p.astype(jnp.float32))


def block_forward(x, mask, packed):
    """x: (1, S, D) float32. Returns (1, S, D) float32."""
    del mask  # flash-attention path of the reference ignores it (is_causal=True)
    b, s, d = x.shape
    assert b == 1, "reference .view() drops the batch dim; only batch==1 is valid"
    assert d == D_MODEL
    xs = x[0]

    # No grid, no explicit specs: whole arrays land in VMEM, single invocation
    # (avoids the 1-step pipeline prologue/epilogue and double buffering).
    out = pl.pallas_call(
        block_kernel,
        out_shape=jax.ShapeDtypeStruct((s, d), jnp.float32),
    )(xs, packed["sp"], packed["wqkv"], packed["wp"], packed["w13"], packed["w2"])
    return out[None, ...]


def init_params(key):
    ks = jax.random.split(key, 8)

    def lin(k, fan_in, fan_out, bias=True):
        kw, kb = jax.random.split(k)
        w_t = jax.random.normal(kw, (fan_in, fan_out), jnp.float32) * 0.02
        if not bias:
            return w_t, None
        bb = jax.random.normal(kb, (1, fan_out), jnp.float32) * 0.02
        return w_t, bb

    wq_t, bq = lin(ks[0], D_MODEL, D_MODEL)          # nn.Linear default bias=True
    wk_t, bk = lin(ks[1], D_MODEL, D_MODEL)
    wv_t, bv = lin(ks[2], D_MODEL, D_MODEL)
    wp_t, bp = lin(ks[3], D_MODEL, D_MODEL)
    w1_t, _ = lin(ks[4], D_MODEL, HIDDEN, bias=False)
    w3_t, _ = lin(ks[5], D_MODEL, HIDDEN, bias=False)
    w2_t, _ = lin(ks[6], HIDDEN, D_MODEL, bias=False)
    return dict(
        ln1_g=jnp.ones((1, D_MODEL), jnp.float32),
        ln1_b=jnp.zeros((1, D_MODEL), jnp.float32),
        ln2_g=jnp.ones((1, D_MODEL), jnp.float32),
        ln2_b=jnp.zeros((1, D_MODEL), jnp.float32),
        wq_t=wq_t, bq=bq, wk_t=wk_t, bk=bk, wv_t=wv_t, bv=bv,
        wp_t=wp_t, bp=bp,
        w1_t=w1_t, w3_t=w3_t, w2_t=w2_t,
    )


if __name__ == "__main__":
    key = jax.random.PRNGKey(0)
    kx, kp = jax.random.split(key)
    params = init_params(kp)
    packed = pack_params(params)
    x = jax.random.normal(kx, (1, SEQ_LEN, D_MODEL), jnp.float32)
    # mask arg exists in the reference signature but is unused on the flash path.
    mask = jnp.zeros((1, 1, SEQ_LEN, SEQ_LEN), jnp.float32)

    out = block_forward(x, mask, packed)
    out = jax.block_until_ready(out)
    assert out.shape == (1, SEQ_LEN, D_MODEL) and out.dtype == jnp.float32
    assert bool(jnp.all(jnp.isfinite(out)))
    print("KERNEL_OK")
</pallas_src>

<mosaic_0001>
module attributes {stable_mosaic.version = 11 : i64} {
  func.func @block_kernel(%arg0: memref<64x128xf32, #tpu.memory_space<vmem>>, %arg1: memref<8x128xf32, #tpu.memory_space<vmem>>, %arg2: memref<128x384xf32, #tpu.memory_space<vmem>>, %arg3: memref<128x128xf32, #tpu.memory_space<vmem>>, %arg4: memref<128x768xf32, #tpu.memory_space<vmem>>, %arg5: memref<384x128xf32, #tpu.memory_space<vmem>>, %arg6: memref<64x128xf32, #tpu.memory_space<vmem>>) attributes {dimension_semantics = [], scalar_prefetch = 0 : i64, scratch_operands = 0 : i64, tpu.core_type = #tpu.core_type<tc>} {
    %c0 = arith.constant 0 : index
    %c0_0 = arith.constant 0 : index
    %0 = vector.load %arg0[%c0, %c0_0] : memref<64x128xf32, #tpu.memory_space<vmem>>, vector<64x128xf32>
    %c0_1 = arith.constant 0 : index
    %c0_2 = arith.constant 0 : index
    %1 = vector.load %arg1[%c0_1, %c0_2] : memref<8x128xf32, #tpu.memory_space<vmem>>, vector<8x128xf32>
    %2 = vector.extract_strided_slice %1 {offsets = [0, 0], sizes = [1, 128], strides = [1, 1]} : vector<8x128xf32> to vector<1x128xf32>
    %3 = vector.extract_strided_slice %1 {offsets = [1, 0], sizes = [1, 128], strides = [1, 1]} : vector<8x128xf32> to vector<1x128xf32>
    %cst = arith.constant dense<0.000000e+00> : vector<64xf32>
    %4 = vector.multi_reduction <add>, %0, %cst [1] : vector<64x128xf32> to vector<64xf32>
    %5 = vector.shape_cast %4 : vector<64xf32> to vector<64x1xf32>
    %cst_3 = arith.constant 1.280000e+02 : f32
    %6 = vector.broadcast %cst_3 : f32 to vector<64x1xf32>
    %7 = arith.divf %5, %6 : vector<64x1xf32>
    %8 = vector.broadcast %7 : vector<64x1xf32> to vector<64x128xf32>
    %9 = arith.subf %0, %8 : vector<64x128xf32>
    %10 = arith.mulf %9, %9 : vector<64x128xf32>
    %cst_4 = arith.constant dense<0.000000e+00> : vector<64xf32>
    %11 = vector.multi_reduction <add>, %10, %cst_4 [1] : vector<64x128xf32> to vector<64xf32>
    %12 = vector.shape_cast %11 : vector<64xf32> to vector<64x1xf32>
    %cst_5 = arith.constant 1.280000e+02 : f32
    %13 = vector.broadcast %cst_5 : f32 to vector<64x1xf32>
    %14 = arith.divf %12, %13 : vector<64x1xf32>
    %15 = vector.broadcast %7 : vector<64x1xf32> to vector<64x128xf32>
    %16 = arith.subf %0, %15 : vector<64x128xf32>
    %cst_6 = arith.constant 9.99999974E-6 : f32
    %17 = vector.broadcast %cst_6 : f32 to vector<64x1xf32>
    %18 = arith.addf %14, %17 : vector<64x1xf32>
    %19 = math.rsqrt %18 : vector<64x1xf32>
    %20 = vector.broadcast %19 : vector<64x1xf32> to vector<64x128xf32>
    %21 = arith.mulf %16, %20 : vector<64x128xf32>
    %22 = vector.broadcast %2 : vector<1x128xf32> to vector<64x128xf32>
    %23 = arith.mulf %21, %22 : vector<64x128xf32>
    %24 = vector.broadcast %3 : vector<1x128xf32> to vector<64x128xf32>
    %25 = arith.addf %23, %24 : vector<64x128xf32>
    %c0_7 = arith.constant 0 : index
    %c0_8 = arith.constant 0 : index
    %26 = vector.load %arg2[%c0_7, %c0_8] : memref<128x384xf32, #tpu.memory_space<vmem>>, vector<128x384xf32>
    %cst_9 = arith.constant dense<0.000000e+00> : vector<64x384xf32>
    %27 = tpu.matmul %25, %26, %cst_9 {dimension_numbers = #tpu.dot_dimension_numbers<[1], [0], [0], [1], [0, 0, 1, 1], [], []>} : vector<64x128xf32>, vector<128x384xf32>, vector<64x384xf32> -> vector<64x384xf32>
    %28 = vector.extract_strided_slice %27 {offsets = [0, 0], sizes = [64, 128], strides = [1, 1]} : vector<64x384xf32> to vector<64x128xf32>
    %29 = vector.extract_strided_slice %1 {offsets = [5, 0], sizes = [1, 128], strides = [1, 1]} : vector<8x128xf32> to vector<1x128xf32>
    %30 = vector.broadcast %29 : vector<1x128xf32> to vector<64x128xf32>
    %31 = arith.addf %28, %30 : vector<64x128xf32>
    %32 = vector.extract_strided_slice %27 {offsets = [0, 128], sizes = [64, 128], strides = [1, 1]} : vector<64x384xf32> to vector<64x128xf32>
    %33 = vector.extract_strided_slice %1 {offsets = [6, 0], sizes = [1, 128], strides = [1, 1]} : vector<8x128xf32> to vector<1x128xf32>
    %34 = vector.broadcast %33 : vector<1x128xf32> to vector<64x128xf32>
    %35 = arith.addf %32, %34 : vector<64x128xf32>
    %36 = vector.extract_strided_slice %27 {offsets = [0, 256], sizes = [64, 128], strides = [1, 1]} : vector<64x384xf32> to vector<64x128xf32>
    %37 = vector.extract_strided_slice %1 {offsets = [7, 0], sizes = [1, 128], strides = [1, 1]} : vector<8x128xf32> to vector<1x128xf32>
    %38 = vector.broadcast %37 : vector<1x128xf32> to vector<64x128xf32>
    %39 = arith.addf %36, %38 : vector<64x128xf32>
    %40 = tpu.iota {dimensions = array<i32: 0>} : vector<64x64xi32>
    %41 = tpu.iota {dimensions = array<i32: 1>} : vector<64x64xi32>
    %42 = arith.cmpi sge, %40, %41 : vector<64x64xi32>
    %cst_10 = arith.constant 0.000000e+00 : f32
    %cst_11 = arith.constant -1.000000e+30 : f32
    %43 = vector.broadcast %cst_10 : f32 to vector<64x64xf32>
    %44 = vector.broadcast %cst_11 : f32 to vector<64x64xf32>
    %45 = arith.select %42, %43, %44 : vector<64x64xi1>, vector<64x64xf32>
    %46 = vector.extract_strided_slice %31 {offsets = [0, 0], sizes = [64, 32], strides = [1, 1]} : vector<64x128xf32> to vector<64x32xf32>
    %47 = vector.extract_strided_slice %35 {offsets = [0, 0], sizes = [64, 32], strides = [1, 1]} : vector<64x128xf32> to vector<64x32xf32>
    %48 = vector.extract_strided_slice %39 {offsets = [0, 0], sizes = [64, 32], strides = [1, 1]} : vector<64x128xf32> to vector<64x32xf32>
    %cst_12 = arith.constant dense<0.000000e+00> : vector<64x64xf32>
    %49 = tpu.matmul %46, %47, %cst_12 {dimension_numbers = #tpu.dot_dimension_numbers<[1], [1], [0], [0], [0, 0, 1, 0], [], []>} : vector<64x32xf32>, vector<64x32xf32>, vector<64x64xf32> -> vector<64x64xf32>
    %50 = arith.addf %49, %45 : vector<64x64xf32>
    %cst_13 = arith.constant dense<0xFF800000> : vector<64xf32>
    %51 = vector.multi_reduction <maximumf>, %50, %cst_13 [1] : vector<64x64xf32> to vector<64xf32>
    %52 = vector.shape_cast %51 : vector<64xf32> to vector<64x1xf32>
    %53 = vector.broadcast %52 : vector<64x1xf32> to vector<64x64xf32>
    %54 = arith.subf %50, %53 : vector<64x64xf32>
    %55 = math.exp %54 : vector<64x64xf32>
    %cst_14 = arith.constant dense<0.000000e+00> : vector<64xf32>
    %56 = vector.multi_reduction <add>, %55, %cst_14 [1] : vector<64x64xf32> to vector<64xf32>
    %57 = vector.shape_cast %56 : vector<64xf32> to vector<64x1xf32>
    %58 = vector.broadcast %57 : vector<64x1xf32> to vector<64x64xf32>
    %59 = arith.divf %55, %58 : vector<64x64xf32>
    %cst_15 = arith.constant dense<0.000000e+00> : vector<32x64xf32>
    %60 = tpu.matmul %48, %59, %cst_15 {dimension_numbers = #tpu.dot_dimension_numbers<[0], [1], [1], [0], [0, 1, 1, 0], [], []>} : vector<64x32xf32>, vector<64x64xf32>, vector<32x64xf32> -> vector<32x64xf32>
    %61 = vector.extract_strided_slice %60 {offsets = [0, 0], sizes = [16, 64], strides = [1, 1]} : vector<32x64xf32> to vector<16x64xf32>
    %62 = vector.extract_strided_slice %60 {offsets = [16, 0], sizes = [16, 64], strides = [1, 1]} : vector<32x64xf32> to vector<16x64xf32>
    %63 = vector.extract_strided_slice %31 {offsets = [0, 32], sizes = [64, 32], strides = [1, 1]} : vector<64x128xf32> to vector<64x32xf32>
    %64 = vector.extract_strided_slice %35 {offsets = [0, 32], sizes = [64, 32], strides = [1, 1]} : vector<64x128xf32> to vector<64x32xf32>
    %65 = vector.extract_strided_slice %39 {offsets = [0, 32], sizes = [64, 32], strides = [1, 1]} : vector<64x128xf32> to vector<64x32xf32>
    %cst_16 = arith.constant dense<0.000000e+00> : vector<64x64xf32>
    %66 = tpu.matmul %63, %64, %cst_16 {dimension_numbers = #tpu.dot_dimension_numbers<[1], [1], [0], [0], [0, 0, 1, 0], [], []>} : vector<64x32xf32>, vector<64x32xf32>, vector<64x64xf32> -> vector<64x64xf32>
    %67 = arith.addf %66, %45 : vector<64x64xf32>
    %cst_17 = arith.constant dense<0xFF800000> : vector<64xf32>
    %68 = vector.multi_reduction <maximumf>, %67, %cst_17 [1] : vector<64x64xf32> to vector<64xf32>
    %69 = vector.shape_cast %68 : vector<64xf32> to vector<64x1xf32>
    %70 = vector.broadcast %69 : vector<64x1xf32> to vector<64x64xf32>
    %71 = arith.subf %67, %70 : vector<64x64xf32>
    %72 = math.exp %71 : vector<64x64xf32>
    %cst_18 = arith.constant dense<0.000000e+00> : vector<64xf32>
    %73 = vector.multi_reduction <add>, %72, %cst_18 [1] : vector<64x64xf32> to vector<64xf32>
    %74 = vector.shape_cast %73 : vector<64xf32> to vector<64x1xf32>
    %75 = vector.broadcast %74 : vector<64x1xf32> to vector<64x64xf32>
    %76 = arith.divf %72, %75 : vector<64x64xf32>
    %cst_19 = arith.constant dense<0.000000e+00> : vector<32x64xf32>
    %77 = tpu.matmul %65, %76, %cst_19 {dimension_numbers = #tpu.dot_dimension_numbers<[0], [1], [1], [0], [0, 1, 1, 0], [], []>} : vector<64x32xf32>, vector<64x64xf32>, vector<32x64xf32> -> vector<32x64xf32>
    %78 = vector.extract_strided_slice %77 {offsets = [0, 0], sizes = [16, 64], strides = [1, 1]} : vector<32x64xf32> to vector<16x64xf32>
    %79 = vector.extract_strided_slice %77 {offsets = [16, 0], sizes = [16, 64], strides = [1, 1]} : vector<32x64xf32> to vector<16x64xf32>
    %80 = vector.extract_strided_slice %31 {offsets = [0, 64], sizes = [64, 32], strides = [1, 1]} : vector<64x128xf32> to vector<64x32xf32>
    %81 = vector.extract_strided_slice %35 {offsets = [0, 64], sizes = [64, 32], strides = [1, 1]} : vector<64x128xf32> to vector<64x32xf32>
    %82 = vector.extract_strided_slice %39 {offsets = [0, 64], sizes = [64, 32], strides = [1, 1]} : vector<64x128xf32> to vector<64x32xf32>
    %cst_20 = arith.constant dense<0.000000e+00> : vector<64x64xf32>
    %83 = tpu.matmul %80, %81, %cst_20 {dimension_numbers = #tpu.dot_dimension_numbers<[1], [1], [0], [0], [0, 0, 1, 0], [], []>} : vector<64x32xf32>, vector<64x32xf32>, vector<64x64xf32> -> vector<64x64xf32>
    %84 = arith.addf %83, %45 : vector<64x64xf32>
    %cst_21 = arith.constant dense<0xFF800000> : vector<64xf32>
    %85 = vector.multi_reduction <maximumf>, %84, %cst_21 [1] : vector<64x64xf32> to vector<64xf32>
    %86 = vector.shape_cast %85 : vector<64xf32> to vector<64x1xf32>
    %87 = vector.broadcast %86 : vector<64x1xf32> to vector<64x64xf32>
    %88 = arith.subf %84, %87 : vector<64x64xf32>
    %89 = math.exp %88 : vector<64x64xf32>
    %cst_22 = arith.constant dense<0.000000e+00> : vector<64xf32>
    %90 = vector.multi_reduction <add>, %89, %cst_22 [1] : vector<64x64xf32> to vector<64xf32>
    %91 = vector.shape_cast %90 : vector<64xf32> to vector<64x1xf32>
    %92 = vector.broadcast %91 : vector<64x1xf32> to vector<64x64xf32>
    %93 = arith.divf %89, %92 : vector<64x64xf32>
    %cst_23 = arith.constant dense<0.000000e+00> : vector<32x64xf32>
    %94 = tpu.matmul %82, %93, %cst_23 {dimension_numbers = #tpu.dot_dimension_numbers<[0], [1], [1], [0], [0, 1, 1, 0], [], []>} : vector<64x32xf32>, vector<64x64xf32>, vector<32x64xf32> -> vector<32x64xf32>
    %95 = vector.extract_strided_slice %94 {offsets = [0, 0], sizes = [16, 64], strides = [1, 1]} : vector<32x64xf32> to vector<16x64xf32>
    %96 = vector.extract_strided_slice %94 {offsets = [16, 0], sizes = [16, 64], strides = [1, 1]} : vector<32x64xf32> to vector<16x64xf32>
    %97 = vector.extract_strided_slice %31 {offsets = [0, 96], sizes = [64, 32], strides = [1, 1]} : vector<64x128xf32> to vector<64x32xf32>
    %98 = vector.extract_strided_slice %35 {offsets = [0, 96], sizes = [64, 32], strides = [1, 1]} : vector<64x128xf32> to vector<64x32xf32>
    %99 = vector.extract_strided_slice %39 {offsets = [0, 96], sizes = [64, 32], strides = [1, 1]} : vector<64x128xf32> to vector<64x32xf32>
    %cst_24 = arith.constant dense<0.000000e+00> : vector<64x64xf32>
    %100 = tpu.matmul %97, %98, %cst_24 {dimension_numbers = #tpu.dot_dimension_numbers<[1], [1], [0], [0], [0, 0, 1, 0], [], []>} : vector<64x32xf32>, vector<64x32xf32>, vector<64x64xf32> -> vector<64x64xf32>
    %101 = arith.addf %100, %45 : vector<64x64xf32>
    %cst_25 = arith.constant dense<0xFF800000> : vector<64xf32>
    %102 = vector.multi_reduction <maximumf>, %101, %cst_25 [1] : vector<64x64xf32> to vector<64xf32>
    %103 = vector.shape_cast %102 : vector<64xf32> to vector<64x1xf32>
    %104 = vector.broadcast %103 : vector<64x1xf32> to vector<64x64xf32>
    %105 = arith.subf %101, %104 : vector<64x64xf32>
    %106 = math.exp %105 : vector<64x64xf32>
    %cst_26 = arith.constant dense<0.000000e+00> : vector<64xf32>
    %107 = vector.multi_reduction <add>, %106, %cst_26 [1] : vector<64x64xf32> to vector<64xf32>
    %108 = vector.shape_cast %107 : vector<64xf32> to vector<64x1xf32>
    %109 = vector.broadcast %108 : vector<64x1xf32> to vector<64x64xf32>
    %110 = arith.divf %106, %109 : vector<64x64xf32>
    %cst_27 = arith.constant dense<0.000000e+00> : vector<32x64xf32>
    %111 = tpu.matmul %99, %110, %cst_27 {dimension_numbers = #tpu.dot_dimension_numbers<[0], [1], [1], [0], [0, 1, 1, 0], [], []>} : vector<64x32xf32>, vector<64x64xf32>, vector<32x64xf32> -> vector<32x64xf32>
    %112 = vector.extract_strided_slice %111 {offsets = [0, 0], sizes = [16, 64], strides = [1, 1]} : vector<32x64xf32> to vector<16x64xf32>
    %113 = vector.extract_strided_slice %111 {offsets = [16, 0], sizes = [16, 64], strides = [1, 1]} : vector<32x64xf32> to vector<16x64xf32>
    %114 = tpu.concatenate %61, %78, %95, %112 in 0 : vector<16x64xf32>, vector<16x64xf32>, vector<16x64xf32>, vector<16x64xf32> -> vector<64x64xf32>
    %115 = tpu.concatenate %62, %79, %96, %113 in 0 : vector<16x64xf32>, vector<16x64xf32>, vector<16x64xf32>, vector<16x64xf32> -> vector<64x64xf32>
    %c0_28 = arith.constant 0 : index
    %c0_29 = arith.constant 0 : index
    %116 = vector.load %arg3[%c0_28, %c0_29] : memref<128x128xf32, #tpu.memory_space<vmem>>, vector<64x128xf32>
    %cst_30 = arith.constant dense<0.000000e+00> : vector<64x128xf32>
    %117 = tpu.matmul %114, %116, %cst_30 {dimension_numbers = #tpu.dot_dimension_numbers<[1], [0], [0], [1], [0, 0, 1, 1], [], []>} : vector<64x64xf32>, vector<64x128xf32>, vector<64x128xf32> -> vector<64x128xf32>
    %c64 = arith.constant 64 : index
    %c0_31 = arith.constant 0 : index
    %118 = vector.load %arg3[%c64, %c0_31] : memref<128x128xf32, #tpu.memory_space<vmem>>, vector<64x128xf32>
    %cst_32 = arith.constant dense<0.000000e+00> : vector<64x128xf32>
    %119 = tpu.matmul %115, %118, %cst_32 {dimension_numbers = #tpu.dot_dimension_numbers<[1], [0], [0], [1], [0, 0, 1, 1], [], []>} : vector<64x64xf32>, vector<64x128xf32>, vector<64x128xf32> -> vector<64x128xf32>
    %120 = arith.addf %117, %119 : vector<64x128xf32>
    %121 = vector.extract_strided_slice %1 {offsets = [4, 0], sizes = [1, 128], strides = [1, 1]} : vector<8x128xf32> to vector<1x128xf32>
    %122 = vector.broadcast %121 : vector<1x128xf32> to vector<64x128xf32>
    %123 = arith.addf %120, %122 : vector<64x128xf32>
    %124 = arith.addf %0, %123 : vector<64x128xf32>
    %125 = vector.extract_strided_slice %1 {offsets = [2, 0], sizes = [1, 128], strides = [1, 1]} : vector<8x128xf32> to vector<1x128xf32>
    %126 = vector.extract_strided_slice %1 {offsets = [3, 0], sizes = [1, 128], strides = [1, 1]} : vector<8x128xf32> to vector<1x128xf32>
    %cst_33 = arith.constant dense<0.000000e+00> : vector<64xf32>
    %127 = vector.multi_reduction <add>, %124, %cst_33 [1] : vector<64x128xf32> to vector<64xf32>
    %128 = vector.shape_cast %127 : vector<64xf32> to vector<64x1xf32>
    %cst_34 = arith.constant 1.280000e+02 : f32
    %129 = vector.broadcast %cst_34 : f32 to vector<64x1xf32>
    %130 = arith.divf %128, %129 : vector<64x1xf32>
    %131 = vector.broadcast %130 : vector<64x1xf32> to vector<64x128xf32>
    %132 = arith.subf %124, %131 : vector<64x128xf32>
    %133 = arith.mulf %132, %132 : vector<64x128xf32>
    %cst_35 = arith.constant dense<0.000000e+00> : vector<64xf32>
    %134 = vector.multi_reduction <add>, %133, %cst_35 [1] : vector<64x128xf32> to vector<64xf32>
    %135 = vector.shape_cast %134 : vector<64xf32> to vector<64x1xf32>
    %cst_36 = arith.constant 1.280000e+02 : f32
    %136 = vector.broadcast %cst_36 : f32 to vector<64x1xf32>
    %137 = arith.divf %135, %136 : vector<64x1xf32>
    %138 = vector.broadcast %130 : vector<64x1xf32> to vector<64x128xf32>
    %139 = arith.subf %124, %138 : vector<64x128xf32>
    %cst_37 = arith.constant 9.99999974E-6 : f32
    %140 = vector.broadcast %cst_37 : f32 to vector<64x1xf32>
    %141 = arith.addf %137, %140 : vector<64x1xf32>
    %142 = math.rsqrt %141 : vector<64x1xf32>
    %143 = vector.broadcast %142 : vector<64x1xf32> to vector<64x128xf32>
    %144 = arith.mulf %139, %143 : vector<64x128xf32>
    %145 = vector.broadcast %125 : vector<1x128xf32> to vector<64x128xf32>
    %146 = arith.mulf %144, %145 : vector<64x128xf32>
    %147 = vector.broadcast %126 : vector<1x128xf32> to vector<64x128xf32>
    %148 = arith.addf %146, %147 : vector<64x128xf32>
    %cst_38 = arith.constant 0.000000e+00 : f32
    %149 = vector.broadcast %cst_38 : f32 to vector<64x128xf32>
    %c0_39 = arith.constant 0 : index
    %c0_40 = arith.constant 0 : index
    %150 = vector.load %arg4[%c0_39, %c0_40] : memref<128x768xf32, #tpu.memory_space<vmem>>, vector<128x128xf32>
    %cst_41 = arith.constant dense<0.000000e+00> : vector<64x128xf32>
    %151 = tpu.matmul %148, %150, %cst_41 {dimension_numbers = #tpu.dot_dimension_numbers<[1], [0], [0], [1], [0, 0, 1, 1], [], []>} : vector<64x128xf32>, vector<128x128xf32>, vector<64x128xf32> -> vector<64x128xf32>
    %c0_42 = arith.constant 0 : index
    %c384 = arith.constant 384 : index
    %152 = vector.load %arg4[%c0_42, %c384] : memref<128x768xf32, #tpu.memory_space<vmem>>, vector<128x128xf32>
    %cst_43 = arith.constant dense<0.000000e+00> : vector<64x128xf32>
    %153 = tpu.matmul %148, %152, %cst_43 {dimension_numbers = #tpu.dot_dimension_numbers<[1], [0], [0], [1], [0, 0, 1, 1], [], []>} : vector<64x128xf32>, vector<128x128xf32>, vector<64x128xf32> -> vector<64x128xf32>
    %154 = arith.negf %151 : vector<64x128xf32>
    %155 = math.exp %154 : vector<64x128xf32>
    %cst_44 = arith.constant 1.000000e+00 : f32
    %156 = vector.broadcast %cst_44 : f32 to vector<64x128xf32>
    %157 = arith.addf %156, %155 : vector<64x128xf32>
    %158 = arith.divf %156, %157 : vector<64x128xf32>
    %159 = arith.mulf %151, %158 : vector<64x128xf32>
    %160 = arith.mulf %159, %153 : vector<64x128xf32>
    %c0_45 = arith.constant 0 : index
    %c0_46 = arith.constant 0 : index
    %161 = vector.load %arg5[%c0_45, %c0_46] : memref<384x128xf32, #tpu.memory_space<vmem>>, vector<128x128xf32>
    %cst_47 = arith.constant dense<0.000000e+00> : vector<64x128xf32>
    %162 = tpu.matmul %160, %161, %cst_47 {dimension_numbers = #tpu.dot_dimension_numbers<[1], [0], [0], [1], [0, 0, 1, 1], [], []>} : vector<64x128xf32>, vector<128x128xf32>, vector<64x128xf32> -> vector<64x128xf32>
    %163 = arith.addf %149, %162 : vector<64x128xf32>
    %c0_48 = arith.constant 0 : index
    %c128 = arith.constant 128 : index
    %164 = vector.load %arg4[%c0_48, %c128] : memref<128x768xf32, #tpu.memory_space<vmem>>, vector<128x128xf32>
    %cst_49 = arith.constant dense<0.000000e+00> : vector<64x128xf32>
    %165 = tpu.matmul %148, %164, %cst_49 {dimension_numbers = #tpu.dot_dimension_numbers<[1], [0], [0], [1], [0, 0, 1, 1], [], []>} : vector<64x128xf32>, vector<128x128xf32>, vector<64x128xf32> -> vector<64x128xf32>
    %c0_50 = arith.constant 0 : index
    %c512 = arith.constant 512 : index
    %166 = vector.load %arg4[%c0_50, %c512] : memref<128x768xf32, #tpu.memory_space<vmem>>, vector<128x128xf32>
    %cst_51 = arith.constant dense<0.000000e+00> : vector<64x128xf32>
    %167 = tpu.matmul %148, %166, %cst_51 {dimension_numbers = #tpu.dot_dimension_numbers<[1], [0], [0], [1], [0, 0, 1, 1], [], []>} : vector<64x128xf32>, vector<128x128xf32>, vector<64x128xf32> -> vector<64x128xf32>
    %168 = arith.negf %165 : vector<64x128xf32>
    %169 = math.exp %168 : vector<64x128xf32>
    %cst_52 = arith.constant 1.000000e+00 : f32
    %170 = vector.broadcast %cst_52 : f32 to vector<64x128xf32>
    %171 = arith.addf %170, %169 : vector<64x128xf32>
    %172 = arith.divf %170, %171 : vector<64x128xf32>
    %173 = arith.mulf %165, %172 : vector<64x128xf32>
    %174 = arith.mulf %173, %167 : vector<64x128xf32>
    %c128_53 = arith.constant 128 : index
    %c0_54 = arith.constant 0 : index
    %175 = vector.load %arg5[%c128_53, %c0_54] : memref<384x128xf32, #tpu.memory_space<vmem>>, vector<128x128xf32>
    %cst_55 = arith.constant dense<0.000000e+00> : vector<64x128xf32>
    %176 = tpu.matmul %174, %175, %cst_55 {dimension_numbers = #tpu.dot_dimension_numbers<[1], [0], [0], [1], [0, 0, 1, 1], [], []>} : vector<64x128xf32>, vector<128x128xf32>, vector<64x128xf32> -> vector<64x128xf32>
    %177 = arith.addf %163, %176 : vector<64x128xf32>
    %c0_56 = arith.constant 0 : index
    %c256 = arith.constant 256 : index
    %178 = vector.load %arg4[%c0_56, %c256] : memref<128x768xf32, #tpu.memory_space<vmem>>, vector<128x128xf32>
    %cst_57 = arith.constant dense<0.000000e+00> : vector<64x128xf32>
    %179 = tpu.matmul %148, %178, %cst_57 {dimension_numbers = #tpu.dot_dimension_numbers<[1], [0], [0], [1], [0, 0, 1, 1], [], []>} : vector<64x128xf32>, vector<128x128xf32>, vector<64x128xf32> -> vector<64x128xf32>
    %c0_58 = arith.constant 0 : index
    %c640 = arith.constant 640 : index
    %180 = vector.load %arg4[%c0_58, %c640] : memref<128x768xf32, #tpu.memory_space<vmem>>, vector<128x128xf32>
    %cst_59 = arith.constant dense<0.000000e+00> : vector<64x128xf32>
    %181 = tpu.matmul %148, %180, %cst_59 {dimension_numbers = #tpu.dot_dimension_numbers<[1], [0], [0], [1], [0, 0, 1, 1], [], []>} : vector<64x128xf32>, vector<128x128xf32>, vector<64x128xf32> -> vector<64x128xf32>
    %182 = arith.negf %179 : vector<64x128xf32>
    %183 = math.exp %182 : vector<64x128xf32>
    %cst_60 = arith.constant 1.000000e+00 : f32
    %184 = vector.broadcast %cst_60 : f32 to vector<64x128xf32>
    %185 = arith.addf %184, %183 : vector<64x128xf32>
    %186 = arith.divf %184, %185 : vector<64x128xf32>
    %187 = arith.mulf %179, %186 : vector<64x128xf32>
    %188 = arith.mulf %187, %181 : vector<64x128xf32>
    %c256_61 = arith.constant 256 : index
    %c0_62 = arith.constant 0 : index
    %189 = vector.load %arg5[%c256_61, %c0_62] : memref<384x128xf32, #tpu.memory_space<vmem>>, vector<128x128xf32>
    %cst_63 = arith.constant dense<0.000000e+00> : vector<64x128xf32>
    %190 = tpu.matmul %188, %189, %cst_63 {dimension_numbers = #tpu.dot_dimension_numbers<[1], [0], [0], [1], [0, 0, 1, 1], [], []>} : vector<64x128xf32>, vector<128x128xf32>, vector<64x128xf32> -> vector<64x128xf32>
    %191 = arith.addf %177, %190 : vector<64x128xf32>
    %192 = arith.addf %124, %191 : vector<64x128xf32>
    %c0_64 = arith.constant 0 : index
    %c0_65 = arith.constant 0 : index
    %193 = vector.load %arg6[%c0_64, %c0_65] : memref<64x128xf32, #tpu.memory_space<vmem>>, vector<64x128xf32>
    tpu.vector_store %arg6[%c0_64, %c0_65], %192 {strides = array<i32>} : memref<64x128xf32, #tpu.memory_space<vmem>>, vector<64x128xf32>,
    return
  }
}

</mosaic_0001>

<llo_original>
// kernel: tpu_custom_call.1
$region0: #{tpu_custom_call.1}
  #allocation0 [shape = 'u32[]', space=smem, size = 0x4, offset = 0x4, fixed_abs, tag = 'smem constant byte address 0x4 - core index']
  #allocation1 [shape = 'u32[144,128]{1,0:T(1,128)}', space=vmem, size = 0x12000, scoped, tag = 'internal scratch']
  %s0 = inlined_call_operand.hbm [shape: f32[64,128], index: 0, kind: input, shape index: {}]
  %s1 = inlined_call_operand.hbm [shape: f32[8,128], index: 1, kind: input, shape index: {}]
  %s2 = inlined_call_operand.hbm [shape: f32[128,384], index: 2, kind: input, shape index: {}]
  %s3 = inlined_call_operand.hbm [shape: f32[128,128], index: 3, kind: input, shape index: {}]
  %s4 = inlined_call_operand.hbm [shape: f32[128,768], index: 4, kind: input, shape index: {}]
  %s5 = inlined_call_operand.hbm [shape: f32[384,128], index: 5, kind: input, shape index: {}]
  %s6 = inlined_call_operand.hbm [shape: f32[64,128], index: 6, kind: output, shape index: {}]
  %s7 = sld [smem:[#allocation0]]
  $region58: #{tpu_custom_call.1} parent=0
    _
  %s9 = ssub.s32 1, %s7
  %s10 = scalar_select 0, %s9, %s7
  $region1: #{tpu_custom_call.1} parent=0
    #allocation2 [shape = 'u8[32768]{0}', space=vmem, size = 0x8000, scoped, tag = 'input window, operand 0, single buffered']
    #allocation3 [shape = 's32[1]{0}', space=sflag, size = 0x4, scoped, tag = 'scoped memory for tpu_custom_call.1']
    #allocation4 [shape = 's32[1]{0}', space=sflag, size = 0x4, scoped, tag = 'scoped memory for tpu_custom_call.1']
    #allocation5 [shape = 'u8[4096]{0}', space=vmem, size = 0x1000, scoped, tag = 'input window, operand 1, single buffered']
    #allocation6 [shape = 's32[1]{0}', space=sflag, size = 0x4, scoped, tag = 'scoped memory for tpu_custom_call.1']
    #allocation7 [shape = 'u8[196608]{0}', space=vmem, size = 0x30000, scoped, tag = 'input window, operand 2, single buffered']
    #allocation8 [shape = 'u8[65536]{0}', space=vmem, size = 0x10000, scoped, tag = 'input window, operand 3, single buffered']
    #allocation9 [shape = 's32[1]{0}', space=sflag, size = 0x4, scoped, tag = 'scoped memory for tpu_custom_call.1']
    #allocation10 [shape = 'u8[393216]{0}', space=vmem, size = 0x60000, scoped, tag = 'input window, operand 4, single buffered']
    #allocation11 [shape = 'u8[196608]{0}', space=vmem, size = 0x30000, scoped, tag = 'input window, operand 5, single buffered']
    #allocation12 [shape = 's32[1]{0}', space=sflag, size = 0x4, scoped, tag = 'scoped memory for tpu_custom_call.1']
    #allocation13 [shape = 'u8[32768]{0}', space=vmem, size = 0x8000, scoped, tag = 'output window, operand 0, single buffered']
    %11 = vsyncpa [#allocation3], 0
    %12 = vsyncpa [#allocation6], 0
    %13 = vsyncpa [#allocation9], 0
    %14 = vsyncpa [#allocation12], 0
    %15 = vsyncpa [#allocation4], 0
    // Predicated region
    $region2: #{tpu_custom_call.1} parent=1 // pred_check
      _
    $region3: #{tpu_custom_call.1} parent=1 // pred_check_branch
      %17 = sbr.rel (0) target = $region5
    $region4: #{tpu_custom_call.1} parent=1 // pred_region
      %s19 = ssub.s32 1024, 1024
      %20 = vsyncadd [#allocation3], %s19
      %s21 = sshll.u32 [#allocation2], 4
      %s22 = int_to_ptr.vmem [resolvable:$true] %s21
      %27 = dma.hbm_to_vmem [thread:$0]  %s0, 1024, %s22, [#allocation3], 128, 128, 8
    $region5: #{tpu_custom_call.1} parent=1 // pred_fallthru
      _
    // Predicated region
    $region6: #{tpu_custom_call.1} parent=1 // pred_check
      _
    $region7: #{tpu_custom_call.1} parent=1 // pred_check_branch
      %29 = sbr.rel (0) target = $region9
    $region8: #{tpu_custom_call.1} parent=1 // pred_region
      %s31 = ssub.s32 128, 128
      %32 = vsyncadd [#allocation6], %s31
      %s34 = sshll.u32 [#allocation5], 4
      %s35 = int_to_ptr.vmem [resolvable:$true] %s34
      %37 = dma.hbm_to_vmem [thread:$0]  %s1, 128, %s35, [#allocation6]
    $region9: #{tpu_custom_call.1} parent=1 // pred_fallthru
      _
    // Predicated region
    $region10: #{tpu_custom_call.1} parent=1 // pred_check
      _
    $region11: #{tpu_custom_call.1} parent=1 // pred_check_branch
      %39 = sbr.rel (0) target = $region13
    $region12: #{tpu_custom_call.1} parent=1 // pred_region
      %s41 = ssub.s32 6144, 6144
      %42 = vsyncadd [#allocation6], %s41
      %s43 = sshll.u32 [#allocation7], 4
      %s44 = int_to_ptr.vmem [resolvable:$true] %s43
      %49 = dma.hbm_to_vmem [thread:$0]  %s2, 6144, %s44, [#allocation6], 384, 384, 24
    $region13: #{tpu_custom_call.1} parent=1 // pred_fallthru
      _
    // Predicated region
    $region14: #{tpu_custom_call.1} parent=1 // pred_check
      _
    $region15: #{tpu_custom_call.1} parent=1 // pred_check_branch
      %51 = sbr.rel (0) target = $region17
    $region16: #{tpu_custom_call.1} parent=1 // pred_region
      %s53 = ssub.s32 2048, 2048
      %54 = vsyncadd [#allocation9], %s53
      %s55 = sshll.u32 [#allocation8], 4
      %s56 = int_to_ptr.vmem [resolvable:$true] %s55
      %61 = dma.hbm_to_vmem [thread:$0]  %s3, 2048, %s56, [#allocation9], 128, 128, 8
    $region17: #{tpu_custom_call.1} parent=1 // pred_fallthru
      _
    // Predicated region
    $region18: #{tpu_custom_call.1} parent=1 // pred_check
      _
    $region19: #{tpu_custom_call.1} parent=1 // pred_check_branch
      %63 = sbr.rel (0) target = $region21
    $region20: #{tpu_custom_call.1} parent=1 // pred_region
      %s65 = ssub.s32 12288, 12288
      %66 = vsyncadd [#allocation9], %s65
      %s67 = sshll.u32 [#allocation10], 4
      %s68 = int_to_ptr.vmem [resolvable:$true] %s67
      %73 = dma.hbm_to_vmem [thread:$0]  %s4, 12288, %s68, [#allocation9], 768, 768, 48
    $region21: #{tpu_custom_call.1} parent=1 // pred_fallthru
      _
    // Predicated region
    $region22: #{tpu_custom_call.1} parent=1 // pred_check
      _
    $region23: #{tpu_custom_call.1} parent=1 // pred_check_branch
      %75 = sbr.rel (0) target = $region25
    $region24: #{tpu_custom_call.1} parent=1 // pred_region
      %s77 = ssub.s32 6144, 6144
      %78 = vsyncadd [#allocation12], %s77
      %s79 = sshll.u32 [#allocation11], 4
      %s80 = int_to_ptr.vmem [resolvable:$true] %s79
      %85 = dma.hbm_to_vmem [thread:$0]  %s5, 6144, %s80, [#allocation12], 128, 128, 8
    $region25: #{tpu_custom_call.1} parent=1 // pred_fallthru
      _
    // Predicated region
    $region26: #{tpu_custom_call.1} parent=1 // pred_check
      _
    $region27: #{tpu_custom_call.1} parent=1 // pred_check_branch
      %87 = sbr.rel (0) target = $region29
    $region28: #{tpu_custom_call.1} parent=1 // pred_region
      %88 = dma.done [#allocation3], 1024
    $region29: #{tpu_custom_call.1} parent=1 // pred_fallthru
      _
    // Predicated region
    $region30: #{tpu_custom_call.1} parent=1 // pred_check
      _
    $region31: #{tpu_custom_call.1} parent=1 // pred_check_branch
      %90 = sbr.rel (0) target = $region33
    $region32: #{tpu_custom_call.1} parent=1 // pred_region
      %91 = dma.done [#allocation6], 128
    $region33: #{tpu_custom_call.1} parent=1 // pred_fallthru
      _
    // Predicated region
    $region34: #{tpu_custom_call.1} parent=1 // pred_check
      _
    $region35: #{tpu_custom_call.1} parent=1 // pred_check_branch
      %93 = sbr.rel (0) target = $region37
    $region36: #{tpu_custom_call.1} parent=1 // pred_region
      %94 = dma.done [#allocation6], 6144
    $region37: #{tpu_custom_call.1} parent=1 // pred_fallthru
      _
    // Predicated region
    $region38: #{tpu_custom_call.1} parent=1 // pred_check
      _
    $region39: #{tpu_custom_call.1} parent=1 // pred_check_branch
      %96 = sbr.rel (0) target = $region41
    $region40: #{tpu_custom_call.1} parent=1 // pred_region
      %97 = dma.done [#allocation9], 2048
    $region41: #{tpu_custom_call.1} parent=1 // pred_fallthru
      _
    // Predicated region
    $region42: #{tpu_custom_call.1} parent=1 // pred_check
      _
    $region43: #{tpu_custom_call.1} parent=1 // pred_check_branch
      %99 = sbr.rel (0) target = $region45
    $region44: #{tpu_custom_call.1} parent=1 // pred_region
      %100 = dma.done [#allocation9], 12288
    $region45: #{tpu_custom_call.1} parent=1 // pred_fallthru
      _
    // Predicated region
    $region46: #{tpu_custom_call.1} parent=1 // pred_check
      _
    $region47: #{tpu_custom_call.1} parent=1 // pred_check_branch
      %102 = sbr.rel (0) target = $region49
    $region48: #{tpu_custom_call.1} parent=1 // pred_region
      %103 = dma.done [#allocation12], 6144
    $region49: #{tpu_custom_call.1} parent=1 // pred_fallthru
      _
    %v104 = vld [vmem:[#allocation2] sm:$0xff]
    %v105 = vld [vmem:[#allocation2 + $0x8] sm:$0xff]
    %v106 = vld [vmem:[#allocation2 + $0x10] sm:$0xff]
    %v107 = vld [vmem:[#allocation2 + $0x18] sm:$0xff]
    %v108 = vld [vmem:[#allocation2 + $0x20] sm:$0xff]
    %v109 = vld [vmem:[#allocation2 + $0x28] sm:$0xff]
    %v110 = vld [vmem:[#allocation2 + $0x30] sm:$0xff]
    %v111 = vld [vmem:[#allocation2 + $0x38] sm:$0xff]
    %v112 = vld [vmem:[#allocation5] sm:$0xff]
    %113 = vadd.xlane.f32.xlu0 %v104
    %v114 = vpop.xlane.xlu0 %113
    %115 = vadd.xlane.f32.xlu0 %v105
    %v116 = vpop.xlane.xlu0 %115
    %117 = vadd.xlane.f32.xlu0 %v106
    %v118 = vpop.xlane.xlu0 %117
    %119 = vadd.xlane.f32.xlu0 %v107
    %v120 = vpop.xlane.xlu0 %119
    %121 = vadd.xlane.f32.xlu0 %v108
    %v122 = vpop.xlane.xlu0 %121
    %123 = vadd.xlane.f32.xlu0 %v109
    %v124 = vpop.xlane.xlu0 %123
    %125 = vadd.xlane.f32.xlu0 %v110
    %v126 = vpop.xlane.xlu0 %125
    %127 = vadd.xlane.f32.xlu0 %v111
    %v128 = vpop.xlane.xlu0 %127
    %v129 = vrcp.pop 128.0
    %v130 = vmul.f32 %v114, %v129
    %v131 = vmul.f32 %v116, %v129
    %v132 = vmul.f32 %v118, %v129
    %v133 = vmul.f32 %v120, %v129
    %v134 = vmul.f32 %v122, %v129
    %v135 = vmul.f32 %v124, %v129
    %v136 = vmul.f32 %v126, %v129
    %v137 = vmul.f32 %v128, %v129
    %v138 = vsub.f32 %v104, %v130
    %v139 = vsub.f32 %v105, %v131
    %v140 = vsub.f32 %v106, %v132
    %v141 = vsub.f32 %v107, %v133
    %v142 = vsub.f32 %v108, %v134
    %v143 = vsub.f32 %v109, %v135
    %v144 = vsub.f32 %v110, %v136
    %v145 = vsub.f32 %v111, %v137
    %v146 = vmul.f32 %v138, %v138
    %v147 = vmul.f32 %v139, %v139
    %v148 = vmul.f32 %v140, %v140
    %v149 = vmul.f32 %v141, %v141
    %v150 = vmul.f32 %v142, %v142
    %v151 = vmul.f32 %v143, %v143
    %v152 = vmul.f32 %v144, %v144
    %v153 = vmul.f32 %v145, %v145
    %154 = vadd.xlane.f32.xlu0 %v146
    %v155 = vpop.xlane.xlu0 %154
    %156 = vadd.xlane.f32.xlu0 %v147
    %v157 = vpop.xlane.xlu0 %156
    %158 = vadd.xlane.f32.xlu0 %v148
    %v159 = vpop.xlane.xlu0 %158
    %160 = vadd.xlane.f32.xlu0 %v149
    %v161 = vpop.xlane.xlu0 %160
    %162 = vadd.xlane.f32.xlu0 %v150
    %v163 = vpop.xlane.xlu0 %162
    %164 = vadd.xlane.f32.xlu0 %v151
    %v165 = vpop.xlane.xlu0 %164
    %166 = vadd.xlane.f32.xlu0 %v152
    %v167 = vpop.xlane.xlu0 %166
    %168 = vadd.xlane.f32.xlu0 %v153
    %v169 = vpop.xlane.xlu0 %168
    %v170 = vmul.f32 %v155, %v129
    %v171 = vmul.f32 %v157, %v129
    %v172 = vmul.f32 %v159, %v129
    %v173 = vmul.f32 %v161, %v129
    %v174 = vmul.f32 %v163, %v129
    %v175 = vmul.f32 %v165, %v129
    %v176 = vmul.f32 %v167, %v129
    %v177 = vmul.f32 %v169, %v129
    %v178 = vadd.f32 %v170, 1e-05
    %v179 = vadd.f32 %v171, 1e-05
    %v180 = vadd.f32 %v172, 1e-05
    %v181 = vadd.f32 %v173, 1e-05
    %v182 = vadd.f32 %v174, 1e-05
    %v183 = vadd.f32 %v175, 1e-05
    %v184 = vadd.f32 %v176, 1e-05
    %v185 = vadd.f32 %v177, 1e-05
    %v186 = vrsqrt.pop %v178
    %v187 = vrsqrt.pop %v179
    %v188 = vrsqrt.pop %v180
    %v189 = vrsqrt.pop %v181
    %v190 = vrsqrt.pop %v182
    %v191 = vrsqrt.pop %v183
    %v192 = vrsqrt.pop %v184
    %v193 = vrsqrt.pop %v185
    %v194 = vmul.f32 %v138, %v186
    %v195 = vmul.f32 %v139, %v187
    %v196 = vmul.f32 %v140, %v188
    %v197 = vmul.f32 %v141, %v189
    %v198 = vmul.f32 %v142, %v190
    %v199 = vmul.f32 %v143, %v191
    %v200 = vmul.f32 %v144, %v192
    %v201 = vmul.f32 %v145, %v193
    %v202 = vlaneseq
    %v203 = vshrl.u32 %v202, 7
    %v204 = vsub.s32 0, %v203
    %v205 = vrot.slane %v112, %v204
    %v206 = vmul.f32 %v194, %v205
    %v207 = vmul.f32 %v195, %v205
    %v208 = vmul.f32 %v196, %v205
    %v209 = vmul.f32 %v197, %v205
    %v210 = vmul.f32 %v198, %v205
    %v211 = vmul.f32 %v199, %v205
    %v212 = vmul.f32 %v200, %v205
    %v213 = vmul.f32 %v201, %v205
    %v214 = vlaneseq
    %v215 = vshrl.u32 %v214, 7
    %v216 = vsub.s32 1, %v215
    %v217 = vrot.slane %v112, %v216
    %v218 = vadd.f32 %v206, %v217
    %v219 = vadd.f32 %v207, %v217
    %v220 = vadd.f32 %v208, %v217
    %v221 = vadd.f32 %v209, %v217
    %v222 = vadd.f32 %v210, %v217
    %v223 = vadd.f32 %v211, %v217
    %v224 = vadd.f32 %v212, %v217
    %v225 = vadd.f32 %v213, %v217
    %v226 = vld [vmem:[#allocation7] sm:$0xff]
    %v227 = vld [vmem:[#allocation7 + $0x8] sm:$0xff]
    %v228 = vld [vmem:[#allocation7 + $0x10] sm:$0xff]
    %v229 = vld [vmem:[#allocation7 + $0x18] sm:$0xff]
    %v230 = vld [vmem:[#allocation7 + $0x20] sm:$0xff]
    %v231 = vld [vmem:[#allocation7 + $0x28] sm:$0xff]
    %v232 = vld [vmem:[#allocation7 + $0x30] sm:$0xff]
    %v233 = vld [vmem:[#allocation7 + $0x38] sm:$0xff]
    %v234 = vld [vmem:[#allocation7 + $0x40] sm:$0xff]
    %v235 = vld [vmem:[#allocation7 + $0x48] sm:$0xff]
    %v236 = vld [vmem:[#allocation7 + $0x50] sm:$0xff]
    %v237 = vld [vmem:[#allocation7 + $0x58] sm:$0xff]
    %v238 = vld [vmem:[#allocation7 + $0x60] sm:$0xff]
    %v239 = vld [vmem:[#allocation7 + $0x68] sm:$0xff]
    %v240 = vld [vmem:[#allocation7 + $0x70] sm:$0xff]
    %v241 = vld [vmem:[#allocation7 + $0x78] sm:$0xff]
    %v242 = vld [vmem:[#allocation7 + $0x80] sm:$0xff]
    %v243 = vld [vmem:[#allocation7 + $0x88] sm:$0xff]
    %v244 = vld [vmem:[#allocation7 + $0x90] sm:$0xff]
    %v245 = vld [vmem:[#allocation7 + $0x98] sm:$0xff]
    %v246 = vld [vmem:[#allocation7 + $0xa0] sm:$0xff]
    %v247 = vld [vmem:[#allocation7 + $0xa8] sm:$0xff]
    %v248 = vld [vmem:[#allocation7 + $0xb0] sm:$0xff]
    %v249 = vld [vmem:[#allocation7 + $0xb8] sm:$0xff]
    %v250 = vld [vmem:[#allocation7 + $0xc0] sm:$0xff]
    %v251 = vld [vmem:[#allocation7 + $0xc8] sm:$0xff]
    %v252 = vld [vmem:[#allocation7 + $0xd0] sm:$0xff]
    %v253 = vld [vmem:[#allocation7 + $0xd8] sm:$0xff]
    %v254 = vld [vmem:[#allocation7 + $0xe0] sm:$0xff]
    %v255 = vld [vmem:[#allocation7 + $0xe8] sm:$0xff]
    %v256 = vld [vmem:[#allocation7 + $0xf0] sm:$0xff]
    %v257 = vld [vmem:[#allocation7 + $0xf8] sm:$0xff]
    %v258 = vld [vmem:[#allocation7 + $0x100] sm:$0xff]
    %v259 = vld [vmem:[#allocation7 + $0x108] sm:$0xff]
    %v260 = vld [vmem:[#allocation7 + $0x110] sm:$0xff]
    %v261 = vld [vmem:[#allocation7 + $0x118] sm:$0xff]
    %v262 = vld [vmem:[#allocation7 + $0x120] sm:$0xff]
    %v263 = vld [vmem:[#allocation7 + $0x128] sm:$0xff]
    %v264 = vld [vmem:[#allocation7 + $0x130] sm:$0xff]
    %v265 = vld [vmem:[#allocation7 + $0x138] sm:$0xff]
    %v266 = vld [vmem:[#allocation7 + $0x140] sm:$0xff]
    %v267 = vld [vmem:[#allocation7 + $0x148] sm:$0xff]
    %v268 = vld [vmem:[#allocation7 + $0x150] sm:$0xff]
    %v269 = vld [vmem:[#allocation7 + $0x158] sm:$0xff]
    %v270 = vld [vmem:[#allocation7 + $0x160] sm:$0xff]
    %v271 = vld [vmem:[#allocation7 + $0x168] sm:$0xff]
    %v272 = vld [vmem:[#allocation7 + $0x170] sm:$0xff]
    %v273 = vld [vmem:[#allocation7 + $0x178] sm:$0xff]
    %274 = vmatprep.subr.mxu0 %v272
    %275 = vmatpush1.msra.mxu0 %v271
    %276 = vmatprep.subr.mxu0 %v269
    %277 = vmatpush1.msra.mxu0 %v268
    %278 = vmatprep.subr.mxu0 %v266
    %279 = vmatpush1.msra.mxu0 %v265
    %280 = vmatprep.subr.mxu0 %v263
    %281 = vmatpush1.msra.mxu0 %v262
    %282 = vmatprep.subr.mxu0 %v260
    %283 = vmatpush1.msra.mxu0 %v259
    %284 = vmatprep.subr.mxu0 %v257
    %285 = vmatpush1.msra.mxu0 %v256
    %286 = vmatprep.subr.mxu0 %v254
    %287 = vmatpush1.msra.mxu0 %v253
    %288 = vmatprep.subr.mxu0 %v251
    %289 = vmatpush1.msra.mxu0 %v250
    %290 = vmatprep.subr.mxu0 %v248
    %291 = vmatpush1.msra.mxu0 %v247
    %292 = vmatprep.subr.mxu0 %v245
    %293 = vmatpush1.msra.mxu0 %v244
    %294 = vmatprep.subr.mxu0 %v242
    %295 = vmatpush1.msra.mxu0 %v241
    %296 = vmatprep.subr.mxu0 %v239
    %297 = vmatpush1.msra.mxu0 %v238
    %298 = vmatprep.subr.mxu0 %v236
    %299 = vmatpush1.msra.mxu0 %v235
    %300 = vmatprep.subr.mxu0 %v233
    %301 = vmatpush1.msra.mxu0 %v232
    %302 = vmatprep.subr.mxu0 %v230
    %303 = vmatpush1.msra.mxu0 %v229
    %304 = vmatprep.subr.mxu0 %v227
    %305 = vmatpush1.msra.mxu0 %v226
    %306 = vmatprep.subr.mxu0 0.0
    %307 = vmatpush2.msra.mxu0 0.0
    %308 = vmatprep.subr.mxu0 0.0
    %309 = vmatpush2.msra.mxu0 0.0
    %310 = vmatprep.subr.mxu0 0.0
    %311 = vmatpush2.msra.mxu0 0.0
    %312 = vmatprep.subr.mxu0 0.0
    %313 = vmatpush2.msra.mxu0 0.0
    %314 = vmatprep.subr.mxu0 0.0
    %315 = vmatpush2.msra.mxu0 0.0
    %316 = vmatprep.subr.mxu0 0.0
    %317 = vmatpush2.msra.mxu0 0.0
    %318 = vmatprep.subr.mxu0 0.0
    %319 = vmatpush2.msra.mxu0 0.0
    %320 = vmatprep.subr.mxu0 0.0
    %321 = vmatpush2.msra.mxu0 0.0
    %322 = vmatprep.subr.mxu0 0.0
    %323 = vmatpush2.msra.mxu0 0.0
    %324 = vmatprep.subr.mxu0 0.0
    %325 = vmatpush2.msra.mxu0 0.0
    %326 = vmatprep.subr.mxu0 0.0
    %327 = vmatpush2.msra.mxu0 0.0
    %328 = vmatprep.subr.mxu0 0.0
    %329 = vmatpush2.msra.mxu0 0.0
    %330 = vmatprep.subr.mxu0 0.0
    %331 = vmatpush2.msra.mxu0 0.0
    %332 = vmatprep.subr.mxu0 0.0
    %333 = vmatpush2.msra.mxu0 0.0
    %334 = vmatprep.subr.mxu0 0.0
    %335 = vmatpush2.msra.mxu0 0.0
    %336 = vmatprep.subr.mxu0 0.0
    %337 = vmatpush2.msra.mxu0 0.0
    %338 = vmatprep.mubr.f32.mxu0 0.0
    %339 = vmatmul.mubr.f32.gmra.mxu0 %v218
    %v340 = vpop.f32.mrf.mxu0
    %v341 = vadd.f32 0.0, %v340
    %v342 = vpop.f32.mrf.mxu0
    %v343 = vadd.f32 0.0, %v342
    %344 = vmatprep.mubr.f32.mxu0 0.0
    %345 = vmatmul.mubr.f32.gmra.mxu0 %v219
    %v346 = vpop.f32.mrf.mxu0
    %v347 = vadd.f32 0.0, %v346
    %v348 = vpop.f32.mrf.mxu0
    %v349 = vadd.f32 0.0, %v348
    %350 = vmatprep.mubr.f32.mxu0 0.0
    %351 = vmatmul.mubr.f32.gmra.mxu0 %v220
    %v352 = vpop.f32.mrf.mxu0
    %v353 = vadd.f32 0.0, %v352
    %v354 = vpop.f32.mrf.mxu0
    %v355 = vadd.f32 0.0, %v354
    %356 = vmatprep.mubr.f32.mxu0 0.0
    %357 = vmatmul.mubr.f32.gmra.mxu0 %v221
    %v358 = vpop.f32.mrf.mxu0
    %v359 = vadd.f32 0.0, %v358
    %v360 = vpop.f32.mrf.mxu0
    %v361 = vadd.f32 0.0, %v360
    %362 = vmatprep.mubr.f32.mxu0 0.0
    %363 = vmatmul.mubr.f32.gmra.mxu0 %v222
    %v364 = vpop.f32.mrf.mxu0
    %v365 = vadd.f32 0.0, %v364
    %v366 = vpop.f32.mrf.mxu0
    %v367 = vadd.f32 0.0, %v366
    %368 = vmatprep.mubr.f32.mxu0 0.0
    %369 = vmatmul.mubr.f32.gmra.mxu0 %v223
    %v370 = vpop.f32.mrf.mxu0
    %v371 = vadd.f32 0.0, %v370
    %v372 = vpop.f32.mrf.mxu0
    %v373 = vadd.f32 0.0, %v372
    %374 = vmatprep.mubr.f32.mxu0 0.0
    %375 = vmatmul.mubr.f32.gmra.mxu0 %v224
    %v376 = vpop.f32.mrf.mxu0
    %v377 = vadd.f32 0.0, %v376
    %v378 = vpop.f32.mrf.mxu0
    %v379 = vadd.f32 0.0, %v378
    %380 = vmatprep.mubr.f32.mxu0 0.0
    %381 = vmatmul.mubr.f32.gmra.mxu0 %v225
    %v382 = vpop.f32.mrf.mxu0
    %v383 = vadd.f32 0.0, %v382
    %v384 = vpop.f32.mrf.mxu0
    %v385 = vadd.f32 0.0, %v384
    %386 = vdwg.mxu0
    %387 = vmatprep.subr.mxu0 0.0
    %388 = vmatpush1.msra.mxu0 %v273
    %389 = vmatprep.subr.mxu0 0.0
    %390 = vmatpush1.msra.mxu0 %v270
    %391 = vmatprep.subr.mxu0 0.0
    %392 = vmatpush1.msra.mxu0 %v267
    %393 = vmatprep.subr.mxu0 0.0
    %394 = vmatpush1.msra.mxu0 %v264
    %395 = vmatprep.subr.mxu0 0.0
    %396 = vmatpush1.msra.mxu0 %v261
    %397 = vmatprep.subr.mxu0 0.0
    %398 = vmatpush1.msra.mxu0 %v258
    %399 = vmatprep.subr.mxu0 0.0
    %400 = vmatpush1.msra.mxu0 %v255
    %401 = vmatprep.subr.mxu0 0.0
    %402 = vmatpush1.msra.mxu0 %v252
    %403 = vmatprep.subr.mxu0 0.0
    %404 = vmatpush1.msra.mxu0 %v249
    %405 = vmatprep.subr.mxu0 0.0
    %406 = vmatpush1.msra.mxu0 %v246
    %407 = vmatprep.subr.mxu0 0.0
    %408 = vmatpush1.msra.mxu0 %v243
    %409 = vmatprep.subr.mxu0 0.0
    %410 = vmatpush1.msra.mxu0 %v240
    %411 = vmatprep.subr.mxu0 0.0
    %412 = vmatpush1.msra.mxu0 %v237
    %413 = vmatprep.subr.mxu0 0.0
    %414 = vmatpush1.msra.mxu0 %v234
    %415 = vmatprep.subr.mxu0 0.0
    %416 = vmatpush1.msra.mxu0 %v231
    %417 = vmatprep.subr.mxu0 0.0
    %418 = vmatpush1.msra.mxu0 %v228
    %419 = vmatprep.subr.mxu0 0.0
    %420 = vmatpush2.msra.mxu0 0.0
    %421 = vmatprep.subr.mxu0 0.0
    %422 = vmatpush2.msra.mxu0 0.0
    %423 = vmatprep.subr.mxu0 0.0
    %424 = vmatpush2.msra.mxu0 0.0
    %425 = vmatprep.subr.mxu0 0.0
    %426 = vmatpush2.msra.mxu0 0.0
    %427 = vmatprep.subr.mxu0 0.0
    %428 = vmatpush2.msra.mxu0 0.0
    %429 = vmatprep.subr.mxu0 0.0
    %430 = vmatpush2.msra.mxu0 0.0
    %431 = vmatprep.subr.mxu0 0.0
    %432 = vmatpush2.msra.mxu0 0.0
    %433 = vmatprep.subr.mxu0 0.0
    %434 = vmatpush2.msra.mxu0 0.0
    %435 = vmatprep.subr.mxu0 0.0
    %436 = vmatpush2.msra.mxu0 0.0
    %437 = vmatprep.subr.mxu0 0.0
    %438 = vmatpush2.msra.mxu0 0.0
    %439 = vmatprep.subr.mxu0 0.0
    %440 = vmatpush2.msra.mxu0 0.0
    %441 = vmatprep.subr.mxu0 0.0
    %442 = vmatpush2.msra.mxu0 0.0
    %443 = vmatprep.subr.mxu0 0.0
    %444 = vmatpush2.msra.mxu0 0.0
    %445 = vmatprep.subr.mxu0 0.0
    %446 = vmatpush2.msra.mxu0 0.0
    %447 = vmatprep.subr.mxu0 0.0
    %448 = vmatpush2.msra.mxu0 0.0
    %449 = vmatprep.subr.mxu0 0.0
    %450 = vmatpush2.msra.mxu0 0.0
    %451 = vmatprep.mubr.f32.mxu0 0.0
    %452 = vmatmul.mubr.f32.gmra.mxu0 %v218
    %v453 = vpop.f32.mrf.mxu0
    %v454 = vadd.f32 0.0, %v453
    %v455 = vpop.f32.mrf.mxu0
    %456 = vmatprep.mubr.f32.mxu0 0.0
    %457 = vmatmul.mubr.f32.gmra.mxu0 %v219
    %v458 = vpop.f32.mrf.mxu0
    %v459 = vadd.f32 0.0, %v458
    %v460 = vpop.f32.mrf.mxu0
    %461 = vmatprep.mubr.f32.mxu0 0.0
    %462 = vmatmul.mubr.f32.gmra.mxu0 %v220
    %v463 = vpop.f32.mrf.mxu0
    %v464 = vadd.f32 0.0, %v463
    %v465 = vpop.f32.mrf.mxu0
    %466 = vmatprep.mubr.f32.mxu0 0.0
    %467 = vmatmul.mubr.f32.gmra.mxu0 %v221
    %v468 = vpop.f32.mrf.mxu0
    %v469 = vadd.f32 0.0, %v468
    %v470 = vpop.f32.mrf.mxu0
    %471 = vmatprep.mubr.f32.mxu0 0.0
    %472 = vmatmul.mubr.f32.gmra.mxu0 %v222
    %v473 = vpop.f32.mrf.mxu0
    %v474 = vadd.f32 0.0, %v473
    %v475 = vpop.f32.mrf.mxu0
    %476 = vmatprep.mubr.f32.mxu0 0.0
    %477 = vmatmul.mubr.f32.gmra.mxu0 %v223
    %v478 = vpop.f32.mrf.mxu0
    %v479 = vadd.f32 0.0, %v478
    %v480 = vpop.f32.mrf.mxu0
    %481 = vmatprep.mubr.f32.mxu0 0.0
    %482 = vmatmul.mubr.f32.gmra.mxu0 %v224
    %v483 = vpop.f32.mrf.mxu0
    %v484 = vadd.f32 0.0, %v483
    %v485 = vpop.f32.mrf.mxu0
    %486 = vmatprep.mubr.f32.mxu0 0.0
    %487 = vmatmul.mubr.f32.gmra.mxu0 %v225
    %v488 = vpop.f32.mrf.mxu0
    %v489 = vadd.f32 0.0, %v488
    %v490 = vpop.f32.mrf.mxu0
    %491 = vdwg.mxu0
    %v492 = vlaneseq
    %v493 = vshrl.u32 %v492, 7
    %v494 = vsub.s32 5, %v493
    %v495 = vrot.slane %v112, %v494
    %v496 = vadd.f32 %v341, %v495
    %v497 = vadd.f32 %v347, %v495
    %v498 = vadd.f32 %v353, %v495
    %v499 = vadd.f32 %v359, %v495
    %v500 = vadd.f32 %v365, %v495
    %v501 = vadd.f32 %v371, %v495
    %v502 = vadd.f32 %v377, %v495
    %v503 = vadd.f32 %v383, %v495
    %v504 = vlaneseq
    %v505 = vshrl.u32 %v504, 7
    %v506 = vsub.s32 6, %v505
    %v507 = vrot.slane %v112, %v506
    %v508 = vadd.f32 %v343, %v507
    %v509 = vadd.f32 %v349, %v507
    %v510 = vadd.f32 %v355, %v507
    %v511 = vadd.f32 %v361, %v507
    %v512 = vadd.f32 %v367, %v507
    %v513 = vadd.f32 %v373, %v507
    %v514 = vadd.f32 %v379, %v507
    %v515 = vadd.f32 %v385, %v507
    %v516 = vlaneseq
    %v517 = vshrl.u32 %v516, 7
    %v518 = vsub.s32 7, %v517
    %v519 = vrot.slane %v112, %v518
    %v520 = vadd.f32 %v454, %v519
    %v521 = vadd.f32 %v459, %v519
    %v522 = vadd.f32 %v464, %v519
    %v523 = vadd.f32 %v469, %v519
    %v524 = vadd.f32 %v474, %v519
    %v525 = vadd.f32 %v479, %v519
    %v526 = vadd.f32 %v484, %v519
    %v527 = vadd.f32 %v489, %v519
    %v528 = vlaneseq
    %v529 = vshrl.u32 %v528, 7
    %v530 = vadd.s32 %v529, 8
    %v531 = vadd.s32 %v529, 16
    %v532 = vadd.s32 %v529, 24
    %v533 = vadd.s32 %v529, 32
    %v534 = vadd.s32 %v529, 40
    %v535 = vadd.s32 %v529, 48
    %v536 = vadd.s32 %v529, 56
    %v537 = vlaneseq
    %v538 = vand.u32 %v537, 127
    %vm539 = vcmp.ge.s32.totalorder %v529, %v538
    %vm540 = vcmp.ge.s32.totalorder %v530, %v538
    %vm541 = vcmp.ge.s32.totalorder %v531, %v538
    %vm542 = vcmp.ge.s32.totalorder %v532, %v538
    %vm543 = vcmp.ge.s32.totalorder %v533, %v538
    %vm544 = vcmp.ge.s32.totalorder %v534, %v538
    %vm545 = vcmp.ge.s32.totalorder %v535, %v538
    %vm546 = vcmp.ge.s32.totalorder %v536, %v538
    %v547 = vsel %vm539, 0.0, -1e+30
    %v548 = vsel %vm540, 0.0, -1e+30
    %v549 = vsel %vm541, 0.0, -1e+30
    %v550 = vsel %vm542, 0.0, -1e+30
    %v551 = vsel %vm543, 0.0, -1e+30
    %v552 = vsel %vm544, 0.0, -1e+30
    %v553 = vsel %vm545, 0.0, -1e+30
    %v554 = vsel %vm546, 0.0, -1e+30
    %vm555 = vcmask 261120
    %v557 = vsel %vm555, %v496, 0
    %v560 = vsel %vm555, %v497, 0
    %v563 = vsel %vm555, %v498, 0
    %v566 = vsel %vm555, %v499, 0
    %v569 = vsel %vm555, %v500, 0
    %v572 = vsel %vm555, %v501, 0
    %v575 = vsel %vm555, %v502, 0
    %v578 = vsel %vm555, %v503, 0
    %v581 = vsel %vm555, %v508, 0
    %v584 = vsel %vm555, %v509, 0
    %v587 = vsel %vm555, %v510, 0
    %v590 = vsel %vm555, %v511, 0
    %v593 = vsel %vm555, %v512, 0
    %v596 = vsel %vm555, %v513, 0
    %v599 = vsel %vm555, %v514, 0
    %v602 = vsel %vm555, %v515, 0
    %604 = vmatprep.subr.mxu0 0.0
    %605 = vmatpush1.xpose.msra.mxu0 0.0
    %606 = vmatprep.subr.mxu0 0.0
    %607 = vmatpush1.xpose.msra.mxu0 0.0
    %608 = vmatprep.subr.mxu0 0.0
    %609 = vmatpush1.xpose.msra.mxu0 0.0
    %610 = vmatprep.subr.mxu0 0.0
    %611 = vmatpush1.xpose.msra.mxu0 0.0
    %612 = vmatprep.subr.mxu0 0.0
    %613 = vmatpush1.xpose.msra.mxu0 0.0
    %614 = vmatprep.subr.mxu0 0.0
    %615 = vmatpush1.xpose.msra.mxu0 0.0
    %616 = vmatprep.subr.mxu0 0.0
    %617 = vmatpush1.xpose.msra.mxu0 0.0
    %618 = vmatprep.subr.mxu0 0.0
    %619 = vmatpush1.xpose.msra.mxu0 0.0
    %620 = vmatprep.subr.mxu0 0.0
    %621 = vmatpush1.xpose.msra.mxu0 %v602
    %622 = vmatprep.subr.mxu0 0.0
    %623 = vmatpush1.xpose.msra.mxu0 %v599
    %624 = vmatprep.subr.mxu0 0.0
    %625 = vmatpush1.xpose.msra.mxu0 %v596
    %626 = vmatprep.subr.mxu0 0.0
    %627 = vmatpush1.xpose.msra.mxu0 %v593
    %628 = vmatprep.subr.mxu0 0.0
    %629 = vmatpush1.xpose.msra.mxu0 %v590
    %630 = vmatprep.subr.mxu0 0.0
    %631 = vmatpush1.xpose.msra.mxu0 %v587
    %632 = vmatprep.subr.mxu0 0.0
    %633 = vmatpush1.xpose.msra.mxu0 %v584
    %634 = vmatprep.subr.mxu0 0.0
    %635 = vmatpush1.xpose.msra.mxu0 %v581
    %636 = vmatprep.subr.mxu0 0.0
    %637 = vmatpush2.xpose.msra.mxu0 0.0
    %638 = vmatprep.subr.mxu0 0.0
    %639 = vmatpush2.xpose.msra.mxu0 0.0
    %640 = vmatprep.subr.mxu0 0.0
    %641 = vmatpush2.xpose.msra.mxu0 0.0
    %642 = vmatprep.subr.mxu0 0.0
    %643 = vmatpush2.xpose.msra.mxu0 0.0
    %644 = vmatprep.subr.mxu0 0.0
    %645 = vmatpush2.xpose.msra.mxu0 0.0
    %646 = vmatprep.subr.mxu0 0.0
    %647 = vmatpush2.xpose.msra.mxu0 0.0
    %648 = vmatprep.subr.mxu0 0.0
    %649 = vmatpush2.xpose.msra.mxu0 0.0
    %650 = vmatprep.subr.mxu0 0.0
    %651 = vmatpush2.xpose.msra.mxu0 0.0
    %652 = vmatprep.subr.mxu0 0.0
    %653 = vmatpush2.xpose.msra.mxu0 0.0
    %654 = vmatprep.subr.mxu0 0.0
    %655 = vmatpush2.xpose.msra.mxu0 0.0
    %656 = vmatprep.subr.mxu0 0.0
    %657 = vmatpush2.xpose.msra.mxu0 0.0
    %658 = vmatprep.subr.mxu0 0.0
    %659 = vmatpush2.xpose.msra.mxu0 0.0
    %660 = vmatprep.subr.mxu0 0.0
    %661 = vmatpush2.xpose.msra.mxu0 0.0
    %662 = vmatprep.subr.mxu0 0.0
    %663 = vmatpush2.xpose.msra.mxu0 0.0
    %664 = vmatprep.subr.mxu0 0.0
    %665 = vmatpush2.xpose.msra.mxu0 0.0
    %666 = vmatprep.subr.mxu0 0.0
    %667 = vmatpush2.xpose.msra.mxu0 0.0
    %668 = vmatprep.mubr.f32.mxu0 0.0
    %669 = vmatmul.mubr.f32.gmra.mxu0 %v557
    %v670 = vpop.f32.mrf.mxu0
    %v671 = vadd.f32 %v547, %v670
    %v672 = vpop.f32.mrf.mxu0
    %673 = vmatprep.mubr.f32.mxu0 0.0
    %674 = vmatmul.mubr.f32.gmra.mxu0 %v560
    %v675 = vpop.f32.mrf.mxu0
    %v676 = vadd.f32 %v548, %v675
    %v677 = vpop.f32.mrf.mxu0
    %678 = vmatprep.mubr.f32.mxu0 0.0
    %679 = vmatmul.mubr.f32.gmra.mxu0 %v563
    %v680 = vpop.f32.mrf.mxu0
    %v681 = vadd.f32 %v549, %v680
    %v682 = vpop.f32.mrf.mxu0
    %683 = vmatprep.mubr.f32.mxu0 0.0
    %684 = vmatmul.mubr.f32.gmra.mxu0 %v566
    %v685 = vpop.f32.mrf.mxu0
    %v686 = vadd.f32 %v550, %v685
    %v687 = vpop.f32.mrf.mxu0
    %688 = vmatprep.mubr.f32.mxu0 0.0
    %689 = vmatmul.mubr.f32.gmra.mxu0 %v569
    %v690 = vpop.f32.mrf.mxu0
    %v691 = vadd.f32 %v551, %v690
    %v692 = vpop.f32.mrf.mxu0
    %693 = vmatprep.mubr.f32.mxu0 0.0
    %694 = vmatmul.mubr.f32.gmra.mxu0 %v572
    %v695 = vpop.f32.mrf.mxu0
    %v696 = vadd.f32 %v552, %v695
    %v697 = vpop.f32.mrf.mxu0
    %698 = vmatprep.mubr.f32.mxu0 0.0
    %699 = vmatmul.mubr.f32.gmra.mxu0 %v575
    %v700 = vpop.f32.mrf.mxu0
    %v701 = vadd.f32 %v553, %v700
    %v702 = vpop.f32.mrf.mxu0
    %703 = vmatprep.mubr.f32.mxu0 0.0
    %704 = vmatmul.mubr.f32.gmra.mxu0 %v578
    %v705 = vpop.f32.mrf.mxu0
    %v706 = vadd.f32 %v554, %v705
    %v707 = vpop.f32.mrf.mxu0
    %708 = vdwg.mxu0
    %vm709 = vcmask 523264
    %v710 = vsel %vm709, %v671, -inf
    %711 = vmax.xlane.f32.xlu0 %v710
    %v712 = vpop.xlane.xlu0 %711
    %v713 = vsel %vm709, %v676, -inf
    %714 = vmax.xlane.f32.xlu0 %v713
    %v715 = vpop.xlane.xlu0 %714
    %v716 = vsel %vm709, %v681, -inf
    %717 = vmax.xlane.f32.xlu0 %v716
    %v718 = vpop.xlane.xlu0 %717
    %v719 = vsel %vm709, %v686, -inf
    %720 = vmax.xlane.f32.xlu0 %v719
    %v721 = vpop.xlane.xlu0 %720
    %v722 = vsel %vm709, %v691, -inf
    %723 = vmax.xlane.f32.xlu0 %v722
    %v724 = vpop.xlane.xlu0 %723
    %v725 = vsel %vm709, %v696, -inf
    %726 = vmax.xlane.f32.xlu0 %v725
    %v727 = vpop.xlane.xlu0 %726
    %v728 = vsel %vm709, %v701, -inf
    %729 = vmax.xlane.f32.xlu0 %v728
    %v730 = vpop.xlane.xlu0 %729
    %v731 = vsel %vm709, %v706, -inf
    %732 = vmax.xlane.f32.xlu0 %v731
    %v733 = vpop.xlane.xlu0 %732
    %v734 = vsub.f32 %v671, %v712
    %v735 = vsub.f32 %v676, %v715
    %v736 = vsub.f32 %v681, %v718
    %v737 = vsub.f32 %v686, %v721
    %v738 = vsub.f32 %v691, %v724
    %v739 = vsub.f32 %v696, %v727
    %v740 = vsub.f32 %v701, %v730
    %v741 = vsub.f32 %v706, %v733
    %v742 = vmul.f32 %v734, 1.442695
    %v743 = vpow.pop %v742
    %v744 = vmul.f32 %v735, 1.442695
    %v745 = vpow.pop %v744
    %v746 = vmul.f32 %v736, 1.442695
    %v747 = vpow.pop %v746
    %v748 = vmul.f32 %v737, 1.442695
    %v749 = vpow.pop %v748
    %v750 = vmul.f32 %v738, 1.442695
    %v751 = vpow.pop %v750
    %v752 = vmul.f32 %v739, 1.442695
    %v753 = vpow.pop %v752
    %v754 = vmul.f32 %v740, 1.442695
    %v755 = vpow.pop %v754
    %v756 = vmul.f32 %v741, 1.442695
    %v757 = vpow.pop %v756
    %v758 = vsel %vm709, %v743, 0.0
    %759 = vadd.xlane.f32.xlu0 %v758
    %v760 = vpop.xlane.xlu0 %759
    %v761 = vsel %vm709, %v745, 0.0
    %762 = vadd.xlane.f32.xlu0 %v761
    %v763 = vpop.xlane.xlu0 %762
    %v764 = vsel %vm709, %v747, 0.0
    %765 = vadd.xlane.f32.xlu0 %v764
    %v766 = vpop.xlane.xlu0 %765
    %v767 = vsel %vm709, %v749, 0.0
    %768 = vadd.xlane.f32.xlu0 %v767
    %v769 = vpop.xlane.xlu0 %768
    %v770 = vsel %vm709, %v751, 0.0
    %771 = vadd.xlane.f32.xlu0 %v770
    %v772 = vpop.xlane.xlu0 %771
    %v773 = vsel %vm709, %v753, 0.0
    %774 = vadd.xlane.f32.xlu0 %v773
    %v775 = vpop.xlane.xlu0 %774
    %v776 = vsel %vm709, %v755, 0.0
    %777 = vadd.xlane.f32.xlu0 %v776
    %v778 = vpop.xlane.xlu0 %777
    %v779 = vsel %vm709, %v757, 0.0
    %780 = vadd.xlane.f32.xlu0 %v779
    %v781 = vpop.xlane.xlu0 %780
    %v782 = vrcp.pop %v760
    %v783 = vmul.f32 %v743, %v782
    %v784 = vrcp.pop %v763
    %v785 = vmul.f32 %v745, %v784
    %v786 = vrcp.pop %v766
    %v787 = vmul.f32 %v747, %v786
    %v788 = vrcp.pop %v769
    %v789 = vmul.f32 %v749, %v788
    %v790 = vrcp.pop %v772
    %v791 = vmul.f32 %v751, %v790
    %v792 = vrcp.pop %v775
    %v793 = vmul.f32 %v753, %v792
    %v794 = vrcp.pop %v778
    %v795 = vmul.f32 %v755, %v794
    %v796 = vrcp.pop %v781
    %v797 = vmul.f32 %v757, %v796
    %798 = vxpose.xlu0.b32.start [1/16] %v520, 128
    %799 = vxpose.xlu0.b32.cont [2/16] %v521, 128
    %800 = vxpose.xlu0.b32.cont [3/16] %v522, 128
    %801 = vxpose.xlu0.b32.cont [4/16] %v523, 128
    %802 = vxpose.xlu0.b32.cont [5/16] %v524, 128
    %803 = vxpose.xlu0.b32.cont [6/16] %v525, 128
    %804 = vxpose.xlu0.b32.cont [7/16] %v526, 128
    %805 = vxpose.xlu0.b32.cont [8/16] %v527, 128
    %806 = vxpose.xlu0.b32.cont [9/16] 0.0, 128
    %807 = vxpose.xlu0.b32.cont [10/16] 0.0, 128
    %808 = vxpose.xlu0.b32.cont [11/16] 0.0, 128
    %809 = vxpose.xlu0.b32.cont [12/16] 0.0, 128
    %810 = vxpose.xlu0.b32.cont [13/16] 0.0, 128
    %811 = vxpose.xlu0.b32.cont [14/16] 0.0, 128
    %812 = vxpose.xlu0.b32.cont [15/16] 0.0, 128
    %813 = vxpose.xlu0.b32.end [16/16] 0.0, 128
    %v814 = vpop.trf.xlu0
    %v815 = vpop.trf.xlu0
    %v816 = vpop.trf.xlu0
    %v817 = vpop.trf.xlu0
    %v818 = vpop.trf.xlu0
    %v819 = vpop.trf.xlu0
    %v820 = vpop.trf.xlu0
    %v821 = vpop.trf.xlu0
    %v822 = vpop.trf.xlu0
    %v823 = vpop.trf.xlu0
    %v824 = vpop.trf.xlu0
    %v825 = vpop.trf.xlu0
    %v826 = vpop.trf.xlu0
    %v827 = vpop.trf.xlu0
    %v828 = vpop.trf.xlu0
    %v829 = vpop.trf.xlu0
    %v831 = vsel %vm709, %v814, 0
    %v834 = vsel %vm709, %v815, 0
    %v837 = vsel %vm709, %v816, 0
    %v840 = vsel %vm709, %v817, 0
    %v843 = vsel %vm709, %v783, 0
    %v846 = vsel %vm709, %v785, 0
    %v849 = vsel %vm709, %v787, 0
    %v852 = vsel %vm709, %v789, 0
    %v855 = vsel %vm709, %v791, 0
    %v858 = vsel %vm709, %v793, 0
    %v861 = vsel %vm709, %v795, 0
    %v864 = vsel %vm709, %v797, 0
    %866 = vmatprep.subr.mxu0 0.0
    %867 = vmatpush1.xpose.msra.mxu0 0.0
    %868 = vmatprep.subr.mxu0 0.0
    %869 = vmatpush1.xpose.msra.mxu0 0.0
    %870 = vmatprep.subr.mxu0 0.0
    %871 = vmatpush1.xpose.msra.mxu0 0.0
    %872 = vmatprep.subr.mxu0 0.0
    %873 = vmatpush1.xpose.msra.mxu0 0.0
    %874 = vmatprep.subr.mxu0 0.0
    %875 = vmatpush1.xpose.msra.mxu0 0.0
    %876 = vmatprep.subr.mxu0 0.0
    %877 = vmatpush1.xpose.msra.mxu0 0.0
    %878 = vmatprep.subr.mxu0 0.0
    %879 = vmatpush1.xpose.msra.mxu0 0.0
    %880 = vmatprep.subr.mxu0 0.0
    %881 = vmatpush1.xpose.msra.mxu0 0.0
    %882 = vmatprep.subr.mxu0 0.0
    %883 = vmatpush1.xpose.msra.mxu0 %v864
    %884 = vmatprep.subr.mxu0 0.0
    %885 = vmatpush1.xpose.msra.mxu0 %v861
    %886 = vmatprep.subr.mxu0 0.0
    %887 = vmatpush1.xpose.msra.mxu0 %v858
    %888 = vmatprep.subr.mxu0 0.0
    %889 = vmatpush1.xpose.msra.mxu0 %v855
    %890 = vmatprep.subr.mxu0 0.0
    %891 = vmatpush1.xpose.msra.mxu0 %v852
    %892 = vmatprep.subr.mxu0 0.0
    %893 = vmatpush1.xpose.msra.mxu0 %v849
    %894 = vmatprep.subr.mxu0 0.0
    %895 = vmatpush1.xpose.msra.mxu0 %v846
    %896 = vmatprep.subr.mxu0 0.0
    %897 = vmatpush1.xpose.msra.mxu0 %v843
    %898 = vmatprep.subr.mxu0 0.0
    %899 = vmatpush2.xpose.msra.mxu0 0.0
    %900 = vmatprep.subr.mxu0 0.0
    %901 = vmatpush2.xpose.msra.mxu0 0.0
    %902 = vmatprep.subr.mxu0 0.0
    %903 = vmatpush2.xpose.msra.mxu0 0.0
    %904 = vmatprep.subr.mxu0 0.0
    %905 = vmatpush2.xpose.msra.mxu0 0.0
    %906 = vmatprep.subr.mxu0 0.0
    %907 = vmatpush2.xpose.msra.mxu0 0.0
    %908 = vmatprep.subr.mxu0 0.0
    %909 = vmatpush2.xpose.msra.mxu0 0.0
    %910 = vmatprep.subr.mxu0 0.0
    %911 = vmatpush2.xpose.msra.mxu0 0.0
    %912 = vmatprep.subr.mxu0 0.0
    %913 = vmatpush2.xpose.msra.mxu0 0.0
    %914 = vmatprep.subr.mxu0 0.0
    %915 = vmatpush2.xpose.msra.mxu0 0.0
    %916 = vmatprep.subr.mxu0 0.0
    %917 = vmatpush2.xpose.msra.mxu0 0.0
    %918 = vmatprep.subr.mxu0 0.0
    %919 = vmatpush2.xpose.msra.mxu0 0.0
    %920 = vmatprep.subr.mxu0 0.0
    %921 = vmatpush2.xpose.msra.mxu0 0.0
    %922 = vmatprep.subr.mxu0 0.0
    %923 = vmatpush2.xpose.msra.mxu0 0.0
    %924 = vmatprep.subr.mxu0 0.0
    %925 = vmatpush2.xpose.msra.mxu0 0.0
    %926 = vmatprep.subr.mxu0 0.0
    %927 = vmatpush2.xpose.msra.mxu0 0.0
    %928 = vmatprep.subr.mxu0 0.0
    %929 = vmatpush2.xpose.msra.mxu0 0.0
    %930 = vmatprep.mubr.f32.mxu0 0.0
    %931 = vmatmul.mubr.f32.gmra.mxu0 %v831
    %v932 = vpop.f32.mrf.mxu0
    %v933 = vadd.f32 0.0, %v932
    %v934 = vpop.f32.mrf.mxu0
    %935 = vmatprep.mubr.f32.mxu0 0.0
    %936 = vmatmul.mubr.f32.gmra.mxu0 %v834
    %v937 = vpop.f32.mrf.mxu0
    %v938 = vadd.f32 0.0, %v937
    %v939 = vpop.f32.mrf.mxu0
    %940 = vmatprep.mubr.f32.mxu0 0.0
    %941 = vmatmul.mubr.f32.gmra.mxu0 %v837
    %v942 = vpop.f32.mrf.mxu0
    %v943 = vadd.f32 0.0, %v942
    %v944 = vpop.f32.mrf.mxu0
    %945 = vmatprep.mubr.f32.mxu0 0.0
    %946 = vmatmul.mubr.f32.gmra.mxu0 %v840
    %v947 = vpop.f32.mrf.mxu0
    %v948 = vadd.f32 0.0, %v947
    %v949 = vpop.f32.mrf.mxu0
    %950 = vdwg.mxu0
    %951 = vrot.lane.b32.xlu0 %v496, 96
    %v952 = vpop.permute.xlu0 %951
    %953 = vrot.lane.b32.xlu0 %v497, 96
    %v954 = vpop.permute.xlu0 %953
    %955 = vrot.lane.b32.xlu0 %v498, 96
    %v956 = vpop.permute.xlu0 %955
    %957 = vrot.lane.b32.xlu0 %v499, 96
    %v958 = vpop.permute.xlu0 %957
    %959 = vrot.lane.b32.xlu0 %v500, 96
    %v960 = vpop.permute.xlu0 %959
    %961 = vrot.lane.b32.xlu0 %v501, 96
    %v962 = vpop.permute.xlu0 %961
    %963 = vrot.lane.b32.xlu0 %v502, 96
    %v964 = vpop.permute.xlu0 %963
    %965 = vrot.lane.b32.xlu0 %v503, 96
    %v966 = vpop.permute.xlu0 %965
    %967 = vrot.lane.b32.xlu0 %v508, 96
    %v968 = vpop.permute.xlu0 %967
    %969 = vrot.lane.b32.xlu0 %v509, 96
    %v970 = vpop.permute.xlu0 %969
    %971 = vrot.lane.b32.xlu0 %v510, 96
    %v972 = vpop.permute.xlu0 %971
    %973 = vrot.lane.b32.xlu0 %v511, 96
    %v974 = vpop.permute.xlu0 %973
    %975 = vrot.lane.b32.xlu0 %v512, 96
    %v976 = vpop.permute.xlu0 %975
    %977 = vrot.lane.b32.xlu0 %v513, 96
    %v978 = vpop.permute.xlu0 %977
    %979 = vrot.lane.b32.xlu0 %v514, 96
    %v980 = vpop.permute.xlu0 %979
    %981 = vrot.lane.b32.xlu0 %v515, 96
    %v982 = vpop.permute.xlu0 %981
    %v983 = vsel %vm555, %v952, 0
    %v985 = vsel %vm555, %v954, 0
    %v987 = vsel %vm555, %v956, 0
    %v989 = vsel %vm555, %v958, 0
    %v991 = vsel %vm555, %v960, 0
    %v993 = vsel %vm555, %v962, 0
    %v995 = vsel %vm555, %v964, 0
    %v997 = vsel %vm555, %v966, 0
    %v999 = vsel %vm555, %v968, 0
    %v1001 = vsel %vm555, %v970, 0
    %v1003 = vsel %vm555, %v972, 0
    %v1005 = vsel %vm555, %v974, 0
    %v1007 = vsel %vm555, %v976, 0
    %v1009 = vsel %vm555, %v978, 0
    %v1011 = vsel %vm555, %v980, 0
    %v1013 = vsel %vm555, %v982, 0
    %1015 = vmatprep.subr.mxu0 0.0
    %1016 = vmatpush1.xpose.msra.mxu0 0.0
    %1017 = vmatprep.subr.mxu0 0.0
    %1018 = vmatpush1.xpose.msra.mxu0 0.0
    %1019 = vmatprep.subr.mxu0 0.0
    %1020 = vmatpush1.xpose.msra.mxu0 0.0
    %1021 = vmatprep.subr.mxu0 0.0
    %1022 = vmatpush1.xpose.msra.mxu0 0.0
    %1023 = vmatprep.subr.mxu0 0.0
    %1024 = vmatpush1.xpose.msra.mxu0 0.0
    %1025 = vmatprep.subr.mxu0 0.0
    %1026 = vmatpush1.xpose.msra.mxu0 0.0
    %1027 = vmatprep.subr.mxu0 0.0
    %1028 = vmatpush1.xpose.msra.mxu0 0.0
    %1029 = vmatprep.subr.mxu0 0.0
    %1030 = vmatpush1.xpose.msra.mxu0 0.0
    %1031 = vmatprep.subr.mxu0 0.0
    %1032 = vmatpush1.xpose.msra.mxu0 %v1013
    %1033 = vmatprep.subr.mxu0 0.0
    %1034 = vmatpush1.xpose.msra.mxu0 %v1011
    %1035 = vmatprep.subr.mxu0 0.0
    %1036 = vmatpush1.xpose.msra.mxu0 %v1009
    %1037 = vmatprep.subr.mxu0 0.0
    %1038 = vmatpush1.xpose.msra.mxu0 %v1007
    %1039 = vmatprep.subr.mxu0 0.0
    %1040 = vmatpush1.xpose.msra.mxu0 %v1005
    %1041 = vmatprep.subr.mxu0 0.0
    %1042 = vmatpush1.xpose.msra.mxu0 %v1003
    %1043 = vmatprep.subr.mxu0 0.0
    %1044 = vmatpush1.xpose.msra.mxu0 %v1001
    %1045 = vmatprep.subr.mxu0 0.0
    %1046 = vmatpush1.xpose.msra.mxu0 %v999
    %1047 = vmatprep.subr.mxu0 0.0
    %1048 = vmatpush2.xpose.msra.mxu0 0.0
    %1049 = vmatprep.subr.mxu0 0.0
    %1050 = vmatpush2.xpose.msra.mxu0 0.0
    %1051 = vmatprep.subr.mxu0 0.0
    %1052 = vmatpush2.xpose.msra.mxu0 0.0
    %1053 = vmatprep.subr.mxu0 0.0
    %1054 = vmatpush2.xpose.msra.mxu0 0.0
    %1055 = vmatprep.subr.mxu0 0.0
    %1056 = vmatpush2.xpose.msra.mxu0 0.0
    %1057 = vmatprep.subr.mxu0 0.0
    %1058 = vmatpush2.xpose.msra.mxu0 0.0
    %1059 = vmatprep.subr.mxu0 0.0
    %1060 = vmatpush2.xpose.msra.mxu0 0.0
    %1061 = vmatprep.subr.mxu0 0.0
    %1062 = vmatpush2.xpose.msra.mxu0 0.0
    %1063 = vmatprep.subr.mxu0 0.0
    %1064 = vmatpush2.xpose.msra.mxu0 0.0
    %1065 = vmatprep.subr.mxu0 0.0
    %1066 = vmatpush2.xpose.msra.mxu0 0.0
    %1067 = vmatprep.subr.mxu0 0.0
    %1068 = vmatpush2.xpose.msra.mxu0 0.0
    %1069 = vmatprep.subr.mxu0 0.0
    %1070 = vmatpush2.xpose.msra.mxu0 0.0
    %1071 = vmatprep.subr.mxu0 0.0
    %1072 = vmatpush2.xpose.msra.mxu0 0.0
    %1073 = vmatprep.subr.mxu0 0.0
    %1074 = vmatpush2.xpose.msra.mxu0 0.0
    %1075 = vmatprep.subr.mxu0 0.0
    %1076 = vmatpush2.xpose.msra.mxu0 0.0
    %1077 = vmatprep.subr.mxu0 0.0
    %1078 = vmatpush2.xpose.msra.mxu0 0.0
    %1079 = vmatprep.mubr.f32.mxu0 0.0
    %1080 = vmatmul.mubr.f32.gmra.mxu0 %v983
    %v1081 = vpop.f32.mrf.mxu0
    %v1082 = vadd.f32 %v547, %v1081
    %v1083 = vpop.f32.mrf.mxu0
    %1084 = vmatprep.mubr.f32.mxu0 0.0
    %1085 = vmatmul.mubr.f32.gmra.mxu0 %v985
    %v1086 = vpop.f32.mrf.mxu0
    %v1087 = vadd.f32 %v548, %v1086
    %v1088 = vpop.f32.mrf.mxu0
    %1089 = vmatprep.mubr.f32.mxu0 0.0
    %1090 = vmatmul.mubr.f32.gmra.mxu0 %v987
    %v1091 = vpop.f32.mrf.mxu0
    %v1092 = vadd.f32 %v549, %v1091
    %v1093 = vpop.f32.mrf.mxu0
    %1094 = vmatprep.mubr.f32.mxu0 0.0
    %1095 = vmatmul.mubr.f32.gmra.mxu0 %v989
    %v1096 = vpop.f32.mrf.mxu0
    %v1097 = vadd.f32 %v550, %v1096
    %v1098 = vpop.f32.mrf.mxu0
    %1099 = vmatprep.mubr.f32.mxu0 0.0
    %1100 = vmatmul.mubr.f32.gmra.mxu0 %v991
    %v1101 = vpop.f32.mrf.mxu0
    %v1102 = vadd.f32 %v551, %v1101
    %v1103 = vpop.f32.mrf.mxu0
    %1104 = vmatprep.mubr.f32.mxu0 0.0
    %1105 = vmatmul.mubr.f32.gmra.mxu0 %v993
    %v1106 = vpop.f32.mrf.mxu0
    %v1107 = vadd.f32 %v552, %v1106
    %v1108 = vpop.f32.mrf.mxu0
    %1109 = vmatprep.mubr.f32.mxu0 0.0
    %1110 = vmatmul.mubr.f32.gmra.mxu0 %v995
    %v1111 = vpop.f32.mrf.mxu0
    %v1112 = vadd.f32 %v553, %v1111
    %v1113 = vpop.f32.mrf.mxu0
    %1114 = vmatprep.mubr.f32.mxu0 0.0
    %1115 = vmatmul.mubr.f32.gmra.mxu0 %v997
    %v1116 = vpop.f32.mrf.mxu0
    %v1117 = vadd.f32 %v554, %v1116
    %v1118 = vpop.f32.mrf.mxu0
    %1119 = vdwg.mxu0
    %v1120 = vsel %vm709, %v1082, -inf
    %1121 = vmax.xlane.f32.xlu0 %v1120
    %v1122 = vpop.xlane.xlu0 %1121
    %v1123 = vsel %vm709, %v1087, -inf
    %1124 = vmax.xlane.f32.xlu0 %v1123
    %v1125 = vpop.xlane.xlu0 %1124
    %v1126 = vsel %vm709, %v1092, -inf
    %1127 = vmax.xlane.f32.xlu0 %v1126
    %v1128 = vpop.xlane.xlu0 %1127
    %v1129 = vsel %vm709, %v1097, -inf
    %1130 = vmax.xlane.f32.xlu0 %v1129
    %v1131 = vpop.xlane.xlu0 %1130
    %v1132 = vsel %vm709, %v1102, -inf
    %1133 = vmax.xlane.f32.xlu0 %v1132
    %v1134 = vpop.xlane.xlu0 %1133
    %v1135 = vsel %vm709, %v1107, -inf
    %1136 = vmax.xlane.f32.xlu0 %v1135
    %v1137 = vpop.xlane.xlu0 %1136
    %v1138 = vsel %vm709, %v1112, -inf
    %1139 = vmax.xlane.f32.xlu0 %v1138
    %v1140 = vpop.xlane.xlu0 %1139
    %v1141 = vsel %vm709, %v1117, -inf
    %1142 = vmax.xlane.f32.xlu0 %v1141
    %v1143 = vpop.xlane.xlu0 %1142
    %v1144 = vsub.f32 %v1082, %v1122
    %v1145 = vsub.f32 %v1087, %v1125
    %v1146 = vsub.f32 %v1092, %v1128
    %v1147 = vsub.f32 %v1097, %v1131
    %v1148 = vsub.f32 %v1102, %v1134
    %v1149 = vsub.f32 %v1107, %v1137
    %v1150 = vsub.f32 %v1112, %v1140
    %v1151 = vsub.f32 %v1117, %v1143
    %v1152 = vmul.f32 %v1144, 1.442695
    %v1153 = vpow.pop %v1152
    %v1154 = vmul.f32 %v1145, 1.442695
    %v1155 = vpow.pop %v1154
    %v1156 = vmul.f32 %v1146, 1.442695
    %v1157 = vpow.pop %v1156
    %v1158 = vmul.f32 %v1147, 1.442695
    %v1159 = vpow.pop %v1158
    %v1160 = vmul.f32 %v1148, 1.442695
    %v1161 = vpow.pop %v1160
    %v1162 = vmul.f32 %v1149, 1.442695
    %v1163 = vpow.pop %v1162
    %v1164 = vmul.f32 %v1150, 1.442695
    %v1165 = vpow.pop %v1164
    %v1166 = vmul.f32 %v1151, 1.442695
    %v1167 = vpow.pop %v1166
    %v1168 = vsel %vm709, %v1153, 0.0
    %1169 = vadd.xlane.f32.xlu0 %v1168
    %v1170 = vpop.xlane.xlu0 %1169
    %v1171 = vsel %vm709, %v1155, 0.0
    %1172 = vadd.xlane.f32.xlu0 %v1171
    %v1173 = vpop.xlane.xlu0 %1172
    %v1174 = vsel %vm709, %v1157, 0.0
    %1175 = vadd.xlane.f32.xlu0 %v1174
    %v1176 = vpop.xlane.xlu0 %1175
    %v1177 = vsel %vm709, %v1159, 0.0
    %1178 = vadd.xlane.f32.xlu0 %v1177
    %v1179 = vpop.xlane.xlu0 %1178
    %v1180 = vsel %vm709, %v1161, 0.0
    %1181 = vadd.xlane.f32.xlu0 %v1180
    %v1182 = vpop.xlane.xlu0 %1181
    %v1183 = vsel %vm709, %v1163, 0.0
    %1184 = vadd.xlane.f32.xlu0 %v1183
    %v1185 = vpop.xlane.xlu0 %1184
    %v1186 = vsel %vm709, %v1165, 0.0
    %1187 = vadd.xlane.f32.xlu0 %v1186
    %v1188 = vpop.xlane.xlu0 %1187
    %v1189 = vsel %vm709, %v1167, 0.0
    %1190 = vadd.xlane.f32.xlu0 %v1189
    %v1191 = vpop.xlane.xlu0 %1190
    %v1192 = vrcp.pop %v1170
    %v1193 = vmul.f32 %v1153, %v1192
    %v1194 = vrcp.pop %v1173
    %v1195 = vmul.f32 %v1155, %v1194
    %v1196 = vrcp.pop %v1176
    %v1197 = vmul.f32 %v1157, %v1196
    %v1198 = vrcp.pop %v1179
    %v1199 = vmul.f32 %v1159, %v1198
    %v1200 = vrcp.pop %v1182
    %v1201 = vmul.f32 %v1161, %v1200
    %v1202 = vrcp.pop %v1185
    %v1203 = vmul.f32 %v1163, %v1202
    %v1204 = vrcp.pop %v1188
    %v1205 = vmul.f32 %v1165, %v1204
    %v1206 = vrcp.pop %v1191
    %v1207 = vmul.f32 %v1167, %v1206
    %1216 = vrot.lane.b32.xlu0 %v520, 96
    %v1217 = vpop.permute.xlu0 %1216
    %1218 = vrot.lane.b32.xlu0 %v521, 96
    %v1219 = vpop.permute.xlu0 %1218
    %1220 = vrot.lane.b32.xlu0 %v522, 96
    %v1221 = vpop.permute.xlu0 %1220
    %1222 = vrot.lane.b32.xlu0 %v523, 96
    %v1223 = vpop.permute.xlu0 %1222
    %1224 = vrot.lane.b32.xlu0 %v524, 96
    %v1225 = vpop.permute.xlu0 %1224
    %1226 = vrot.lane.b32.xlu0 %v525, 96
    %v1227 = vpop.permute.xlu0 %1226
    %1228 = vrot.lane.b32.xlu0 %v526, 96
    %v1229 = vpop.permute.xlu0 %1228
    %1230 = vrot.lane.b32.xlu0 %v527, 96
    %v1231 = vpop.permute.xlu0 %1230
    %1240 = vxpose.xlu0.b32.start [1/16] %v1217, 128
    %1241 = vxpose.xlu0.b32.cont [2/16] %v1219, 128
    %1242 = vxpose.xlu0.b32.cont [3/16] %v1221, 128
    %1243 = vxpose.xlu0.b32.cont [4/16] %v1223, 128
    %1244 = vxpose.xlu0.b32.cont [5/16] %v1225, 128
    %1245 = vxpose.xlu0.b32.cont [6/16] %v1227, 128
    %1246 = vxpose.xlu0.b32.cont [7/16] %v1229, 128
    %1247 = vxpose.xlu0.b32.cont [8/16] %v1231, 128
    %1248 = vxpose.xlu0.b32.cont [9/16] 0.0, 128
    %1249 = vxpose.xlu0.b32.cont [10/16] 0.0, 128
    %1250 = vxpose.xlu0.b32.cont [11/16] 0.0, 128
    %1251 = vxpose.xlu0.b32.cont [12/16] 0.0, 128
    %1252 = vxpose.xlu0.b32.cont [13/16] 0.0, 128
    %1253 = vxpose.xlu0.b32.cont [14/16] 0.0, 128
    %1254 = vxpose.xlu0.b32.cont [15/16] 0.0, 128
    %1255 = vxpose.xlu0.b32.end [16/16] 0.0, 128
    %v1256 = vpop.trf.xlu0
    %v1257 = vpop.trf.xlu0
    %v1258 = vpop.trf.xlu0
    %v1259 = vpop.trf.xlu0
    %v1260 = vpop.trf.xlu0
    %v1261 = vpop.trf.xlu0
    %v1262 = vpop.trf.xlu0
    %v1263 = vpop.trf.xlu0
    %v1264 = vpop.trf.xlu0
    %v1265 = vpop.trf.xlu0
    %v1266 = vpop.trf.xlu0
    %v1267 = vpop.trf.xlu0
    %v1268 = vpop.trf.xlu0
    %v1269 = vpop.trf.xlu0
    %v1270 = vpop.trf.xlu0
    %v1271 = vpop.trf.xlu0
    %v1273 = vsel %vm709, %v1256, 0
    %v1276 = vsel %vm709, %v1257, 0
    %v1279 = vsel %vm709, %v1258, 0
    %v1282 = vsel %vm709, %v1259, 0
    %v1285 = vsel %vm709, %v1193, 0
    %v1288 = vsel %vm709, %v1195, 0
    %v1291 = vsel %vm709, %v1197, 0
    %v1294 = vsel %vm709, %v1199, 0
    %v1297 = vsel %vm709, %v1201, 0
    %v1300 = vsel %vm709, %v1203, 0
    %v1303 = vsel %vm709, %v1205, 0
    %v1306 = vsel %vm709, %v1207, 0
    %1308 = vmatprep.subr.mxu0 0.0
    %1309 = vmatpush1.xpose.msra.mxu0 0.0
    %1310 = vmatprep.subr.mxu0 0.0
    %1311 = vmatpush1.xpose.msra.mxu0 0.0
    %1312 = vmatprep.subr.mxu0 0.0
    %1313 = vmatpush1.xpose.msra.mxu0 0.0
    %1314 = vmatprep.subr.mxu0 0.0
    %1315 = vmatpush1.xpose.msra.mxu0 0.0
    %1316 = vmatprep.subr.mxu0 0.0
    %1317 = vmatpush1.xpose.msra.mxu0 0.0
    %1318 = vmatprep.subr.mxu0 0.0
    %1319 = vmatpush1.xpose.msra.mxu0 0.0
    %1320 = vmatprep.subr.mxu0 0.0
    %1321 = vmatpush1.xpose.msra.mxu0 0.0
    %1322 = vmatprep.subr.mxu0 0.0
    %1323 = vmatpush1.xpose.msra.mxu0 0.0
    %1324 = vmatprep.subr.mxu0 0.0
    %1325 = vmatpush1.xpose.msra.mxu0 %v1306
    %1326 = vmatprep.subr.mxu0 0.0
    %1327 = vmatpush1.xpose.msra.mxu0 %v1303
    %1328 = vmatprep.subr.mxu0 0.0
    %1329 = vmatpush1.xpose.msra.mxu0 %v1300
    %1330 = vmatprep.subr.mxu0 0.0
    %1331 = vmatpush1.xpose.msra.mxu0 %v1297
    %1332 = vmatprep.subr.mxu0 0.0
    %1333 = vmatpush1.xpose.msra.mxu0 %v1294
    %1334 = vmatprep.subr.mxu0 0.0
    %1335 = vmatpush1.xpose.msra.mxu0 %v1291
    %1336 = vmatprep.subr.mxu0 0.0
    %1337 = vmatpush1.xpose.msra.mxu0 %v1288
    %1338 = vmatprep.subr.mxu0 0.0
    %1339 = vmatpush1.xpose.msra.mxu0 %v1285
    %1340 = vmatprep.subr.mxu0 0.0
    %1341 = vmatpush2.xpose.msra.mxu0 0.0
    %1342 = vmatprep.subr.mxu0 0.0
    %1343 = vmatpush2.xpose.msra.mxu0 0.0
    %1344 = vmatprep.subr.mxu0 0.0
    %1345 = vmatpush2.xpose.msra.mxu0 0.0
    %1346 = vmatprep.subr.mxu0 0.0
    %1347 = vmatpush2.xpose.msra.mxu0 0.0
    %1348 = vmatprep.subr.mxu0 0.0
    %1349 = vmatpush2.xpose.msra.mxu0 0.0
    %1350 = vmatprep.subr.mxu0 0.0
    %1351 = vmatpush2.xpose.msra.mxu0 0.0
    %1352 = vmatprep.subr.mxu0 0.0
    %1353 = vmatpush2.xpose.msra.mxu0 0.0
    %1354 = vmatprep.subr.mxu0 0.0
    %1355 = vmatpush2.xpose.msra.mxu0 0.0
    %1356 = vmatprep.subr.mxu0 0.0
    %1357 = vmatpush2.xpose.msra.mxu0 0.0
    %1358 = vmatprep.subr.mxu0 0.0
    %1359 = vmatpush2.xpose.msra.mxu0 0.0
    %1360 = vmatprep.subr.mxu0 0.0
    %1361 = vmatpush2.xpose.msra.mxu0 0.0
    %1362 = vmatprep.subr.mxu0 0.0
    %1363 = vmatpush2.xpose.msra.mxu0 0.0
    %1364 = vmatprep.subr.mxu0 0.0
    %1365 = vmatpush2.xpose.msra.mxu0 0.0
    %1366 = vmatprep.subr.mxu0 0.0
    %1367 = vmatpush2.xpose.msra.mxu0 0.0
    %1368 = vmatprep.subr.mxu0 0.0
    %1369 = vmatpush2.xpose.msra.mxu0 0.0
    %1370 = vmatprep.subr.mxu0 0.0
    %1371 = vmatpush2.xpose.msra.mxu0 0.0
    %1372 = vmatprep.mubr.f32.mxu0 0.0
    %1373 = vmatmul.mubr.f32.gmra.mxu0 %v1273
    %v1374 = vpop.f32.mrf.mxu0
    %v1375 = vadd.f32 0.0, %v1374
    %v1376 = vpop.f32.mrf.mxu0
    %1377 = vmatprep.mubr.f32.mxu0 0.0
    %1378 = vmatmul.mubr.f32.gmra.mxu0 %v1276
    %v1379 = vpop.f32.mrf.mxu0
    %v1380 = vadd.f32 0.0, %v1379
    %v1381 = vpop.f32.mrf.mxu0
    %1382 = vmatprep.mubr.f32.mxu0 0.0
    %1383 = vmatmul.mubr.f32.gmra.mxu0 %v1279
    %v1384 = vpop.f32.mrf.mxu0
    %v1385 = vadd.f32 0.0, %v1384
    %v1386 = vpop.f32.mrf.mxu0
    %1387 = vmatprep.mubr.f32.mxu0 0.0
    %1388 = vmatmul.mubr.f32.gmra.mxu0 %v1282
    %v1389 = vpop.f32.mrf.mxu0
    %v1390 = vadd.f32 0.0, %v1389
    %v1391 = vpop.f32.mrf.mxu0
    %1392 = vdwg.mxu0
    %1393 = vrot.lane.b32.xlu0 %v496, 64
    %v1394 = vpop.permute.xlu0 %1393
    %1395 = vrot.lane.b32.xlu0 %v497, 64
    %v1396 = vpop.permute.xlu0 %1395
    %1397 = vrot.lane.b32.xlu0 %v498, 64
    %v1398 = vpop.permute.xlu0 %1397
    %1399 = vrot.lane.b32.xlu0 %v499, 64
    %v1400 = vpop.permute.xlu0 %1399
    %1401 = vrot.lane.b32.xlu0 %v500, 64
    %v1402 = vpop.permute.xlu0 %1401
    %1403 = vrot.lane.b32.xlu0 %v501, 64
    %v1404 = vpop.permute.xlu0 %1403
    %1405 = vrot.lane.b32.xlu0 %v502, 64
    %v1406 = vpop.permute.xlu0 %1405
    %1407 = vrot.lane.b32.xlu0 %v503, 64
    %v1408 = vpop.permute.xlu0 %1407
    %1409 = vrot.lane.b32.xlu0 %v508, 64
    %v1410 = vpop.permute.xlu0 %1409
    %1411 = vrot.lane.b32.xlu0 %v509, 64
    %v1412 = vpop.permute.xlu0 %1411
    %1413 = vrot.lane.b32.xlu0 %v510, 64
    %v1414 = vpop.permute.xlu0 %1413
    %1415 = vrot.lane.b32.xlu0 %v511, 64
    %v1416 = vpop.permute.xlu0 %1415
    %1417 = vrot.lane.b32.xlu0 %v512, 64
    %v1418 = vpop.permute.xlu0 %1417
    %1419 = vrot.lane.b32.xlu0 %v513, 64
    %v1420 = vpop.permute.xlu0 %1419
    %1421 = vrot.lane.b32.xlu0 %v514, 64
    %v1422 = vpop.permute.xlu0 %1421
    %1423 = vrot.lane.b32.xlu0 %v515, 64
    %v1424 = vpop.permute.xlu0 %1423
    %v1425 = vsel %vm555, %v1394, 0
    %v1427 = vsel %vm555, %v1396, 0
    %v1429 = vsel %vm555, %v1398, 0
    %v1431 = vsel %vm555, %v1400, 0
    %v1433 = vsel %vm555, %v1402, 0
    %v1435 = vsel %vm555, %v1404, 0
    %v1437 = vsel %vm555, %v1406, 0
    %v1439 = vsel %vm555, %v1408, 0
    %v1441 = vsel %vm555, %v1410, 0
    %v1443 = vsel %vm555, %v1412, 0
    %v1445 = vsel %vm555, %v1414, 0
    %v1447 = vsel %vm555, %v1416, 0
    %v1449 = vsel %vm555, %v1418, 0
    %v1451 = vsel %vm555, %v1420, 0
    %v1453 = vsel %vm555, %v1422, 0
    %v1455 = vsel %vm555, %v1424, 0
    %1457 = vmatprep.subr.mxu0 0.0
    %1458 = vmatpush1.xpose.msra.mxu0 0.0
    %1459 = vmatprep.subr.mxu0 0.0
    %1460 = vmatpush1.xpose.msra.mxu0 0.0
    %1461 = vmatprep.subr.mxu0 0.0
    %1462 = vmatpush1.xpose.msra.mxu0 0.0
    %1463 = vmatprep.subr.mxu0 0.0
    %1464 = vmatpush1.xpose.msra.mxu0 0.0
    %1465 = vmatprep.subr.mxu0 0.0
    %1466 = vmatpush1.xpose.msra.mxu0 0.0
    %1467 = vmatprep.subr.mxu0 0.0
    %1468 = vmatpush1.xpose.msra.mxu0 0.0
    %1469 = vmatprep.subr.mxu0 0.0
    %1470 = vmatpush1.xpose.msra.mxu0 0.0
    %1471 = vmatprep.subr.mxu0 0.0
    %1472 = vmatpush1.xpose.msra.mxu0 0.0
    %1473 = vmatprep.subr.mxu0 0.0
    %1474 = vmatpush1.xpose.msra.mxu0 %v1455
    %1475 = vmatprep.subr.mxu0 0.0
    %1476 = vmatpush1.xpose.msra.mxu0 %v1453
    %1477 = vmatprep.subr.mxu0 0.0
    %1478 = vmatpush1.xpose.msra.mxu0 %v1451
    %1479 = vmatprep.subr.mxu0 0.0
    %1480 = vmatpush1.xpose.msra.mxu0 %v1449
    %1481 = vmatprep.subr.mxu0 0.0
    %1482 = vmatpush1.xpose.msra.mxu0 %v1447
    %1483 = vmatprep.subr.mxu0 0.0
    %1484 = vmatpush1.xpose.msra.mxu0 %v1445
    %1485 = vmatprep.subr.mxu0 0.0
    %1486 = vmatpush1.xpose.msra.mxu0 %v1443
    %1487 = vmatprep.subr.mxu0 0.0
    %1488 = vmatpush1.xpose.msra.mxu0 %v1441
    %1489 = vmatprep.subr.mxu0 0.0
    %1490 = vmatpush2.xpose.msra.mxu0 0.0
    %1491 = vmatprep.subr.mxu0 0.0
    %1492 = vmatpush2.xpose.msra.mxu0 0.0
    %1493 = vmatprep.subr.mxu0 0.0
    %1494 = vmatpush2.xpose.msra.mxu0 0.0
    %1495 = vmatprep.subr.mxu0 0.0
    %1496 = vmatpush2.xpose.msra.mxu0 0.0
    %1497 = vmatprep.subr.mxu0 0.0
    %1498 = vmatpush2.xpose.msra.mxu0 0.0
    %1499 = vmatprep.subr.mxu0 0.0
    %1500 = vmatpush2.xpose.msra.mxu0 0.0
    %1501 = vmatprep.subr.mxu0 0.0
    %1502 = vmatpush2.xpose.msra.mxu0 0.0
    %1503 = vmatprep.subr.mxu0 0.0
    %1504 = vmatpush2.xpose.msra.mxu0 0.0
    %1505 = vmatprep.subr.mxu0 0.0
    %1506 = vmatpush2.xpose.msra.mxu0 0.0
    %1507 = vmatprep.subr.mxu0 0.0
    %1508 = vmatpush2.xpose.msra.mxu0 0.0
    %1509 = vmatprep.subr.mxu0 0.0
    %1510 = vmatpush2.xpose.msra.mxu0 0.0
    %1511 = vmatprep.subr.mxu0 0.0
    %1512 = vmatpush2.xpose.msra.mxu0 0.0
    %1513 = vmatprep.subr.mxu0 0.0
    %1514 = vmatpush2.xpose.msra.mxu0 0.0
    %1515 = vmatprep.subr.mxu0 0.0
    %1516 = vmatpush2.xpose.msra.mxu0 0.0
    %1517 = vmatprep.subr.mxu0 0.0
    %1518 = vmatpush2.xpose.msra.mxu0 0.0
    %1519 = vmatprep.subr.mxu0 0.0
    %1520 = vmatpush2.xpose.msra.mxu0 0.0
    %1521 = vmatprep.mubr.f32.mxu0 0.0
    %1522 = vmatmul.mubr.f32.gmra.mxu0 %v1425
    %v1523 = vpop.f32.mrf.mxu0
    %v1524 = vadd.f32 %v547, %v1523
    %v1525 = vpop.f32.mrf.mxu0
    %1526 = vmatprep.mubr.f32.mxu0 0.0
    %1527 = vmatmul.mubr.f32.gmra.mxu0 %v1427
    %v1528 = vpop.f32.mrf.mxu0
    %v1529 = vadd.f32 %v548, %v1528
    %v1530 = vpop.f32.mrf.mxu0
    %1531 = vmatprep.mubr.f32.mxu0 0.0
    %1532 = vmatmul.mubr.f32.gmra.mxu0 %v1429
    %v1533 = vpop.f32.mrf.mxu0
    %v1534 = vadd.f32 %v549, %v1533
    %v1535 = vpop.f32.mrf.mxu0
    %1536 = vmatprep.mubr.f32.mxu0 0.0
    %1537 = vmatmul.mubr.f32.gmra.mxu0 %v1431
    %v1538 = vpop.f32.mrf.mxu0
    %v1539 = vadd.f32 %v550, %v1538
    %v1540 = vpop.f32.mrf.mxu0
    %1541 = vmatprep.mubr.f32.mxu0 0.0
    %1542 = vmatmul.mubr.f32.gmra.mxu0 %v1433
    %v1543 = vpop.f32.mrf.mxu0
    %v1544 = vadd.f32 %v551, %v1543
    %v1545 = vpop.f32.mrf.mxu0
    %1546 = vmatprep.mubr.f32.mxu0 0.0
    %1547 = vmatmul.mubr.f32.gmra.mxu0 %v1435
    %v1548 = vpop.f32.mrf.mxu0
    %v1549 = vadd.f32 %v552, %v1548
    %v1550 = vpop.f32.mrf.mxu0
    %1551 = vmatprep.mubr.f32.mxu0 0.0
    %1552 = vmatmul.mubr.f32.gmra.mxu0 %v1437
    %v1553 = vpop.f32.mrf.mxu0
    %v1554 = vadd.f32 %v553, %v1553
    %v1555 = vpop.f32.mrf.mxu0
    %1556 = vmatprep.mubr.f32.mxu0 0.0
    %1557 = vmatmul.mubr.f32.gmra.mxu0 %v1439
    %v1558 = vpop.f32.mrf.mxu0
    %v1559 = vadd.f32 %v554, %v1558
    %v1560 = vpop.f32.mrf.mxu0
    %1561 = vdwg.mxu0
    %v1562 = vsel %vm709, %v1524, -inf
    %1563 = vmax.xlane.f32.xlu0 %v1562
    %v1564 = vpop.xlane.xlu0 %1563
    %v1565 = vsel %vm709, %v1529, -inf
    %1566 = vmax.xlane.f32.xlu0 %v1565
    %v1567 = vpop.xlane.xlu0 %1566
    %v1568 = vsel %vm709, %v1534, -inf
    %1569 = vmax.xlane.f32.xlu0 %v1568
    %v1570 = vpop.xlane.xlu0 %1569
    %v1571 = vsel %vm709, %v1539, -inf
    %1572 = vmax.xlane.f32.xlu0 %v1571
    %v1573 = vpop.xlane.xlu0 %1572
    %v1574 = vsel %vm709, %v1544, -inf
    %1575 = vmax.xlane.f32.xlu0 %v1574
    %v1576 = vpop.xlane.xlu0 %1575
    %v1577 = vsel %vm709, %v1549, -inf
    %1578 = vmax.xlane.f32.xlu0 %v1577
    %v1579 = vpop.xlane.xlu0 %1578
    %v1580 = vsel %vm709, %v1554, -inf
    %1581 = vmax.xlane.f32.xlu0 %v1580
    %v1582 = vpop.xlane.xlu0 %1581
    %v1583 = vsel %vm709, %v1559, -inf
    %1584 = vmax.xlane.f32.xlu0 %v1583
    %v1585 = vpop.xlane.xlu0 %1584
    %v1586 = vsub.f32 %v1524, %v1564
    %v1587 = vsub.f32 %v1529, %v1567
    %v1588 = vsub.f32 %v1534, %v1570
    %v1589 = vsub.f32 %v1539, %v1573
    %v1590 = vsub.f32 %v1544, %v1576
    %v1591 = vsub.f32 %v1549, %v1579
    %v1592 = vsub.f32 %v1554, %v1582
    %v1593 = vsub.f32 %v1559, %v1585
    %v1594 = vmul.f32 %v1586, 1.442695
    %v1595 = vpow.pop %v1594
    %v1596 = vmul.f32 %v1587, 1.442695
    %v1597 = vpow.pop %v1596
    %v1598 = vmul.f32 %v1588, 1.442695
    %v1599 = vpow.pop %v1598
    %v1600 = vmul.f32 %v1589, 1.442695
    %v1601 = vpow.pop %v1600
    %v1602 = vmul.f32 %v1590, 1.442695
    %v1603 = vpow.pop %v1602
    %v1604 = vmul.f32 %v1591, 1.442695
    %v1605 = vpow.pop %v1604
    %v1606 = vmul.f32 %v1592, 1.442695
    %v1607 = vpow.pop %v1606
    %v1608 = vmul.f32 %v1593, 1.442695
    %v1609 = vpow.pop %v1608
    %v1610 = vsel %vm709, %v1595, 0.0
    %1611 = vadd.xlane.f32.xlu0 %v1610
    %v1612 = vpop.xlane.xlu0 %1611
    %v1613 = vsel %vm709, %v1597, 0.0
    %1614 = vadd.xlane.f32.xlu0 %v1613
    %v1615 = vpop.xlane.xlu0 %1614
    %v1616 = vsel %vm709, %v1599, 0.0
    %1617 = vadd.xlane.f32.xlu0 %v1616
    %v1618 = vpop.xlane.xlu0 %1617
    %v1619 = vsel %vm709, %v1601, 0.0
    %1620 = vadd.xlane.f32.xlu0 %v1619
    %v1621 = vpop.xlane.xlu0 %1620
    %v1622 = vsel %vm709, %v1603, 0.0
    %1623 = vadd.xlane.f32.xlu0 %v1622
    %v1624 = vpop.xlane.xlu0 %1623
    %v1625 = vsel %vm709, %v1605, 0.0
    %1626 = vadd.xlane.f32.xlu0 %v1625
    %v1627 = vpop.xlane.xlu0 %1626
    %v1628 = vsel %vm709, %v1607, 0.0
    %1629 = vadd.xlane.f32.xlu0 %v1628
    %v1630 = vpop.xlane.xlu0 %1629
    %v1631 = vsel %vm709, %v1609, 0.0
    %1632 = vadd.xlane.f32.xlu0 %v1631
    %v1633 = vpop.xlane.xlu0 %1632
    %v1634 = vrcp.pop %v1612
    %v1635 = vmul.f32 %v1595, %v1634
    %v1636 = vrcp.pop %v1615
    %v1637 = vmul.f32 %v1597, %v1636
    %v1638 = vrcp.pop %v1618
    %v1639 = vmul.f32 %v1599, %v1638
    %v1640 = vrcp.pop %v1621
    %v1641 = vmul.f32 %v1601, %v1640
    %v1642 = vrcp.pop %v1624
    %v1643 = vmul.f32 %v1603, %v1642
    %v1644 = vrcp.pop %v1627
    %v1645 = vmul.f32 %v1605, %v1644
    %v1646 = vrcp.pop %v1630
    %v1647 = vmul.f32 %v1607, %v1646
    %v1648 = vrcp.pop %v1633
    %v1649 = vmul.f32 %v1609, %v1648
    %1650 = vrot.lane.b32.xlu0 %v520, 64
    %v1651 = vpop.permute.xlu0 %1650
    %1652 = vrot.lane.b32.xlu0 %v521, 64
    %v1653 = vpop.permute.xlu0 %1652
    %1654 = vrot.lane.b32.xlu0 %v522, 64
    %v1655 = vpop.permute.xlu0 %1654
    %1656 = vrot.lane.b32.xlu0 %v523, 64
    %v1657 = vpop.permute.xlu0 %1656
    %1658 = vrot.lane.b32.xlu0 %v524, 64
    %v1659 = vpop.permute.xlu0 %1658
    %1660 = vrot.lane.b32.xlu0 %v525, 64
    %v1661 = vpop.permute.xlu0 %1660
    %1662 = vrot.lane.b32.xlu0 %v526, 64
    %v1663 = vpop.permute.xlu0 %1662
    %1664 = vrot.lane.b32.xlu0 %v527, 64
    %v1665 = vpop.permute.xlu0 %1664
    %1674 = vxpose.xlu0.b32.start [1/16] %v1651, 128
    %1675 = vxpose.xlu0.b32.cont [2/16] %v1653, 128
    %1676 = vxpose.xlu0.b32.cont [3/16] %v1655, 128
    %1677 = vxpose.xlu0.b32.cont [4/16] %v1657, 128
    %1678 = vxpose.xlu0.b32.cont [5/16] %v1659, 128
    %1679 = vxpose.xlu0.b32.cont [6/16] %v1661, 128
    %1680 = vxpose.xlu0.b32.cont [7/16] %v1663, 128
    %1681 = vxpose.xlu0.b32.cont [8/16] %v1665, 128
    %1682 = vxpose.xlu0.b32.cont [9/16] 0.0, 128
    %1683 = vxpose.xlu0.b32.cont [10/16] 0.0, 128
    %1684 = vxpose.xlu0.b32.cont [11/16] 0.0, 128
    %1685 = vxpose.xlu0.b32.cont [12/16] 0.0, 128
    %1686 = vxpose.xlu0.b32.cont [13/16] 0.0, 128
    %1687 = vxpose.xlu0.b32.cont [14/16] 0.0, 128
    %1688 = vxpose.xlu0.b32.cont [15/16] 0.0, 128
    %1689 = vxpose.xlu0.b32.end [16/16] 0.0, 128
    %v1690 = vpop.trf.xlu0
    %v1691 = vpop.trf.xlu0
    %v1692 = vpop.trf.xlu0
    %v1693 = vpop.trf.xlu0
    %v1694 = vpop.trf.xlu0
    %v1695 = vpop.trf.xlu0
    %v1696 = vpop.trf.xlu0
    %v1697 = vpop.trf.xlu0
    %v1698 = vpop.trf.xlu0
    %v1699 = vpop.trf.xlu0
    %v1700 = vpop.trf.xlu0
    %v1701 = vpop.trf.xlu0
    %v1702 = vpop.trf.xlu0
    %v1703 = vpop.trf.xlu0
    %v1704 = vpop.trf.xlu0
    %v1705 = vpop.trf.xlu0
    %v1707 = vsel %vm709, %v1690, 0
    %v1710 = vsel %vm709, %v1691, 0
    %v1713 = vsel %vm709, %v1692, 0
    %v1716 = vsel %vm709, %v1693, 0
    %v1719 = vsel %vm709, %v1635, 0
    %v1722 = vsel %vm709, %v1637, 0
    %v1725 = vsel %vm709, %v1639, 0
    %v1728 = vsel %vm709, %v1641, 0
    %v1731 = vsel %vm709, %v1643, 0
    %v1734 = vsel %vm709, %v1645, 0
    %v1737 = vsel %vm709, %v1647, 0
    %v1740 = vsel %vm709, %v1649, 0
    %1742 = vmatprep.subr.mxu0 0.0
    %1743 = vmatpush1.xpose.msra.mxu0 0.0
    %1744 = vmatprep.subr.mxu0 0.0
    %1745 = vmatpush1.xpose.msra.mxu0 0.0
    %1746 = vmatprep.subr.mxu0 0.0
    %1747 = vmatpush1.xpose.msra.mxu0 0.0
    %1748 = vmatprep.subr.mxu0 0.0
    %1749 = vmatpush1.xpose.msra.mxu0 0.0
    %1750 = vmatprep.subr.mxu0 0.0
    %1751 = vmatpush1.xpose.msra.mxu0 0.0
    %1752 = vmatprep.subr.mxu0 0.0
    %1753 = vmatpush1.xpose.msra.mxu0 0.0
    %1754 = vmatprep.subr.mxu0 0.0
    %1755 = vmatpush1.xpose.msra.mxu0 0.0
    %1756 = vmatprep.subr.mxu0 0.0
    %1757 = vmatpush1.xpose.msra.mxu0 0.0
    %1758 = vmatprep.subr.mxu0 0.0
    %1759 = vmatpush1.xpose.msra.mxu0 %v1740
    %1760 = vmatprep.subr.mxu0 0.0
    %1761 = vmatpush1.xpose.msra.mxu0 %v1737
    %1762 = vmatprep.subr.mxu0 0.0
    %1763 = vmatpush1.xpose.msra.mxu0 %v1734
    %1764 = vmatprep.subr.mxu0 0.0
    %1765 = vmatpush1.xpose.msra.mxu0 %v1731
    %1766 = vmatprep.subr.mxu0 0.0
    %1767 = vmatpush1.xpose.msra.mxu0 %v1728
    %1768 = vmatprep.subr.mxu0 0.0
    %1769 = vmatpush1.xpose.msra.mxu0 %v1725
    %1770 = vmatprep.subr.mxu0 0.0
    %1771 = vmatpush1.xpose.msra.mxu0 %v1722
    %1772 = vmatprep.subr.mxu0 0.0
    %1773 = vmatpush1.xpose.msra.mxu0 %v1719
    %1774 = vmatprep.subr.mxu0 0.0
    %1775 = vmatpush2.xpose.msra.mxu0 0.0
    %1776 = vmatprep.subr.mxu0 0.0
    %1777 = vmatpush2.xpose.msra.mxu0 0.0
    %1778 = vmatprep.subr.mxu0 0.0
    %1779 = vmatpush2.xpose.msra.mxu0 0.0
    %1780 = vmatprep.subr.mxu0 0.0
    %1781 = vmatpush2.xpose.msra.mxu0 0.0
    %1782 = vmatprep.subr.mxu0 0.0
    %1783 = vmatpush2.xpose.msra.mxu0 0.0
    %1784 = vmatprep.subr.mxu0 0.0
    %1785 = vmatpush2.xpose.msra.mxu0 0.0
    %1786 = vmatprep.subr.mxu0 0.0
    %1787 = vmatpush2.xpose.msra.mxu0 0.0
    %1788 = vmatprep.subr.mxu0 0.0
    %1789 = vmatpush2.xpose.msra.mxu0 0.0
    %1790 = vmatprep.subr.mxu0 0.0
    %1791 = vmatpush2.xpose.msra.mxu0 0.0
    %1792 = vmatprep.subr.mxu0 0.0
    %1793 = vmatpush2.xpose.msra.mxu0 0.0
    %1794 = vmatprep.subr.mxu0 0.0
    %1795 = vmatpush2.xpose.msra.mxu0 0.0
    %1796 = vmatprep.subr.mxu0 0.0
    %1797 = vmatpush2.xpose.msra.mxu0 0.0
    %1798 = vmatprep.subr.mxu0 0.0
    %1799 = vmatpush2.xpose.msra.mxu0 0.0
    %1800 = vmatprep.subr.mxu0 0.0
    %1801 = vmatpush2.xpose.msra.mxu0 0.0
    %1802 = vmatprep.subr.mxu0 0.0
    %1803 = vmatpush2.xpose.msra.mxu0 0.0
    %1804 = vmatprep.subr.mxu0 0.0
    %1805 = vmatpush2.xpose.msra.mxu0 0.0
    %1806 = vmatprep.mubr.f32.mxu0 0.0
    %1807 = vmatmul.mubr.f32.gmra.mxu0 %v1707
    %v1808 = vpop.f32.mrf.mxu0
    %v1809 = vadd.f32 0.0, %v1808
    %v1810 = vpop.f32.mrf.mxu0
    %1811 = vmatprep.mubr.f32.mxu0 0.0
    %1812 = vmatmul.mubr.f32.gmra.mxu0 %v1710
    %v1813 = vpop.f32.mrf.mxu0
    %v1814 = vadd.f32 0.0, %v1813
    %v1815 = vpop.f32.mrf.mxu0
    %1816 = vmatprep.mubr.f32.mxu0 0.0
    %1817 = vmatmul.mubr.f32.gmra.mxu0 %v1713
    %v1818 = vpop.f32.mrf.mxu0
    %v1819 = vadd.f32 0.0, %v1818
    %v1820 = vpop.f32.mrf.mxu0
    %1821 = vmatprep.mubr.f32.mxu0 0.0
    %1822 = vmatmul.mubr.f32.gmra.mxu0 %v1716
    %v1823 = vpop.f32.mrf.mxu0
    %v1824 = vadd.f32 0.0, %v1823
    %v1825 = vpop.f32.mrf.mxu0
    %1826 = vdwg.mxu0
    %1827 = vrot.lane.b32.xlu0 %v496, 32
    %v1828 = vpop.permute.xlu0 %1827
    %1829 = vrot.lane.b32.xlu0 %v497, 32
    %v1830 = vpop.permute.xlu0 %1829
    %1831 = vrot.lane.b32.xlu0 %v498, 32
    %v1832 = vpop.permute.xlu0 %1831
    %1833 = vrot.lane.b32.xlu0 %v499, 32
    %v1834 = vpop.permute.xlu0 %1833
    %1835 = vrot.lane.b32.xlu0 %v500, 32
    %v1836 = vpop.permute.xlu0 %1835
    %1837 = vrot.lane.b32.xlu0 %v501, 32
    %v1838 = vpop.permute.xlu0 %1837
    %1839 = vrot.lane.b32.xlu0 %v502, 32
    %v1840 = vpop.permute.xlu0 %1839
    %1841 = vrot.lane.b32.xlu0 %v503, 32
    %v1842 = vpop.permute.xlu0 %1841
    %1843 = vrot.lane.b32.xlu0 %v508, 32
    %v1844 = vpop.permute.xlu0 %1843
    %1845 = vrot.lane.b32.xlu0 %v509, 32
    %v1846 = vpop.permute.xlu0 %1845
    %1847 = vrot.lane.b32.xlu0 %v510, 32
    %v1848 = vpop.permute.xlu0 %1847
    %1849 = vrot.lane.b32.xlu0 %v511, 32
    %v1850 = vpop.permute.xlu0 %1849
    %1851 = vrot.lane.b32.xlu0 %v512, 32
    %v1852 = vpop.permute.xlu0 %1851
    %1853 = vrot.lane.b32.xlu0 %v513, 32
    %v1854 = vpop.permute.xlu0 %1853
    %1855 = vrot.lane.b32.xlu0 %v514, 32
    %v1856 = vpop.permute.xlu0 %1855
    %1857 = vrot.lane.b32.xlu0 %v515, 32
    %v1858 = vpop.permute.xlu0 %1857
    %v1859 = vsel %vm555, %v1828, 0
    %v1861 = vsel %vm555, %v1830, 0
    %v1863 = vsel %vm555, %v1832, 0
    %v1865 = vsel %vm555, %v1834, 0
    %v1867 = vsel %vm555, %v1836, 0
    %v1869 = vsel %vm555, %v1838, 0
    %v1871 = vsel %vm555, %v1840, 0
    %v1873 = vsel %vm555, %v1842, 0
    %v1875 = vsel %vm555, %v1844, 0
    %v1877 = vsel %vm555, %v1846, 0
    %v1879 = vsel %vm555, %v1848, 0
    %v1881 = vsel %vm555, %v1850, 0
    %v1883 = vsel %vm555, %v1852, 0
    %v1885 = vsel %vm555, %v1854, 0
    %v1887 = vsel %vm555, %v1856, 0
    %v1889 = vsel %vm555, %v1858, 0
    %1891 = vmatprep.subr.mxu0 0.0
    %1892 = vmatpush1.xpose.msra.mxu0 0.0
    %1893 = vmatprep.subr.mxu0 0.0
    %1894 = vmatpush1.xpose.msra.mxu0 0.0
    %1895 = vmatprep.subr.mxu0 0.0
    %1896 = vmatpush1.xpose.msra.mxu0 0.0
    %1897 = vmatprep.subr.mxu0 0.0
    %1898 = vmatpush1.xpose.msra.mxu0 0.0
    %1899 = vmatprep.subr.mxu0 0.0
    %1900 = vmatpush1.xpose.msra.mxu0 0.0
    %1901 = vmatprep.subr.mxu0 0.0
    %1902 = vmatpush1.xpose.msra.mxu0 0.0
    %1903 = vmatprep.subr.mxu0 0.0
    %1904 = vmatpush1.xpose.msra.mxu0 0.0
    %1905 = vmatprep.subr.mxu0 0.0
    %1906 = vmatpush1.xpose.msra.mxu0 0.0
    %1907 = vmatprep.subr.mxu0 0.0
    %1908 = vmatpush1.xpose.msra.mxu0 %v1889
    %1909 = vmatprep.subr.mxu0 0.0
    %1910 = vmatpush1.xpose.msra.mxu0 %v1887
    %1911 = vmatprep.subr.mxu0 0.0
    %1912 = vmatpush1.xpose.msra.mxu0 %v1885
    %1913 = vmatprep.subr.mxu0 0.0
    %1914 = vmatpush1.xpose.msra.mxu0 %v1883
    %1915 = vmatprep.subr.mxu0 0.0
    %1916 = vmatpush1.xpose.msra.mxu0 %v1881
    %1917 = vmatprep.subr.mxu0 0.0
    %1918 = vmatpush1.xpose.msra.mxu0 %v1879
    %1919 = vmatprep.subr.mxu0 0.0
    %1920 = vmatpush1.xpose.msra.mxu0 %v1877
    %1921 = vmatprep.subr.mxu0 0.0
    %1922 = vmatpush1.xpose.msra.mxu0 %v1875
    %1923 = vmatprep.subr.mxu0 0.0
    %1924 = vmatpush2.xpose.msra.mxu0 0.0
    %1925 = vmatprep.subr.mxu0 0.0
    %1926 = vmatpush2.xpose.msra.mxu0 0.0
    %1927 = vmatprep.subr.mxu0 0.0
    %1928 = vmatpush2.xpose.msra.mxu0 0.0
    %1929 = vmatprep.subr.mxu0 0.0
    %1930 = vmatpush2.xpose.msra.mxu0 0.0
    %1931 = vmatprep.subr.mxu0 0.0
    %1932 = vmatpush2.xpose.msra.mxu0 0.0
    %1933 = vmatprep.subr.mxu0 0.0
    %1934 = vmatpush2.xpose.msra.mxu0 0.0
    %1935 = vmatprep.subr.mxu0 0.0
    %1936 = vmatpush2.xpose.msra.mxu0 0.0
    %1937 = vmatprep.subr.mxu0 0.0
    %1938 = vmatpush2.xpose.msra.mxu0 0.0
    %1939 = vmatprep.subr.mxu0 0.0
    %1940 = vmatpush2.xpose.msra.mxu0 0.0
    %1941 = vmatprep.subr.mxu0 0.0
    %1942 = vmatpush2.xpose.msra.mxu0 0.0
    %1943 = vmatprep.subr.mxu0 0.0
    %1944 = vmatpush2.xpose.msra.mxu0 0.0
    %1945 = vmatprep.subr.mxu0 0.0
    %1946 = vmatpush2.xpose.msra.mxu0 0.0
    %1947 = vmatprep.subr.mxu0 0.0
    %1948 = vmatpush2.xpose.msra.mxu0 0.0
    %1949 = vmatprep.subr.mxu0 0.0
    %1950 = vmatpush2.xpose.msra.mxu0 0.0
    %1951 = vmatprep.subr.mxu0 0.0
    %1952 = vmatpush2.xpose.msra.mxu0 0.0
    %1953 = vmatprep.subr.mxu0 0.0
    %1954 = vmatpush2.xpose.msra.mxu0 0.0
    %1955 = vmatprep.mubr.f32.mxu0 0.0
    %1956 = vmatmul.mubr.f32.gmra.mxu0 %v1859
    %v1957 = vpop.f32.mrf.mxu0
    %v1958 = vadd.f32 %v547, %v1957
    %v1959 = vpop.f32.mrf.mxu0
    %1960 = vmatprep.mubr.f32.mxu0 0.0
    %1961 = vmatmul.mubr.f32.gmra.mxu0 %v1861
    %v1962 = vpop.f32.mrf.mxu0
    %v1963 = vadd.f32 %v548, %v1962
    %v1964 = vpop.f32.mrf.mxu0
    %1965 = vmatprep.mubr.f32.mxu0 0.0
    %1966 = vmatmul.mubr.f32.gmra.mxu0 %v1863
    %v1967 = vpop.f32.mrf.mxu0
    %v1968 = vadd.f32 %v549, %v1967
    %v1969 = vpop.f32.mrf.mxu0
    %1970 = vmatprep.mubr.f32.mxu0 0.0
    %1971 = vmatmul.mubr.f32.gmra.mxu0 %v1865
    %v1972 = vpop.f32.mrf.mxu0
    %v1973 = vadd.f32 %v550, %v1972
    %v1974 = vpop.f32.mrf.mxu0
    %1975 = vmatprep.mubr.f32.mxu0 0.0
    %1976 = vmatmul.mubr.f32.gmra.mxu0 %v1867
    %v1977 = vpop.f32.mrf.mxu0
    %v1978 = vadd.f32 %v551, %v1977
    %v1979 = vpop.f32.mrf.mxu0
    %1980 = vmatprep.mubr.f32.mxu0 0.0
    %1981 = vmatmul.mubr.f32.gmra.mxu0 %v1869
    %v1982 = vpop.f32.mrf.mxu0
    %v1983 = vadd.f32 %v552, %v1982
    %v1984 = vpop.f32.mrf.mxu0
    %1985 = vmatprep.mubr.f32.mxu0 0.0
    %1986 = vmatmul.mubr.f32.gmra.mxu0 %v1871
    %v1987 = vpop.f32.mrf.mxu0
    %v1988 = vadd.f32 %v553, %v1987
    %v1989 = vpop.f32.mrf.mxu0
    %1990 = vmatprep.mubr.f32.mxu0 0.0
    %1991 = vmatmul.mubr.f32.gmra.mxu0 %v1873
    %v1992 = vpop.f32.mrf.mxu0
    %v1993 = vadd.f32 %v554, %v1992
    %v1994 = vpop.f32.mrf.mxu0
    %1995 = vdwg.mxu0
    %v1996 = vsel %vm709, %v1958, -inf
    %1997 = vmax.xlane.f32.xlu0 %v1996
    %v1998 = vpop.xlane.xlu0 %1997
    %v1999 = vsel %vm709, %v1963, -inf
    %2000 = vmax.xlane.f32.xlu0 %v1999
    %v2001 = vpop.xlane.xlu0 %2000
    %v2002 = vsel %vm709, %v1968, -inf
    %2003 = vmax.xlane.f32.xlu0 %v2002
    %v2004 = vpop.xlane.xlu0 %2003
    %v2005 = vsel %vm709, %v1973, -inf
    %2006 = vmax.xlane.f32.xlu0 %v2005
    %v2007 = vpop.xlane.xlu0 %2006
    %v2008 = vsel %vm709, %v1978, -inf
    %2009 = vmax.xlane.f32.xlu0 %v2008
    %v2010 = vpop.xlane.xlu0 %2009
    %v2011 = vsel %vm709, %v1983, -inf
    %2012 = vmax.xlane.f32.xlu0 %v2011
    %v2013 = vpop.xlane.xlu0 %2012
    %v2014 = vsel %vm709, %v1988, -inf
    %2015 = vmax.xlane.f32.xlu0 %v2014
    %v2016 = vpop.xlane.xlu0 %2015
    %v2017 = vsel %vm709, %v1993, -inf
    %2018 = vmax.xlane.f32.xlu0 %v2017
    %v2019 = vpop.xlane.xlu0 %2018
    %v2020 = vsub.f32 %v1958, %v1998
    %v2021 = vsub.f32 %v1963, %v2001
    %v2022 = vsub.f32 %v1968, %v2004
    %v2023 = vsub.f32 %v1973, %v2007
    %v2024 = vsub.f32 %v1978, %v2010
    %v2025 = vsub.f32 %v1983, %v2013
    %v2026 = vsub.f32 %v1988, %v2016
    %v2027 = vsub.f32 %v1993, %v2019
    %v2028 = vmul.f32 %v2020, 1.442695
    %v2029 = vpow.pop %v2028
    %v2030 = vmul.f32 %v2021, 1.442695
    %v2031 = vpow.pop %v2030
    %v2032 = vmul.f32 %v2022, 1.442695
    %v2033 = vpow.pop %v2032
    %v2034 = vmul.f32 %v2023, 1.442695
    %v2035 = vpow.pop %v2034
    %v2036 = vmul.f32 %v2024, 1.442695
    %v2037 = vpow.pop %v2036
    %v2038 = vmul.f32 %v2025, 1.442695
    %v2039 = vpow.pop %v2038
    %v2040 = vmul.f32 %v2026, 1.442695
    %v2041 = vpow.pop %v2040
    %v2042 = vmul.f32 %v2027, 1.442695
    %v2043 = vpow.pop %v2042
    %v2044 = vsel %vm709, %v2029, 0.0
    %2045 = vadd.xlane.f32.xlu0 %v2044
    %v2046 = vpop.xlane.xlu0 %2045
    %v2047 = vsel %vm709, %v2031, 0.0
    %2048 = vadd.xlane.f32.xlu0 %v2047
    %v2049 = vpop.xlane.xlu0 %2048
    %v2050 = vsel %vm709, %v2033, 0.0
    %2051 = vadd.xlane.f32.xlu0 %v2050
    %v2052 = vpop.xlane.xlu0 %2051
    %v2053 = vsel %vm709, %v2035, 0.0
    %2054 = vadd.xlane.f32.xlu0 %v2053
    %v2055 = vpop.xlane.xlu0 %2054
    %v2056 = vsel %vm709, %v2037, 0.0
    %2057 = vadd.xlane.f32.xlu0 %v2056
    %v2058 = vpop.xlane.xlu0 %2057
    %v2059 = vsel %vm709, %v2039, 0.0
    %2060 = vadd.xlane.f32.xlu0 %v2059
    %v2061 = vpop.xlane.xlu0 %2060
    %v2062 = vsel %vm709, %v2041, 0.0
    %2063 = vadd.xlane.f32.xlu0 %v2062
    %v2064 = vpop.xlane.xlu0 %2063
    %v2065 = vsel %vm709, %v2043, 0.0
    %2066 = vadd.xlane.f32.xlu0 %v2065
    %v2067 = vpop.xlane.xlu0 %2066
    %v2068 = vrcp.pop %v2046
    %v2069 = vmul.f32 %v2029, %v2068
    %v2070 = vrcp.pop %v2049
    %v2071 = vmul.f32 %v2031, %v2070
    %v2072 = vrcp.pop %v2052
    %v2073 = vmul.f32 %v2033, %v2072
    %v2074 = vrcp.pop %v2055
    %v2075 = vmul.f32 %v2035, %v2074
    %v2076 = vrcp.pop %v2058
    %v2077 = vmul.f32 %v2037, %v2076
    %v2078 = vrcp.pop %v2061
    %v2079 = vmul.f32 %v2039, %v2078
    %v2080 = vrcp.pop %v2064
    %v2081 = vmul.f32 %v2041, %v2080
    %v2082 = vrcp.pop %v2067
    %v2083 = vmul.f32 %v2043, %v2082
    %2084 = vrot.lane.b32.xlu0 %v520, 32
    %v2085 = vpop.permute.xlu0 %2084
    %2086 = vrot.lane.b32.xlu0 %v521, 32
    %v2087 = vpop.permute.xlu0 %2086
    %2088 = vrot.lane.b32.xlu0 %v522, 32
    %v2089 = vpop.permute.xlu0 %2088
    %2090 = vrot.lane.b32.xlu0 %v523, 32
    %v2091 = vpop.permute.xlu0 %2090
    %2092 = vrot.lane.b32.xlu0 %v524, 32
    %v2093 = vpop.permute.xlu0 %2092
    %2094 = vrot.lane.b32.xlu0 %v525, 32
    %v2095 = vpop.permute.xlu0 %2094
    %2096 = vrot.lane.b32.xlu0 %v526, 32
    %v2097 = vpop.permute.xlu0 %2096
    %2098 = vrot.lane.b32.xlu0 %v527, 32
    %v2099 = vpop.permute.xlu0 %2098
    %2108 = vxpose.xlu0.b32.start [1/16] %v2085, 128
    %2109 = vxpose.xlu0.b32.cont [2/16] %v2087, 128
    %2110 = vxpose.xlu0.b32.cont [3/16] %v2089, 128
    %2111 = vxpose.xlu0.b32.cont [4/16] %v2091, 128
    %2112 = vxpose.xlu0.b32.cont [5/16] %v2093, 128
    %2113 = vxpose.xlu0.b32.cont [6/16] %v2095, 128
    %2114 = vxpose.xlu0.b32.cont [7/16] %v2097, 128
    %2115 = vxpose.xlu0.b32.cont [8/16] %v2099, 128
    %2116 = vxpose.xlu0.b32.cont [9/16] 0.0, 128
    %2117 = vxpose.xlu0.b32.cont [10/16] 0.0, 128
    %2118 = vxpose.xlu0.b32.cont [11/16] 0.0, 128
    %2119 = vxpose.xlu0.b32.cont [12/16] 0.0, 128
    %2120 = vxpose.xlu0.b32.cont [13/16] 0.0, 128
    %2121 = vxpose.xlu0.b32.cont [14/16] 0.0, 128
    %2122 = vxpose.xlu0.b32.cont [15/16] 0.0, 128
    %2123 = vxpose.xlu0.b32.end [16/16] 0.0, 128
    %v2124 = vpop.trf.xlu0
    %v2125 = vpop.trf.xlu0
    %v2126 = vpop.trf.xlu0
    %v2127 = vpop.trf.xlu0
    %v2128 = vpop.trf.xlu0
    %v2129 = vpop.trf.xlu0
    %v2130 = vpop.trf.xlu0
    %v2131 = vpop.trf.xlu0
    %v2132 = vpop.trf.xlu0
    %v2133 = vpop.trf.xlu0
    %v2134 = vpop.trf.xlu0
    %v2135 = vpop.trf.xlu0
    %v2136 = vpop.trf.xlu0
    %v2137 = vpop.trf.xlu0
    %v2138 = vpop.trf.xlu0
    %v2139 = vpop.trf.xlu0
    %v2141 = vsel %vm709, %v2124, 0
    %v2144 = vsel %vm709, %v2125, 0
    %v2147 = vsel %vm709, %v2126, 0
    %v2150 = vsel %vm709, %v2127, 0
    %v2153 = vsel %vm709, %v2069, 0
    %v2156 = vsel %vm709, %v2071, 0
    %v2159 = vsel %vm709, %v2073, 0
    %v2162 = vsel %vm709, %v2075, 0
    %v2165 = vsel %vm709, %v2077, 0
    %v2168 = vsel %vm709, %v2079, 0
    %v2171 = vsel %vm709, %v2081, 0
    %v2174 = vsel %vm709, %v2083, 0
    %2176 = vmatprep.subr.mxu0 0.0
    %2177 = vmatpush1.xpose.msra.mxu0 0.0
    %2178 = vmatprep.subr.mxu0 0.0
    %2179 = vmatpush1.xpose.msra.mxu0 0.0
    %2180 = vmatprep.subr.mxu0 0.0
    %2181 = vmatpush1.xpose.msra.mxu0 0.0
    %2182 = vmatprep.subr.mxu0 0.0
    %2183 = vmatpush1.xpose.msra.mxu0 0.0
    %2184 = vmatprep.subr.mxu0 0.0
    %2185 = vmatpush1.xpose.msra.mxu0 0.0
    %2186 = vmatprep.subr.mxu0 0.0
    %2187 = vmatpush1.xpose.msra.mxu0 0.0
    %2188 = vmatprep.subr.mxu0 0.0
    %2189 = vmatpush1.xpose.msra.mxu0 0.0
    %2190 = vmatprep.subr.mxu0 0.0
    %2191 = vmatpush1.xpose.msra.mxu0 0.0
    %2192 = vmatprep.subr.mxu0 0.0
    %2193 = vmatpush1.xpose.msra.mxu0 %v2174
    %2194 = vmatprep.subr.mxu0 0.0
    %2195 = vmatpush1.xpose.msra.mxu0 %v2171
    %2196 = vmatprep.subr.mxu0 0.0
    %2197 = vmatpush1.xpose.msra.mxu0 %v2168
    %2198 = vmatprep.subr.mxu0 0.0
    %2199 = vmatpush1.xpose.msra.mxu0 %v2165
    %2200 = vmatprep.subr.mxu0 0.0
    %2201 = vmatpush1.xpose.msra.mxu0 %v2162
    %2202 = vmatprep.subr.mxu0 0.0
    %2203 = vmatpush1.xpose.msra.mxu0 %v2159
    %2204 = vmatprep.subr.mxu0 0.0
    %2205 = vmatpush1.xpose.msra.mxu0 %v2156
    %2206 = vmatprep.subr.mxu0 0.0
    %2207 = vmatpush1.xpose.msra.mxu0 %v2153
    %2208 = vmatprep.subr.mxu0 0.0
    %2209 = vmatpush2.xpose.msra.mxu0 0.0
    %2210 = vmatprep.subr.mxu0 0.0
    %2211 = vmatpush2.xpose.msra.mxu0 0.0
    %2212 = vmatprep.subr.mxu0 0.0
    %2213 = vmatpush2.xpose.msra.mxu0 0.0
    %2214 = vmatprep.subr.mxu0 0.0
    %2215 = vmatpush2.xpose.msra.mxu0 0.0
    %2216 = vmatprep.subr.mxu0 0.0
    %2217 = vmatpush2.xpose.msra.mxu0 0.0
    %2218 = vmatprep.subr.mxu0 0.0
    %2219 = vmatpush2.xpose.msra.mxu0 0.0
    %2220 = vmatprep.subr.mxu0 0.0
    %2221 = vmatpush2.xpose.msra.mxu0 0.0
    %2222 = vmatprep.subr.mxu0 0.0
    %2223 = vmatpush2.xpose.msra.mxu0 0.0
    %2224 = vmatprep.subr.mxu0 0.0
    %2225 = vmatpush2.xpose.msra.mxu0 0.0
    %2226 = vmatprep.subr.mxu0 0.0
    %2227 = vmatpush2.xpose.msra.mxu0 0.0
    %2228 = vmatprep.subr.mxu0 0.0
    %2229 = vmatpush2.xpose.msra.mxu0 0.0
    %2230 = vmatprep.subr.mxu0 0.0
    %2231 = vmatpush2.xpose.msra.mxu0 0.0
    %2232 = vmatprep.subr.mxu0 0.0
    %2233 = vmatpush2.xpose.msra.mxu0 0.0
    %2234 = vmatprep.subr.mxu0 0.0
    %2235 = vmatpush2.xpose.msra.mxu0 0.0
    %2236 = vmatprep.subr.mxu0 0.0
    %2237 = vmatpush2.xpose.msra.mxu0 0.0
    %2238 = vmatprep.subr.mxu0 0.0
    %2239 = vmatpush2.xpose.msra.mxu0 0.0
    %2240 = vmatprep.mubr.f32.mxu0 0.0
    %2241 = vmatmul.mubr.f32.gmra.mxu0 %v2141
    %v2242 = vpop.f32.mrf.mxu0
    %v2243 = vadd.f32 0.0, %v2242
    %v2244 = vpop.f32.mrf.mxu0
    %2245 = vmatprep.mubr.f32.mxu0 0.0
    %2246 = vmatmul.mubr.f32.gmra.mxu0 %v2144
    %v2247 = vpop.f32.mrf.mxu0
    %v2248 = vadd.f32 0.0, %v2247
    %v2249 = vpop.f32.mrf.mxu0
    %2250 = vmatprep.mubr.f32.mxu0 0.0
    %2251 = vmatmul.mubr.f32.gmra.mxu0 %v2147
    %v2252 = vpop.f32.mrf.mxu0
    %v2253 = vadd.f32 0.0, %v2252
    %v2254 = vpop.f32.mrf.mxu0
    %2255 = vmatprep.mubr.f32.mxu0 0.0
    %2256 = vmatmul.mubr.f32.gmra.mxu0 %v2150
    %v2257 = vpop.f32.mrf.mxu0
    %v2258 = vadd.f32 0.0, %v2257
    %v2259 = vpop.f32.mrf.mxu0
    %2260 = vdwg.mxu0
    %v2261 = vld [vmem:[#allocation8] sm:$0xff]
    %v2262 = vld [vmem:[#allocation8 + $0x8] sm:$0xff]
    %v2263 = vld [vmem:[#allocation8 + $0x10] sm:$0xff]
    %v2264 = vld [vmem:[#allocation8 + $0x18] sm:$0xff]
    %v2265 = vld [vmem:[#allocation8 + $0x20] sm:$0xff]
    %v2266 = vld [vmem:[#allocation8 + $0x28] sm:$0xff]
    %v2267 = vld [vmem:[#allocation8 + $0x30] sm:$0xff]
    %v2268 = vld [vmem:[#allocation8 + $0x38] sm:$0xff]
    %v2269 = vld [vmem:[#allocation8 + $0x40] sm:$0xff]
    %v2270 = vld [vmem:[#allocation8 + $0x48] sm:$0xff]
    %v2271 = vld [vmem:[#allocation8 + $0x50] sm:$0xff]
    %v2272 = vld [vmem:[#allocation8 + $0x58] sm:$0xff]
    %v2273 = vld [vmem:[#allocation8 + $0x60] sm:$0xff]
    %v2274 = vld [vmem:[#allocation8 + $0x68] sm:$0xff]
    %v2275 = vld [vmem:[#allocation8 + $0x70] sm:$0xff]
    %v2276 = vld [vmem:[#allocation8 + $0x78] sm:$0xff]
    %v2278 = vsel %vm709, %v943, 0
    %v2281 = vsel %vm709, %v948, 0
    %v2284 = vsel %vm709, %v1385, 0
    %v2287 = vsel %vm709, %v1390, 0
    %v2290 = vsel %vm709, %v1819, 0
    %v2293 = vsel %vm709, %v1824, 0
    %v2296 = vsel %vm709, %v2253, 0
    %v2299 = vsel %vm709, %v2258, 0
    %2301 = vmatprep.subr.mxu0 0.0
    %2302 = vmatpush1.msra.mxu0 0.0
    %2303 = vmatprep.subr.mxu0 0.0
    %2304 = vmatpush1.msra.mxu0 0.0
    %2305 = vmatprep.subr.mxu0 0.0
    %2306 = vmatpush1.msra.mxu0 0.0
    %2307 = vmatprep.subr.mxu0 0.0
    %2308 = vmatpush1.msra.mxu0 0.0
    %2309 = vmatprep.subr.mxu0 0.0
    %2310 = vmatpush1.msra.mxu0 0.0
    %2311 = vmatprep.subr.mxu0 0.0
    %2312 = vmatpush1.msra.mxu0 0.0
    %2313 = vmatprep.subr.mxu0 0.0
    %2314 = vmatpush1.msra.mxu0 0.0
    %2315 = vmatprep.subr.mxu0 0.0
    %2316 = vmatpush1.msra.mxu0 0.0
    %2317 = vmatprep.subr.mxu0 0.0
    %2318 = vmatpush1.msra.mxu0 %v2276
    %2319 = vmatprep.subr.mxu0 0.0
    %2320 = vmatpush1.msra.mxu0 %v2275
    %2321 = vmatprep.subr.mxu0 0.0
    %2322 = vmatpush1.msra.mxu0 %v2274
    %2323 = vmatprep.subr.mxu0 0.0
    %2324 = vmatpush1.msra.mxu0 %v2273
    %2325 = vmatprep.subr.mxu0 0.0
    %2326 = vmatpush1.msra.mxu0 %v2272
    %2327 = vmatprep.subr.mxu0 0.0
    %2328 = vmatpush1.msra.mxu0 %v2271
    %2329 = vmatprep.subr.mxu0 0.0
    %2330 = vmatpush1.msra.mxu0 %v2270
    %2331 = vmatprep.subr.mxu0 0.0
    %2332 = vmatpush1.msra.mxu0 %v2269
    %2333 = vmatprep.subr.mxu0 0.0
    %2334 = vmatpush2.msra.mxu0 0.0
    %2335 = vmatprep.subr.mxu0 0.0
    %2336 = vmatpush2.msra.mxu0 0.0
    %2337 = vmatprep.subr.mxu0 0.0
    %2338 = vmatpush2.msra.mxu0 0.0
    %2339 = vmatprep.subr.mxu0 0.0
    %2340 = vmatpush2.msra.mxu0 0.0
    %2341 = vmatprep.subr.mxu0 0.0
    %2342 = vmatpush2.msra.mxu0 0.0
    %2343 = vmatprep.subr.mxu0 0.0
    %2344 = vmatpush2.msra.mxu0 0.0
    %2345 = vmatprep.subr.mxu0 0.0
    %2346 = vmatpush2.msra.mxu0 0.0
    %2347 = vmatprep.subr.mxu0 0.0
    %2348 = vmatpush2.msra.mxu0 0.0
    %2349 = vmatprep.subr.mxu0 0.0
    %2350 = vmatpush2.msra.mxu0 0.0
    %2351 = vmatprep.subr.mxu0 0.0
    %2352 = vmatpush2.msra.mxu0 0.0
    %2353 = vmatprep.subr.mxu0 0.0
    %2354 = vmatpush2.msra.mxu0 0.0
    %2355 = vmatprep.subr.mxu0 0.0
    %2356 = vmatpush2.msra.mxu0 0.0
    %2357 = vmatprep.subr.mxu0 0.0
    %2358 = vmatpush2.msra.mxu0 0.0
    %2359 = vmatprep.subr.mxu0 0.0
    %2360 = vmatpush2.msra.mxu0 0.0
    %2361 = vmatprep.subr.mxu0 0.0
    %2362 = vmatpush2.msra.mxu0 0.0
    %2363 = vmatprep.subr.mxu0 0.0
    %2364 = vmatpush2.msra.mxu0 0.0
    %2365 = vmatprep.mubr.f32.mxu0 0.0
    %2366 = vmatmul.mubr.f32.gmra.mxu0 %v2278
    %v2367 = vpop.f32.mrf.mxu0
    %v2368 = vadd.f32 0.0, %v2367
    %v2369 = vpop.f32.mrf.mxu0
    %2370 = vmatprep.mubr.f32.mxu0 0.0
    %2371 = vmatmul.mubr.f32.gmra.mxu0 %v2281
    %v2372 = vpop.f32.mrf.mxu0
    %v2373 = vadd.f32 0.0, %v2372
    %v2374 = vpop.f32.mrf.mxu0
    %2375 = vmatprep.mubr.f32.mxu0 0.0
    %2376 = vmatmul.mubr.f32.gmra.mxu0 %v2284
    %v2377 = vpop.f32.mrf.mxu0
    %v2378 = vadd.f32 0.0, %v2377
    %v2379 = vpop.f32.mrf.mxu0
    %2380 = vmatprep.mubr.f32.mxu0 0.0
    %2381 = vmatmul.mubr.f32.gmra.mxu0 %v2287
    %v2382 = vpop.f32.mrf.mxu0
    %v2383 = vadd.f32 0.0, %v2382
    %v2384 = vpop.f32.mrf.mxu0
    %2385 = vmatprep.mubr.f32.mxu0 0.0
    %2386 = vmatmul.mubr.f32.gmra.mxu0 %v2290
    %v2387 = vpop.f32.mrf.mxu0
    %v2388 = vadd.f32 0.0, %v2387
    %v2389 = vpop.f32.mrf.mxu0
    %2390 = vmatprep.mubr.f32.mxu0 0.0
    %2391 = vmatmul.mubr.f32.gmra.mxu0 %v2293
    %v2392 = vpop.f32.mrf.mxu0
    %v2393 = vadd.f32 0.0, %v2392
    %v2394 = vpop.f32.mrf.mxu0
    %2395 = vmatprep.mubr.f32.mxu0 0.0
    %2396 = vmatmul.mubr.f32.gmra.mxu0 %v2296
    %v2397 = vpop.f32.mrf.mxu0
    %v2398 = vadd.f32 0.0, %v2397
    %v2399 = vpop.f32.mrf.mxu0
    %2400 = vmatprep.mubr.f32.mxu0 0.0
    %2401 = vmatmul.mubr.f32.gmra.mxu0 %v2299
    %v2402 = vpop.f32.mrf.mxu0
    %v2403 = vadd.f32 0.0, %v2402
    %v2404 = vpop.f32.mrf.mxu0
    %2405 = vdwg.mxu0
    %v2407 = vsel %vm709, %v933, 0
    %v2410 = vsel %vm709, %v938, 0
    %v2413 = vsel %vm709, %v1375, 0
    %v2416 = vsel %vm709, %v1380, 0
    %v2419 = vsel %vm709, %v1809, 0
    %v2422 = vsel %vm709, %v1814, 0
    %v2425 = vsel %vm709, %v2243, 0
    %v2428 = vsel %vm709, %v2248, 0
    %2430 = vmatprep.subr.mxu0 0.0
    %2431 = vmatpush1.msra.mxu0 0.0
    %2432 = vmatprep.subr.mxu0 0.0
    %2433 = vmatpush1.msra.mxu0 0.0
    %2434 = vmatprep.subr.mxu0 0.0
    %2435 = vmatpush1.msra.mxu0 0.0
    %2436 = vmatprep.subr.mxu0 0.0
    %2437 = vmatpush1.msra.mxu0 0.0
    %2438 = vmatprep.subr.mxu0 0.0
    %2439 = vmatpush1.msra.mxu0 0.0
    %2440 = vmatprep.subr.mxu0 0.0
    %2441 = vmatpush1.msra.mxu0 0.0
    %2442 = vmatprep.subr.mxu0 0.0
    %2443 = vmatpush1.msra.mxu0 0.0
    %2444 = vmatprep.subr.mxu0 0.0
    %2445 = vmatpush1.msra.mxu0 0.0
    %2446 = vmatprep.subr.mxu0 0.0
    %2447 = vmatpush1.msra.mxu0 %v2268
    %2448 = vmatprep.subr.mxu0 0.0
    %2449 = vmatpush1.msra.mxu0 %v2267
    %2450 = vmatprep.subr.mxu0 0.0
    %2451 = vmatpush1.msra.mxu0 %v2266
    %2452 = vmatprep.subr.mxu0 0.0
    %2453 = vmatpush1.msra.mxu0 %v2265
    %2454 = vmatprep.subr.mxu0 0.0
    %2455 = vmatpush1.msra.mxu0 %v2264
    %2456 = vmatprep.subr.mxu0 0.0
    %2457 = vmatpush1.msra.mxu0 %v2263
    %2458 = vmatprep.subr.mxu0 0.0
    %2459 = vmatpush1.msra.mxu0 %v2262
    %2460 = vmatprep.subr.mxu0 0.0
    %2461 = vmatpush1.msra.mxu0 %v2261
    %2462 = vmatprep.subr.mxu0 0.0
    %2463 = vmatpush2.msra.mxu0 0.0
    %2464 = vmatprep.subr.mxu0 0.0
    %2465 = vmatpush2.msra.mxu0 0.0
    %2466 = vmatprep.subr.mxu0 0.0
    %2467 = vmatpush2.msra.mxu0 0.0
    %2468 = vmatprep.subr.mxu0 0.0
    %2469 = vmatpush2.msra.mxu0 0.0
    %2470 = vmatprep.subr.mxu0 0.0
    %2471 = vmatpush2.msra.mxu0 0.0
    %2472 = vmatprep.subr.mxu0 0.0
    %2473 = vmatpush2.msra.mxu0 0.0
    %2474 = vmatprep.subr.mxu0 0.0
    %2475 = vmatpush2.msra.mxu0 0.0
    %2476 = vmatprep.subr.mxu0 0.0
    %2477 = vmatpush2.msra.mxu0 0.0
    %2478 = vmatprep.subr.mxu0 0.0
    %2479 = vmatpush2.msra.mxu0 0.0
    %2480 = vmatprep.subr.mxu0 0.0
    %2481 = vmatpush2.msra.mxu0 0.0
    %2482 = vmatprep.subr.mxu0 0.0
    %2483 = vmatpush2.msra.mxu0 0.0
    %2484 = vmatprep.subr.mxu0 0.0
    %2485 = vmatpush2.msra.mxu0 0.0
    %2486 = vmatprep.subr.mxu0 0.0
    %2487 = vmatpush2.msra.mxu0 0.0
    %2488 = vmatprep.subr.mxu0 0.0
    %2489 = vmatpush2.msra.mxu0 0.0
    %2490 = vmatprep.subr.mxu0 0.0
    %2491 = vmatpush2.msra.mxu0 0.0
    %2492 = vmatprep.subr.mxu0 0.0
    %2493 = vmatpush2.msra.mxu0 0.0
    %2494 = vmatprep.mubr.f32.mxu0 0.0
    %2495 = vmatmul.mubr.f32.gmra.mxu0 %v2407
    %v2496 = vpop.f32.mrf.mxu0
    %v2497 = vadd.f32 %v2368, %v2496
    %v2498 = vpop.f32.mrf.mxu0
    %2499 = vmatprep.mubr.f32.mxu0 0.0
    %2500 = vmatmul.mubr.f32.gmra.mxu0 %v2410
    %v2501 = vpop.f32.mrf.mxu0
    %v2502 = vadd.f32 %v2373, %v2501
    %v2503 = vpop.f32.mrf.mxu0
    %2504 = vmatprep.mubr.f32.mxu0 0.0
    %2505 = vmatmul.mubr.f32.gmra.mxu0 %v2413
    %v2506 = vpop.f32.mrf.mxu0
    %v2507 = vadd.f32 %v2378, %v2506
    %v2508 = vpop.f32.mrf.mxu0
    %2509 = vmatprep.mubr.f32.mxu0 0.0
    %2510 = vmatmul.mubr.f32.gmra.mxu0 %v2416
    %v2511 = vpop.f32.mrf.mxu0
    %v2512 = vadd.f32 %v2383, %v2511
    %v2513 = vpop.f32.mrf.mxu0
    %2514 = vmatprep.mubr.f32.mxu0 0.0
    %2515 = vmatmul.mubr.f32.gmra.mxu0 %v2419
    %v2516 = vpop.f32.mrf.mxu0
    %v2517 = vadd.f32 %v2388, %v2516
    %v2518 = vpop.f32.mrf.mxu0
    %2519 = vmatprep.mubr.f32.mxu0 0.0
    %2520 = vmatmul.mubr.f32.gmra.mxu0 %v2422
    %v2521 = vpop.f32.mrf.mxu0
    %v2522 = vadd.f32 %v2393, %v2521
    %v2523 = vpop.f32.mrf.mxu0
    %2524 = vmatprep.mubr.f32.mxu0 0.0
    %2525 = vmatmul.mubr.f32.gmra.mxu0 %v2425
    %v2526 = vpop.f32.mrf.mxu0
    %v2527 = vadd.f32 %v2398, %v2526
    %v2528 = vpop.f32.mrf.mxu0
    %2529 = vmatprep.mubr.f32.mxu0 0.0
    %2530 = vmatmul.mubr.f32.gmra.mxu0 %v2428
    %v2531 = vpop.f32.mrf.mxu0
    %v2532 = vadd.f32 %v2403, %v2531
    %v2533 = vpop.f32.mrf.mxu0
    %2534 = vdwg.mxu0
    %v2535 = vlaneseq
    %v2536 = vshrl.u32 %v2535, 7
    %v2537 = vsub.s32 4, %v2536
    %v2538 = vrot.slane %v112, %v2537
    %v2539 = vadd.f32 %v2497, %v2538
    %v2540 = vadd.f32 %v2502, %v2538
    %v2541 = vadd.f32 %v2507, %v2538
    %v2542 = vadd.f32 %v2512, %v2538
    %v2543 = vadd.f32 %v2517, %v2538
    %v2544 = vadd.f32 %v2522, %v2538
    %v2545 = vadd.f32 %v2527, %v2538
    %v2546 = vadd.f32 %v2532, %v2538
    %v2547 = vadd.f32 %v104, %v2539
    %v2548 = vadd.f32 %v105, %v2540
    %v2549 = vadd.f32 %v106, %v2541
    %v2550 = vadd.f32 %v107, %v2542
    %v2551 = vadd.f32 %v108, %v2543
    %v2552 = vadd.f32 %v109, %v2544
    %v2553 = vadd.f32 %v110, %v2545
    %v2554 = vadd.f32 %v111, %v2546
    %2555 = vadd.xlane.f32.xlu0 %v2547
    %v2556 = vpop.xlane.xlu0 %2555
    %2557 = vadd.xlane.f32.xlu0 %v2548
    %v2558 = vpop.xlane.xlu0 %2557
    %2559 = vadd.xlane.f32.xlu0 %v2549
    %v2560 = vpop.xlane.xlu0 %2559
    %2561 = vadd.xlane.f32.xlu0 %v2550
    %v2562 = vpop.xlane.xlu0 %2561
    %2563 = vadd.xlane.f32.xlu0 %v2551
    %v2564 = vpop.xlane.xlu0 %2563
    %2565 = vadd.xlane.f32.xlu0 %v2552
    %v2566 = vpop.xlane.xlu0 %2565
    %2567 = vadd.xlane.f32.xlu0 %v2553
    %v2568 = vpop.xlane.xlu0 %2567
    %2569 = vadd.xlane.f32.xlu0 %v2554
    %v2570 = vpop.xlane.xlu0 %2569
    %v2571 = vmul.f32 %v2556, %v129
    %v2572 = vmul.f32 %v2558, %v129
    %v2573 = vmul.f32 %v2560, %v129
    %v2574 = vmul.f32 %v2562, %v129
    %v2575 = vmul.f32 %v2564, %v129
    %v2576 = vmul.f32 %v2566, %v129
    %v2577 = vmul.f32 %v2568, %v129
    %v2578 = vmul.f32 %v2570, %v129
    %v2579 = vsub.f32 %v2547, %v2571
    %v2580 = vsub.f32 %v2548, %v2572
    %v2581 = vsub.f32 %v2549, %v2573
    %v2582 = vsub.f32 %v2550, %v2574
    %v2583 = vsub.f32 %v2551, %v2575
    %v2584 = vsub.f32 %v2552, %v2576
    %v2585 = vsub.f32 %v2553, %v2577
    %v2586 = vsub.f32 %v2554, %v2578
    %v2587 = vmul.f32 %v2579, %v2579
    %v2588 = vmul.f32 %v2580, %v2580
    %v2589 = vmul.f32 %v2581, %v2581
    %v2590 = vmul.f32 %v2582, %v2582
    %v2591 = vmul.f32 %v2583, %v2583
    %v2592 = vmul.f32 %v2584, %v2584
    %v2593 = vmul.f32 %v2585, %v2585
    %v2594 = vmul.f32 %v2586, %v2586
    %2595 = vadd.xlane.f32.xlu0 %v2587
    %v2596 = vpop.xlane.xlu0 %2595
    %2597 = vadd.xlane.f32.xlu0 %v2588
    %v2598 = vpop.xlane.xlu0 %2597
    %2599 = vadd.xlane.f32.xlu0 %v2589
    %v2600 = vpop.xlane.xlu0 %2599
    %2601 = vadd.xlane.f32.xlu0 %v2590
    %v2602 = vpop.xlane.xlu0 %2601
    %2603 = vadd.xlane.f32.xlu0 %v2591
    %v2604 = vpop.xlane.xlu0 %2603
    %2605 = vadd.xlane.f32.xlu0 %v2592
    %v2606 = vpop.xlane.xlu0 %2605
    %2607 = vadd.xlane.f32.xlu0 %v2593
    %v2608 = vpop.xlane.xlu0 %2607
    %2609 = vadd.xlane.f32.xlu0 %v2594
    %v2610 = vpop.xlane.xlu0 %2609
    %v2611 = vmul.f32 %v2596, %v129
    %v2612 = vmul.f32 %v2598, %v129
    %v2613 = vmul.f32 %v2600, %v129
    %v2614 = vmul.f32 %v2602, %v129
    %v2615 = vmul.f32 %v2604, %v129
    %v2616 = vmul.f32 %v2606, %v129
    %v2617 = vmul.f32 %v2608, %v129
    %v2618 = vmul.f32 %v2610, %v129
    %v2619 = vadd.f32 %v2611, 1e-05
    %v2620 = vadd.f32 %v2612, 1e-05
    %v2621 = vadd.f32 %v2613, 1e-05
    %v2622 = vadd.f32 %v2614, 1e-05
    %v2623 = vadd.f32 %v2615, 1e-05
    %v2624 = vadd.f32 %v2616, 1e-05
    %v2625 = vadd.f32 %v2617, 1e-05
    %v2626 = vadd.f32 %v2618, 1e-05
    %v2627 = vrsqrt.pop %v2619
    %v2628 = vrsqrt.pop %v2620
    %v2629 = vrsqrt.pop %v2621
    %v2630 = vrsqrt.pop %v2622
    %v2631 = vrsqrt.pop %v2623
    %v2632 = vrsqrt.pop %v2624
    %v2633 = vrsqrt.pop %v2625
    %v2634 = vrsqrt.pop %v2626
    %v2635 = vmul.f32 %v2579, %v2627
    %v2636 = vmul.f32 %v2580, %v2628
    %v2637 = vmul.f32 %v2581, %v2629
    %v2638 = vmul.f32 %v2582, %v2630
    %v2639 = vmul.f32 %v2583, %v2631
    %v2640 = vmul.f32 %v2584, %v2632
    %v2641 = vmul.f32 %v2585, %v2633
    %v2642 = vmul.f32 %v2586, %v2634
    %v2643 = vlaneseq
    %v2644 = vshrl.u32 %v2643, 7
    %v2645 = vsub.s32 2, %v2644
    %v2646 = vrot.slane %v112, %v2645
    %v2647 = vmul.f32 %v2635, %v2646
    %v2648 = vmul.f32 %v2636, %v2646
    %v2649 = vmul.f32 %v2637, %v2646
    %v2650 = vmul.f32 %v2638, %v2646
    %v2651 = vmul.f32 %v2639, %v2646
    %v2652 = vmul.f32 %v2640, %v2646
    %v2653 = vmul.f32 %v2641, %v2646
    %v2654 = vmul.f32 %v2642, %v2646
    %v2655 = vlaneseq
    %v2656 = vshrl.u32 %v2655, 7
    %v2657 = vsub.s32 3, %v2656
    %v2658 = vrot.slane %v112, %v2657
    %v2659 = vadd.f32 %v2647, %v2658
    %v2660 = vadd.f32 %v2648, %v2658
    %v2661 = vadd.f32 %v2649, %v2658
    %v2662 = vadd.f32 %v2650, %v2658
    %v2663 = vadd.f32 %v2651, %v2658
    %v2664 = vadd.f32 %v2652, %v2658
    %v2665 = vadd.f32 %v2653, %v2658
    %v2666 = vadd.f32 %v2654, %v2658
    %v2667 = vld [vmem:[#allocation10] sm:$0xff]
    %v2668 = vld [vmem:[#allocation10 + $0x30] sm:$0xff]
    %v2669 = vld [vmem:[#allocation10 + $0x60] sm:$0xff]
    %v2670 = vld [vmem:[#allocation10 + $0x90] sm:$0xff]
    %v2671 = vld [vmem:[#allocation10 + $0xc0] sm:$0xff]
    %v2672 = vld [vmem:[#allocation10 + $0xf0] sm:$0xff]
    %v2673 = vld [vmem:[#allocation10 + $0x120] sm:$0xff]
    %v2674 = vld [vmem:[#allocation10 + $0x150] sm:$0xff]
    %v2675 = vld [vmem:[#allocation10 + $0x180] sm:$0xff]
    %v2676 = vld [vmem:[#allocation10 + $0x1b0] sm:$0xff]
    %v2677 = vld [vmem:[#allocation10 + $0x1e0] sm:$0xff]
    %v2678 = vld [vmem:[#allocation10 + $0x210] sm:$0xff]
    %v2679 = vld [vmem:[#allocation10 + $0x240] sm:$0xff]
    %v2680 = vld [vmem:[#allocation10 + $0x270] sm:$0xff]
    %v2681 = vld [vmem:[#allocation10 + $0x2a0] sm:$0xff]
    %v2682 = vld [vmem:[#allocation10 + $0x2d0] sm:$0xff]
    %2683 = vmatprep.subr.mxu0 0.0
    %2684 = vmatpush1.msra.mxu0 %v2682
    %2685 = vmatprep.subr.mxu0 0.0
    %2686 = vmatpush1.msra.mxu0 %v2681
    %2687 = vmatprep.subr.mxu0 0.0
    %2688 = vmatpush1.msra.mxu0 %v2680
    %2689 = vmatprep.subr.mxu0 0.0
    %2690 = vmatpush1.msra.mxu0 %v2679
    %2691 = vmatprep.subr.mxu0 0.0
    %2692 = vmatpush1.msra.mxu0 %v2678
    %2693 = vmatprep.subr.mxu0 0.0
    %2694 = vmatpush1.msra.mxu0 %v2677
    %2695 = vmatprep.subr.mxu0 0.0
    %2696 = vmatpush1.msra.mxu0 %v2676
    %2697 = vmatprep.subr.mxu0 0.0
    %2698 = vmatpush1.msra.mxu0 %v2675
    %2699 = vmatprep.subr.mxu0 0.0
    %2700 = vmatpush1.msra.mxu0 %v2674
    %2701 = vmatprep.subr.mxu0 0.0
    %2702 = vmatpush1.msra.mxu0 %v2673
    %2703 = vmatprep.subr.mxu0 0.0
    %2704 = vmatpush1.msra.mxu0 %v2672
    %2705 = vmatprep.subr.mxu0 0.0
    %2706 = vmatpush1.msra.mxu0 %v2671
    %2707 = vmatprep.subr.mxu0 0.0
    %2708 = vmatpush1.msra.mxu0 %v2670
    %2709 = vmatprep.subr.mxu0 0.0
    %2710 = vmatpush1.msra.mxu0 %v2669
    %2711 = vmatprep.subr.mxu0 0.0
    %2712 = vmatpush1.msra.mxu0 %v2668
    %2713 = vmatprep.subr.mxu0 0.0
    %2714 = vmatpush1.msra.mxu0 %v2667
    %2715 = vmatprep.subr.mxu0 0.0
    %2716 = vmatpush2.msra.mxu0 0.0
    %2717 = vmatprep.subr.mxu0 0.0
    %2718 = vmatpush2.msra.mxu0 0.0
    %2719 = vmatprep.subr.mxu0 0.0
    %2720 = vmatpush2.msra.mxu0 0.0
    %2721 = vmatprep.subr.mxu0 0.0
    %2722 = vmatpush2.msra.mxu0 0.0
    %2723 = vmatprep.subr.mxu0 0.0
    %2724 = vmatpush2.msra.mxu0 0.0
    %2725 = vmatprep.subr.mxu0 0.0
    %2726 = vmatpush2.msra.mxu0 0.0
    %2727 = vmatprep.subr.mxu0 0.0
    %2728 = vmatpush2.msra.mxu0 0.0
    %2729 = vmatprep.subr.mxu0 0.0
    %2730 = vmatpush2.msra.mxu0 0.0
    %2731 = vmatprep.subr.mxu0 0.0
    %2732 = vmatpush2.msra.mxu0 0.0
    %2733 = vmatprep.subr.mxu0 0.0
    %2734 = vmatpush2.msra.mxu0 0.0
    %2735 = vmatprep.subr.mxu0 0.0
    %2736 = vmatpush2.msra.mxu0 0.0
    %2737 = vmatprep.subr.mxu0 0.0
    %2738 = vmatpush2.msra.mxu0 0.0
    %2739 = vmatprep.subr.mxu0 0.0
    %2740 = vmatpush2.msra.mxu0 0.0
    %2741 = vmatprep.subr.mxu0 0.0
    %2742 = vmatpush2.msra.mxu0 0.0
    %2743 = vmatprep.subr.mxu0 0.0
    %2744 = vmatpush2.msra.mxu0 0.0
    %2745 = vmatprep.subr.mxu0 0.0
    %2746 = vmatpush2.msra.mxu0 0.0
    %2747 = vmatprep.mubr.f32.mxu0 0.0
    %2748 = vmatmul.mubr.f32.gmra.mxu0 %v2659
    %v2749 = vpop.f32.mrf.mxu0
    %v2750 = vadd.f32 0.0, %v2749
    %v2751 = vpop.f32.mrf.mxu0
    %2752 = vmatprep.mubr.f32.mxu0 0.0
    %2753 = vmatmul.mubr.f32.gmra.mxu0 %v2660
    %v2754 = vpop.f32.mrf.mxu0
    %v2755 = vadd.f32 0.0, %v2754
    %v2756 = vpop.f32.mrf.mxu0
    %2757 = vmatprep.mubr.f32.mxu0 0.0
    %2758 = vmatmul.mubr.f32.gmra.mxu0 %v2661
    %v2759 = vpop.f32.mrf.mxu0
    %v2760 = vadd.f32 0.0, %v2759
    %v2761 = vpop.f32.mrf.mxu0
    %2762 = vmatprep.mubr.f32.mxu0 0.0
    %2763 = vmatmul.mubr.f32.gmra.mxu0 %v2662
    %v2764 = vpop.f32.mrf.mxu0
    %v2765 = vadd.f32 0.0, %v2764
    %v2766 = vpop.f32.mrf.mxu0
    %2767 = vmatprep.mubr.f32.mxu0 0.0
    %2768 = vmatmul.mubr.f32.gmra.mxu0 %v2663
    %v2769 = vpop.f32.mrf.mxu0
    %v2770 = vadd.f32 0.0, %v2769
    %v2771 = vpop.f32.mrf.mxu0
    %2772 = vmatprep.mubr.f32.mxu0 0.0
    %2773 = vmatmul.mubr.f32.gmra.mxu0 %v2664
    %v2774 = vpop.f32.mrf.mxu0
    %v2775 = vadd.f32 0.0, %v2774
    %v2776 = vpop.f32.mrf.mxu0
    %2777 = vmatprep.mubr.f32.mxu0 0.0
    %2778 = vmatmul.mubr.f32.gmra.mxu0 %v2665
    %v2779 = vpop.f32.mrf.mxu0
    %v2780 = vadd.f32 0.0, %v2779
    %v2781 = vpop.f32.mrf.mxu0
    %2782 = vmatprep.mubr.f32.mxu0 0.0
    %2783 = vmatmul.mubr.f32.gmra.mxu0 %v2666
    %v2784 = vpop.f32.mrf.mxu0
    %v2785 = vadd.f32 0.0, %v2784
    %v2786 = vpop.f32.mrf.mxu0
    %2787 = vdwg.mxu0
    %v2788 = vld [vmem:[#allocation10 + $0x18] sm:$0xff]
    %v2789 = vld [vmem:[#allocation10 + $0x48] sm:$0xff]
    %v2790 = vld [vmem:[#allocation10 + $0x78] sm:$0xff]
    %v2791 = vld [vmem:[#allocation10 + $0xa8] sm:$0xff]
    %v2792 = vld [vmem:[#allocation10 + $0xd8] sm:$0xff]
    %v2793 = vld [vmem:[#allocation10 + $0x108] sm:$0xff]
    %v2794 = vld [vmem:[#allocation10 + $0x138] sm:$0xff]
    %v2795 = vld [vmem:[#allocation10 + $0x168] sm:$0xff]
    %v2796 = vld [vmem:[#allocation10 + $0x198] sm:$0xff]
    %v2797 = vld [vmem:[#allocation10 + $0x1c8] sm:$0xff]
    %v2798 = vld [vmem:[#allocation10 + $0x1f8] sm:$0xff]
    %v2799 = vld [vmem:[#allocation10 + $0x228] sm:$0xff]
    %v2800 = vld [vmem:[#allocation10 + $0x258] sm:$0xff]
    %v2801 = vld [vmem:[#allocation10 + $0x288] sm:$0xff]
    %v2802 = vld [vmem:[#allocation10 + $0x2b8] sm:$0xff]
    %v2803 = vld [vmem:[#allocation10 + $0x2e8] sm:$0xff]
    %2804 = vmatprep.subr.mxu0 0.0
    %2805 = vmatpush1.msra.mxu0 %v2803
    %2806 = vmatprep.subr.mxu0 0.0
    %2807 = vmatpush1.msra.mxu0 %v2802
    %2808 = vmatprep.subr.mxu0 0.0
    %2809 = vmatpush1.msra.mxu0 %v2801
    %2810 = vmatprep.subr.mxu0 0.0
    %2811 = vmatpush1.msra.mxu0 %v2800
    %2812 = vmatprep.subr.mxu0 0.0
    %2813 = vmatpush1.msra.mxu0 %v2799
    %2814 = vmatprep.subr.mxu0 0.0
    %2815 = vmatpush1.msra.mxu0 %v2798
    %2816 = vmatprep.subr.mxu0 0.0
    %2817 = vmatpush1.msra.mxu0 %v2797
    %2818 = vmatprep.subr.mxu0 0.0
    %2819 = vmatpush1.msra.mxu0 %v2796
    %2820 = vmatprep.subr.mxu0 0.0
    %2821 = vmatpush1.msra.mxu0 %v2795
    %2822 = vmatprep.subr.mxu0 0.0
    %2823 = vmatpush1.msra.mxu0 %v2794
    %2824 = vmatprep.subr.mxu0 0.0
    %2825 = vmatpush1.msra.mxu0 %v2793
    %2826 = vmatprep.subr.mxu0 0.0
    %2827 = vmatpush1.msra.mxu0 %v2792
    %2828 = vmatprep.subr.mxu0 0.0
    %2829 = vmatpush1.msra.mxu0 %v2791
    %2830 = vmatprep.subr.mxu0 0.0
    %2831 = vmatpush1.msra.mxu0 %v2790
    %2832 = vmatprep.subr.mxu0 0.0
    %2833 = vmatpush1.msra.mxu0 %v2789
    %2834 = vmatprep.subr.mxu0 0.0
    %2835 = vmatpush1.msra.mxu0 %v2788
    %2836 = vmatprep.subr.mxu0 0.0
    %2837 = vmatpush2.msra.mxu0 0.0
    %2838 = vmatprep.subr.mxu0 0.0
    %2839 = vmatpush2.msra.mxu0 0.0
    %2840 = vmatprep.subr.mxu0 0.0
    %2841 = vmatpush2.msra.mxu0 0.0
    %2842 = vmatprep.subr.mxu0 0.0
    %2843 = vmatpush2.msra.mxu0 0.0
    %2844 = vmatprep.subr.mxu0 0.0
    %2845 = vmatpush2.msra.mxu0 0.0
    %2846 = vmatprep.subr.mxu0 0.0
    %2847 = vmatpush2.msra.mxu0 0.0
    %2848 = vmatprep.subr.mxu0 0.0
    %2849 = vmatpush2.msra.mxu0 0.0
    %2850 = vmatprep.subr.mxu0 0.0
    %2851 = vmatpush2.msra.mxu0 0.0
    %2852 = vmatprep.subr.mxu0 0.0
    %2853 = vmatpush2.msra.mxu0 0.0
    %2854 = vmatprep.subr.mxu0 0.0
    %2855 = vmatpush2.msra.mxu0 0.0
    %2856 = vmatprep.subr.mxu0 0.0
    %2857 = vmatpush2.msra.mxu0 0.0
    %2858 = vmatprep.subr.mxu0 0.0
    %2859 = vmatpush2.msra.mxu0 0.0
    %2860 = vmatprep.subr.mxu0 0.0
    %2861 = vmatpush2.msra.mxu0 0.0
    %2862 = vmatprep.subr.mxu0 0.0
    %2863 = vmatpush2.msra.mxu0 0.0
    %2864 = vmatprep.subr.mxu0 0.0
    %2865 = vmatpush2.msra.mxu0 0.0
    %2866 = vmatprep.subr.mxu0 0.0
    %2867 = vmatpush2.msra.mxu0 0.0
    %2868 = vmatprep.mubr.f32.mxu0 0.0
    %2869 = vmatmul.mubr.f32.gmra.mxu0 %v2659
    %v2870 = vpop.f32.mrf.mxu0
    %v2871 = vadd.f32 0.0, %v2870
    %v2872 = vpop.f32.mrf.mxu0
    %2873 = vmatprep.mubr.f32.mxu0 0.0
    %2874 = vmatmul.mubr.f32.gmra.mxu0 %v2660
    %v2875 = vpop.f32.mrf.mxu0
    %v2876 = vadd.f32 0.0, %v2875
    %v2877 = vpop.f32.mrf.mxu0
    %2878 = vmatprep.mubr.f32.mxu0 0.0
    %2879 = vmatmul.mubr.f32.gmra.mxu0 %v2661
    %v2880 = vpop.f32.mrf.mxu0
    %v2881 = vadd.f32 0.0, %v2880
    %v2882 = vpop.f32.mrf.mxu0
    %2883 = vmatprep.mubr.f32.mxu0 0.0
    %2884 = vmatmul.mubr.f32.gmra.mxu0 %v2662
    %v2885 = vpop.f32.mrf.mxu0
    %v2886 = vadd.f32 0.0, %v2885
    %v2887 = vpop.f32.mrf.mxu0
    %2888 = vmatprep.mubr.f32.mxu0 0.0
    %2889 = vmatmul.mubr.f32.gmra.mxu0 %v2663
    %v2890 = vpop.f32.mrf.mxu0
    %v2891 = vadd.f32 0.0, %v2890
    %v2892 = vpop.f32.mrf.mxu0
    %2893 = vmatprep.mubr.f32.mxu0 0.0
    %2894 = vmatmul.mubr.f32.gmra.mxu0 %v2664
    %v2895 = vpop.f32.mrf.mxu0
    %v2896 = vadd.f32 0.0, %v2895
    %v2897 = vpop.f32.mrf.mxu0
    %2898 = vmatprep.mubr.f32.mxu0 0.0
    %2899 = vmatmul.mubr.f32.gmra.mxu0 %v2665
    %v2900 = vpop.f32.mrf.mxu0
    %v2901 = vadd.f32 0.0, %v2900
    %v2902 = vpop.f32.mrf.mxu0
    %2903 = vmatprep.mubr.f32.mxu0 0.0
    %2904 = vmatmul.mubr.f32.gmra.mxu0 %v2666
    %v2905 = vpop.f32.mrf.mxu0
    %v2906 = vadd.f32 0.0, %v2905
    %v2907 = vpop.f32.mrf.mxu0
    %2908 = vdwg.mxu0
    %v2909 = vxor.u32 %v2750, 2147483648
    %v2910 = vxor.u32 %v2755, 2147483648
    %v2911 = vxor.u32 %v2760, 2147483648
    %v2912 = vxor.u32 %v2765, 2147483648
    %v2913 = vxor.u32 %v2770, 2147483648
    %v2914 = vxor.u32 %v2775, 2147483648
    %v2915 = vxor.u32 %v2780, 2147483648
    %v2916 = vxor.u32 %v2785, 2147483648
    %v2917 = vmul.f32 %v2909, 1.442695
    %v2918 = vpow.pop %v2917
    %v2919 = vmul.f32 %v2910, 1.442695
    %v2920 = vpow.pop %v2919
    %v2921 = vmul.f32 %v2911, 1.442695
    %v2922 = vpow.pop %v2921
    %v2923 = vmul.f32 %v2912, 1.442695
    %v2924 = vpow.pop %v2923
    %v2925 = vmul.f32 %v2913, 1.442695
    %v2926 = vpow.pop %v2925
    %v2927 = vmul.f32 %v2914, 1.442695
    %v2928 = vpow.pop %v2927
    %v2929 = vmul.f32 %v2915, 1.442695
    %v2930 = vpow.pop %v2929
    %v2931 = vmul.f32 %v2916, 1.442695
    %v2932 = vpow.pop %v2931
    %v2933 = vadd.f32 %v2918, 1.0
    %v2934 = vadd.f32 %v2920, 1.0
    %v2935 = vadd.f32 %v2922, 1.0
    %v2936 = vadd.f32 %v2924, 1.0
    %v2937 = vadd.f32 %v2926, 1.0
    %v2938 = vadd.f32 %v2928, 1.0
    %v2939 = vadd.f32 %v2930, 1.0
    %v2940 = vadd.f32 %v2932, 1.0
    %v2941 = vrcp.pop %v2933
    %v2942 = vmul.f32 1.0, %v2941
    %v2943 = vrcp.pop %v2934
    %v2944 = vmul.f32 1.0, %v2943
    %v2945 = vrcp.pop %v2935
    %v2946 = vmul.f32 1.0, %v2945
    %v2947 = vrcp.pop %v2936
    %v2948 = vmul.f32 1.0, %v2947
    %v2949 = vrcp.pop %v2937
    %v2950 = vmul.f32 1.0, %v2949
    %v2951 = vrcp.pop %v2938
    %v2952 = vmul.f32 1.0, %v2951
    %v2953 = vrcp.pop %v2939
    %v2954 = vmul.f32 1.0, %v2953
    %v2955 = vrcp.pop %v2940
    %v2956 = vmul.f32 1.0, %v2955
    %v2957 = vmul.f32 %v2750, %v2942
    %v2958 = vmul.f32 %v2755, %v2944
    %v2959 = vmul.f32 %v2760, %v2946
    %v2960 = vmul.f32 %v2765, %v2948
    %v2961 = vmul.f32 %v2770, %v2950
    %v2962 = vmul.f32 %v2775, %v2952
    %v2963 = vmul.f32 %v2780, %v2954
    %v2964 = vmul.f32 %v2785, %v2956
    %v2965 = vmul.f32 %v2957, %v2871
    %v2966 = vmul.f32 %v2958, %v2876
    %v2967 = vmul.f32 %v2959, %v2881
    %v2968 = vmul.f32 %v2960, %v2886
    %v2969 = vmul.f32 %v2961, %v2891
    %v2970 = vmul.f32 %v2962, %v2896
    %v2971 = vmul.f32 %v2963, %v2901
    %v2972 = vmul.f32 %v2964, %v2906
    %v2973 = vld [vmem:[#allocation11] sm:$0xff]
    %v2974 = vld [vmem:[#allocation11 + $0x8] sm:$0xff]
    %v2975 = vld [vmem:[#allocation11 + $0x10] sm:$0xff]
    %v2976 = vld [vmem:[#allocation11 + $0x18] sm:$0xff]
    %v2977 = vld [vmem:[#allocation11 + $0x20] sm:$0xff]
    %v2978 = vld [vmem:[#allocation11 + $0x28] sm:$0xff]
    %v2979 = vld [vmem:[#allocation11 + $0x30] sm:$0xff]
    %v2980 = vld [vmem:[#allocation11 + $0x38] sm:$0xff]
    %v2981 = vld [vmem:[#allocation11 + $0x40] sm:$0xff]
    %v2982 = vld [vmem:[#allocation11 + $0x48] sm:$0xff]
    %v2983 = vld [vmem:[#allocation11 + $0x50] sm:$0xff]
    %v2984 = vld [vmem:[#allocation11 + $0x58] sm:$0xff]
    %v2985 = vld [vmem:[#allocation11 + $0x60] sm:$0xff]
    %v2986 = vld [vmem:[#allocation11 + $0x68] sm:$0xff]
    %v2987 = vld [vmem:[#allocation11 + $0x70] sm:$0xff]
    %v2988 = vld [vmem:[#allocation11 + $0x78] sm:$0xff]
    %v2989 = vld [vmem:[#allocation10 + $0x8] sm:$0xff]
    %v2990 = vld [vmem:[#allocation10 + $0x38] sm:$0xff]
    %v2991 = vld [vmem:[#allocation10 + $0x68] sm:$0xff]
    %v2992 = vld [vmem:[#allocation10 + $0x98] sm:$0xff]
    %v2993 = vld [vmem:[#allocation10 + $0xc8] sm:$0xff]
    %v2994 = vld [vmem:[#allocation10 + $0xf8] sm:$0xff]
    %v2995 = vld [vmem:[#allocation10 + $0x128] sm:$0xff]
    %v2996 = vld [vmem:[#allocation10 + $0x158] sm:$0xff]
    %v2997 = vld [vmem:[#allocation10 + $0x188] sm:$0xff]
    %v2998 = vld [vmem:[#allocation10 + $0x1b8] sm:$0xff]
    %v2999 = vld [vmem:[#allocation10 + $0x1e8] sm:$0xff]
    %v3000 = vld [vmem:[#allocation10 + $0x218] sm:$0xff]
    %v3001 = vld [vmem:[#allocation10 + $0x248] sm:$0xff]
    %v3002 = vld [vmem:[#allocation10 + $0x278] sm:$0xff]
    %v3003 = vld [vmem:[#allocation10 + $0x2a8] sm:$0xff]
    %v3004 = vld [vmem:[#allocation10 + $0x2d8] sm:$0xff]
    %3005 = vmatprep.subr.mxu0 0.0
    %3006 = vmatpush1.msra.mxu0 %v3004
    %3007 = vmatprep.subr.mxu0 0.0
    %3008 = vmatpush1.msra.mxu0 %v3003
    %3009 = vmatprep.subr.mxu0 0.0
    %3010 = vmatpush1.msra.mxu0 %v3002
    %3011 = vmatprep.subr.mxu0 0.0
    %3012 = vmatpush1.msra.mxu0 %v3001
    %3013 = vmatprep.subr.mxu0 0.0
    %3014 = vmatpush1.msra.mxu0 %v3000
    %3015 = vmatprep.subr.mxu0 0.0
    %3016 = vmatpush1.msra.mxu0 %v2999
    %3017 = vmatprep.subr.mxu0 0.0
    %3018 = vmatpush1.msra.mxu0 %v2998
    %3019 = vmatprep.subr.mxu0 0.0
    %3020 = vmatpush1.msra.mxu0 %v2997
    %3021 = vmatprep.subr.mxu0 0.0
    %3022 = vmatpush1.msra.mxu0 %v2996
    %3023 = vmatprep.subr.mxu0 0.0
    %3024 = vmatpush1.msra.mxu0 %v2995
    %3025 = vmatprep.subr.mxu0 0.0
    %3026 = vmatpush1.msra.mxu0 %v2994
    %3027 = vmatprep.subr.mxu0 0.0
    %3028 = vmatpush1.msra.mxu0 %v2993
    %3029 = vmatprep.subr.mxu0 0.0
    %3030 = vmatpush1.msra.mxu0 %v2992
    %3031 = vmatprep.subr.mxu0 0.0
    %3032 = vmatpush1.msra.mxu0 %v2991
    %3033 = vmatprep.subr.mxu0 0.0
    %3034 = vmatpush1.msra.mxu0 %v2990
    %3035 = vmatprep.subr.mxu0 0.0
    %3036 = vmatpush1.msra.mxu0 %v2989
    %3037 = vmatprep.subr.mxu0 0.0
    %3038 = vmatpush2.msra.mxu0 0.0
    %3039 = vmatprep.subr.mxu0 0.0
    %3040 = vmatpush2.msra.mxu0 0.0
    %3041 = vmatprep.subr.mxu0 0.0
    %3042 = vmatpush2.msra.mxu0 0.0
    %3043 = vmatprep.subr.mxu0 0.0
    %3044 = vmatpush2.msra.mxu0 0.0
    %3045 = vmatprep.subr.mxu0 0.0
    %3046 = vmatpush2.msra.mxu0 0.0
    %3047 = vmatprep.subr.mxu0 0.0
    %3048 = vmatpush2.msra.mxu0 0.0
    %3049 = vmatprep.subr.mxu0 0.0
    %3050 = vmatpush2.msra.mxu0 0.0
    %3051 = vmatprep.subr.mxu0 0.0
    %3052 = vmatpush2.msra.mxu0 0.0
    %3053 = vmatprep.subr.mxu0 0.0
    %3054 = vmatpush2.msra.mxu0 0.0
    %3055 = vmatprep.subr.mxu0 0.0
    %3056 = vmatpush2.msra.mxu0 0.0
    %3057 = vmatprep.subr.mxu0 0.0
    %3058 = vmatpush2.msra.mxu0 0.0
    %3059 = vmatprep.subr.mxu0 0.0
    %3060 = vmatpush2.msra.mxu0 0.0
    %3061 = vmatprep.subr.mxu0 0.0
    %3062 = vmatpush2.msra.mxu0 0.0
    %3063 = vmatprep.subr.mxu0 0.0
    %3064 = vmatpush2.msra.mxu0 0.0
    %3065 = vmatprep.subr.mxu0 0.0
    %3066 = vmatpush2.msra.mxu0 0.0
    %3067 = vmatprep.subr.mxu0 0.0
    %3068 = vmatpush2.msra.mxu0 0.0
    %3069 = vmatprep.mubr.f32.mxu0 0.0
    %3070 = vmatmul.mubr.f32.gmra.mxu0 %v2659
    %v3071 = vpop.f32.mrf.mxu0
    %v3072 = vadd.f32 0.0, %v3071
    %v3073 = vpop.f32.mrf.mxu0
    %3074 = vmatprep.mubr.f32.mxu0 0.0
    %3075 = vmatmul.mubr.f32.gmra.mxu0 %v2660
    %v3076 = vpop.f32.mrf.mxu0
    %v3077 = vadd.f32 0.0, %v3076
    %v3078 = vpop.f32.mrf.mxu0
    %3079 = vmatprep.mubr.f32.mxu0 0.0
    %3080 = vmatmul.mubr.f32.gmra.mxu0 %v2661
    %v3081 = vpop.f32.mrf.mxu0
    %v3082 = vadd.f32 0.0, %v3081
    %v3083 = vpop.f32.mrf.mxu0
    %3084 = vmatprep.mubr.f32.mxu0 0.0
    %3085 = vmatmul.mubr.f32.gmra.mxu0 %v2662
    %v3086 = vpop.f32.mrf.mxu0
    %v3087 = vadd.f32 0.0, %v3086
    %v3088 = vpop.f32.mrf.mxu0
    %3089 = vmatprep.mubr.f32.mxu0 0.0
    %3090 = vmatmul.mubr.f32.gmra.mxu0 %v2663
    %v3091 = vpop.f32.mrf.mxu0
    %v3092 = vadd.f32 0.0, %v3091
    %v3093 = vpop.f32.mrf.mxu0
    %3094 = vmatprep.mubr.f32.mxu0 0.0
    %3095 = vmatmul.mubr.f32.gmra.mxu0 %v2664
    %v3096 = vpop.f32.mrf.mxu0
    %v3097 = vadd.f32 0.0, %v3096
    %v3098 = vpop.f32.mrf.mxu0
    %3099 = vmatprep.mubr.f32.mxu0 0.0
    %3100 = vmatmul.mubr.f32.gmra.mxu0 %v2665
    %v3101 = vpop.f32.mrf.mxu0
    %v3102 = vadd.f32 0.0, %v3101
    %v3103 = vpop.f32.mrf.mxu0
    %3104 = vmatprep.mubr.f32.mxu0 0.0
    %3105 = vmatmul.mubr.f32.gmra.mxu0 %v2666
    %v3106 = vpop.f32.mrf.mxu0
    %v3107 = vadd.f32 0.0, %v3106
    %v3108 = vpop.f32.mrf.mxu0
    %3109 = vdwg.mxu0
    %v3110 = vld [vmem:[#allocation10 + $0x20] sm:$0xff]
    %v3111 = vld [vmem:[#allocation10 + $0x50] sm:$0xff]
    %v3112 = vld [vmem:[#allocation10 + $0x80] sm:$0xff]
    %v3113 = vld [vmem:[#allocation10 + $0xb0] sm:$0xff]
    %v3114 = vld [vmem:[#allocation10 + $0xe0] sm:$0xff]
    %v3115 = vld [vmem:[#allocation10 + $0x110] sm:$0xff]
    %v3116 = vld [vmem:[#allocation10 + $0x140] sm:$0xff]
    %v3117 = vld [vmem:[#allocation10 + $0x170] sm:$0xff]
    %v3118 = vld [vmem:[#allocation10 + $0x1a0] sm:$0xff]
    %v3119 = vld [vmem:[#allocation10 + $0x1d0] sm:$0xff]
    %v3120 = vld [vmem:[#allocation10 + $0x200] sm:$0xff]
    %v3121 = vld [vmem:[#allocation10 + $0x230] sm:$0xff]
    %v3122 = vld [vmem:[#allocation10 + $0x260] sm:$0xff]
    %v3123 = vld [vmem:[#allocation10 + $0x290] sm:$0xff]
    %v3124 = vld [vmem:[#allocation10 + $0x2c0] sm:$0xff]
    %v3125 = vld [vmem:[#allocation10 + $0x2f0] sm:$0xff]
    %3126 = vmatprep.subr.mxu0 0.0
    %3127 = vmatpush1.msra.mxu0 %v3125
    %3128 = vmatprep.subr.mxu0 0.0
    %3129 = vmatpush1.msra.mxu0 %v3124
    %3130 = vmatprep.subr.mxu0 0.0
    %3131 = vmatpush1.msra.mxu0 %v3123
    %3132 = vmatprep.subr.mxu0 0.0
    %3133 = vmatpush1.msra.mxu0 %v3122
    %3134 = vmatprep.subr.mxu0 0.0
    %3135 = vmatpush1.msra.mxu0 %v3121
    %3136 = vmatprep.subr.mxu0 0.0
    %3137 = vmatpush1.msra.mxu0 %v3120
    %3138 = vmatprep.subr.mxu0 0.0
    %3139 = vmatpush1.msra.mxu0 %v3119
    %3140 = vmatprep.subr.mxu0 0.0
    %3141 = vmatpush1.msra.mxu0 %v3118
    %3142 = vmatprep.subr.mxu0 0.0
    %3143 = vmatpush1.msra.mxu0 %v3117
    %3144 = vmatprep.subr.mxu0 0.0
    %3145 = vmatpush1.msra.mxu0 %v3116
    %3146 = vmatprep.subr.mxu0 0.0
    %3147 = vmatpush1.msra.mxu0 %v3115
    %3148 = vmatprep.subr.mxu0 0.0
    %3149 = vmatpush1.msra.mxu0 %v3114
    %3150 = vmatprep.subr.mxu0 0.0
    %3151 = vmatpush1.msra.mxu0 %v3113
    %3152 = vmatprep.subr.mxu0 0.0
    %3153 = vmatpush1.msra.mxu0 %v3112
    %3154 = vmatprep.subr.mxu0 0.0
    %3155 = vmatpush1.msra.mxu0 %v3111
    %3156 = vmatprep.subr.mxu0 0.0
    %3157 = vmatpush1.msra.mxu0 %v3110
    %3158 = vmatprep.subr.mxu0 0.0
    %3159 = vmatpush2.msra.mxu0 0.0
    %3160 = vmatprep.subr.mxu0 0.0
    %3161 = vmatpush2.msra.mxu0 0.0
    %3162 = vmatprep.subr.mxu0 0.0
    %3163 = vmatpush2.msra.mxu0 0.0
    %3164 = vmatprep.subr.mxu0 0.0
    %3165 = vmatpush2.msra.mxu0 0.0
    %3166 = vmatprep.subr.mxu0 0.0
    %3167 = vmatpush2.msra.mxu0 0.0
    %3168 = vmatprep.subr.mxu0 0.0
    %3169 = vmatpush2.msra.mxu0 0.0
    %3170 = vmatprep.subr.mxu0 0.0
    %3171 = vmatpush2.msra.mxu0 0.0
    %3172 = vmatprep.subr.mxu0 0.0
    %3173 = vmatpush2.msra.mxu0 0.0
    %3174 = vmatprep.subr.mxu0 0.0
    %3175 = vmatpush2.msra.mxu0 0.0
    %3176 = vmatprep.subr.mxu0 0.0
    %3177 = vmatpush2.msra.mxu0 0.0
    %3178 = vmatprep.subr.mxu0 0.0
    %3179 = vmatpush2.msra.mxu0 0.0
    %3180 = vmatprep.subr.mxu0 0.0
    %3181 = vmatpush2.msra.mxu0 0.0
    %3182 = vmatprep.subr.mxu0 0.0
    %3183 = vmatpush2.msra.mxu0 0.0
    %3184 = vmatprep.subr.mxu0 0.0
    %3185 = vmatpush2.msra.mxu0 0.0
    %3186 = vmatprep.subr.mxu0 0.0
    %3187 = vmatpush2.msra.mxu0 0.0
    %3188 = vmatprep.subr.mxu0 0.0
    %3189 = vmatpush2.msra.mxu0 0.0
    %3190 = vmatprep.mubr.f32.mxu0 0.0
    %3191 = vmatmul.mubr.f32.gmra.mxu0 %v2659
    %v3192 = vpop.f32.mrf.mxu0
    %v3193 = vadd.f32 0.0, %v3192
    %v3194 = vpop.f32.mrf.mxu0
    %3195 = vmatprep.mubr.f32.mxu0 0.0
    %3196 = vmatmul.mubr.f32.gmra.mxu0 %v2660
    %v3197 = vpop.f32.mrf.mxu0
    %v3198 = vadd.f32 0.0, %v3197
    %v3199 = vpop.f32.mrf.mxu0
    %3200 = vmatprep.mubr.f32.mxu0 0.0
    %3201 = vmatmul.mubr.f32.gmra.mxu0 %v2661
    %v3202 = vpop.f32.mrf.mxu0
    %v3203 = vadd.f32 0.0, %v3202
    %v3204 = vpop.f32.mrf.mxu0
    %3205 = vmatprep.mubr.f32.mxu0 0.0
    %3206 = vmatmul.mubr.f32.gmra.mxu0 %v2662
    %v3207 = vpop.f32.mrf.mxu0
    %v3208 = vadd.f32 0.0, %v3207
    %v3209 = vpop.f32.mrf.mxu0
    %3210 = vmatprep.mubr.f32.mxu0 0.0
    %3211 = vmatmul.mubr.f32.gmra.mxu0 %v2663
    %v3212 = vpop.f32.mrf.mxu0
    %v3213 = vadd.f32 0.0, %v3212
    %v3214 = vpop.f32.mrf.mxu0
    %3215 = vmatprep.mubr.f32.mxu0 0.0
    %3216 = vmatmul.mubr.f32.gmra.mxu0 %v2664
    %v3217 = vpop.f32.mrf.mxu0
    %v3218 = vadd.f32 0.0, %v3217
    %v3219 = vpop.f32.mrf.mxu0
    %3220 = vmatprep.mubr.f32.mxu0 0.0
    %3221 = vmatmul.mubr.f32.gmra.mxu0 %v2665
    %v3222 = vpop.f32.mrf.mxu0
    %v3223 = vadd.f32 0.0, %v3222
    %v3224 = vpop.f32.mrf.mxu0
    %3225 = vmatprep.mubr.f32.mxu0 0.0
    %3226 = vmatmul.mubr.f32.gmra.mxu0 %v2666
    %v3227 = vpop.f32.mrf.mxu0
    %v3228 = vadd.f32 0.0, %v3227
    %v3229 = vpop.f32.mrf.mxu0
    %3230 = vdwg.mxu0
    %v3231 = vxor.u32 %v3072, 2147483648
    %v3232 = vxor.u32 %v3077, 2147483648
    %v3233 = vxor.u32 %v3082, 2147483648
    %v3234 = vxor.u32 %v3087, 2147483648
    %v3235 = vxor.u32 %v3092, 2147483648
    %v3236 = vxor.u32 %v3097, 2147483648
    %v3237 = vxor.u32 %v3102, 2147483648
    %v3238 = vxor.u32 %v3107, 2147483648
    %v3239 = vmul.f32 %v3231, 1.442695
    %v3240 = vpow.pop %v3239
    %v3241 = vmul.f32 %v3232, 1.442695
    %v3242 = vpow.pop %v3241
    %v3243 = vmul.f32 %v3233, 1.442695
    %v3244 = vpow.pop %v3243
    %v3245 = vmul.f32 %v3234, 1.442695
    %v3246 = vpow.pop %v3245
    %v3247 = vmul.f32 %v3235, 1.442695
    %v3248 = vpow.pop %v3247
    %v3249 = vmul.f32 %v3236, 1.442695
    %v3250 = vpow.pop %v3249
    %v3251 = vmul.f32 %v3237, 1.442695
    %v3252 = vpow.pop %v3251
    %v3253 = vmul.f32 %v3238, 1.442695
    %v3254 = vpow.pop %v3253
    %v3255 = vadd.f32 %v3240, 1.0
    %v3256 = vadd.f32 %v3242, 1.0
    %v3257 = vadd.f32 %v3244, 1.0
    %v3258 = vadd.f32 %v3246, 1.0
    %v3259 = vadd.f32 %v3248, 1.0
    %v3260 = vadd.f32 %v3250, 1.0
    %v3261 = vadd.f32 %v3252, 1.0
    %v3262 = vadd.f32 %v3254, 1.0
    %v3263 = vrcp.pop %v3255
    %v3264 = vmul.f32 1.0, %v3263
    %v3265 = vrcp.pop %v3256
    %v3266 = vmul.f32 1.0, %v3265
    %v3267 = vrcp.pop %v3257
    %v3268 = vmul.f32 1.0, %v3267
    %v3269 = vrcp.pop %v3258
    %v3270 = vmul.f32 1.0, %v3269
    %v3271 = vrcp.pop %v3259
    %v3272 = vmul.f32 1.0, %v3271
    %v3273 = vrcp.pop %v3260
    %v3274 = vmul.f32 1.0, %v3273
    %v3275 = vrcp.pop %v3261
    %v3276 = vmul.f32 1.0, %v3275
    %v3277 = vrcp.pop %v3262
    %v3278 = vmul.f32 1.0, %v3277
    %v3279 = vmul.f32 %v3072, %v3264
    %v3280 = vmul.f32 %v3077, %v3266
    %v3281 = vmul.f32 %v3082, %v3268
    %v3282 = vmul.f32 %v3087, %v3270
    %v3283 = vmul.f32 %v3092, %v3272
    %v3284 = vmul.f32 %v3097, %v3274
    %v3285 = vmul.f32 %v3102, %v3276
    %v3286 = vmul.f32 %v3107, %v3278
    %v3287 = vmul.f32 %v3279, %v3193
    %v3288 = vmul.f32 %v3280, %v3198
    %v3289 = vmul.f32 %v3281, %v3203
    %v3290 = vmul.f32 %v3282, %v3208
    %v3291 = vmul.f32 %v3283, %v3213
    %v3292 = vmul.f32 %v3284, %v3218
    %v3293 = vmul.f32 %v3285, %v3223
    %v3294 = vmul.f32 %v3286, %v3228
    %v3295 = vld [vmem:[#allocation11 + $0x80] sm:$0xff]
    %v3296 = vld [vmem:[#allocation11 + $0x88] sm:$0xff]
    %v3297 = vld [vmem:[#allocation11 + $0x90] sm:$0xff]
    %v3298 = vld [vmem:[#allocation11 + $0x98] sm:$0xff]
    %v3299 = vld [vmem:[#allocation11 + $0xa0] sm:$0xff]
    %v3300 = vld [vmem:[#allocation11 + $0xa8] sm:$0xff]
    %v3301 = vld [vmem:[#allocation11 + $0xb0] sm:$0xff]
    %v3302 = vld [vmem:[#allocation11 + $0xb8] sm:$0xff]
    %v3303 = vld [vmem:[#allocation11 + $0xc0] sm:$0xff]
    %v3304 = vld [vmem:[#allocation11 + $0xc8] sm:$0xff]
    %v3305 = vld [vmem:[#allocation11 + $0xd0] sm:$0xff]
    %v3306 = vld [vmem:[#allocation11 + $0xd8] sm:$0xff]
    %v3307 = vld [vmem:[#allocation11 + $0xe0] sm:$0xff]
    %v3308 = vld [vmem:[#allocation11 + $0xe8] sm:$0xff]
    %v3309 = vld [vmem:[#allocation11 + $0xf0] sm:$0xff]
    %v3310 = vld [vmem:[#allocation11 + $0xf8] sm:$0xff]
    %3311 = vmatprep.subr.mxu0 0.0
    %3312 = vmatpush1.msra.mxu0 %v3310
    %3313 = vmatprep.subr.mxu0 0.0
    %3314 = vmatpush1.msra.mxu0 %v3309
    %3315 = vmatprep.subr.mxu0 0.0
    %3316 = vmatpush1.msra.mxu0 %v3308
    %3317 = vmatprep.subr.mxu0 0.0
    %3318 = vmatpush1.msra.mxu0 %v3307
    %3319 = vmatprep.subr.mxu0 0.0
    %3320 = vmatpush1.msra.mxu0 %v3306
    %3321 = vmatprep.subr.mxu0 0.0
    %3322 = vmatpush1.msra.mxu0 %v3305
    %3323 = vmatprep.subr.mxu0 0.0
    %3324 = vmatpush1.msra.mxu0 %v3304
    %3325 = vmatprep.subr.mxu0 0.0
    %3326 = vmatpush1.msra.mxu0 %v3303
    %3327 = vmatprep.subr.mxu0 0.0
    %3328 = vmatpush1.msra.mxu0 %v3302
    %3329 = vmatprep.subr.mxu0 0.0
    %3330 = vmatpush1.msra.mxu0 %v3301
    %3331 = vmatprep.subr.mxu0 0.0
    %3332 = vmatpush1.msra.mxu0 %v3300
    %3333 = vmatprep.subr.mxu0 0.0
    %3334 = vmatpush1.msra.mxu0 %v3299
    %3335 = vmatprep.subr.mxu0 0.0
    %3336 = vmatpush1.msra.mxu0 %v3298
    %3337 = vmatprep.subr.mxu0 0.0
    %3338 = vmatpush1.msra.mxu0 %v3297
    %3339 = vmatprep.subr.mxu0 0.0
    %3340 = vmatpush1.msra.mxu0 %v3296
    %3341 = vmatprep.subr.mxu0 0.0
    %3342 = vmatpush1.msra.mxu0 %v3295
    %3343 = vmatprep.subr.mxu0 0.0
    %3344 = vmatpush2.msra.mxu0 0.0
    %3345 = vmatprep.subr.mxu0 0.0
    %3346 = vmatpush2.msra.mxu0 0.0
    %3347 = vmatprep.subr.mxu0 0.0
    %3348 = vmatpush2.msra.mxu0 0.0
    %3349 = vmatprep.subr.mxu0 0.0
    %3350 = vmatpush2.msra.mxu0 0.0
    %3351 = vmatprep.subr.mxu0 0.0
    %3352 = vmatpush2.msra.mxu0 0.0
    %3353 = vmatprep.subr.mxu0 0.0
    %3354 = vmatpush2.msra.mxu0 0.0
    %3355 = vmatprep.subr.mxu0 0.0
    %3356 = vmatpush2.msra.mxu0 0.0
    %3357 = vmatprep.subr.mxu0 0.0
    %3358 = vmatpush2.msra.mxu0 0.0
    %3359 = vmatprep.subr.mxu0 0.0
    %3360 = vmatpush2.msra.mxu0 0.0
    %3361 = vmatprep.subr.mxu0 0.0
    %3362 = vmatpush2.msra.mxu0 0.0
    %3363 = vmatprep.subr.mxu0 0.0
    %3364 = vmatpush2.msra.mxu0 0.0
    %3365 = vmatprep.subr.mxu0 0.0
    %3366 = vmatpush2.msra.mxu0 0.0
    %3367 = vmatprep.subr.mxu0 0.0
    %3368 = vmatpush2.msra.mxu0 0.0
    %3369 = vmatprep.subr.mxu0 0.0
    %3370 = vmatpush2.msra.mxu0 0.0
    %3371 = vmatprep.subr.mxu0 0.0
    %3372 = vmatpush2.msra.mxu0 0.0
    %3373 = vmatprep.subr.mxu0 0.0
    %3374 = vmatpush2.msra.mxu0 0.0
    %3375 = vmatprep.mubr.f32.mxu0 0.0
    %3376 = vmatmul.mubr.f32.gmra.mxu0 %v3287
    %v3377 = vpop.f32.mrf.mxu0
    %v3378 = vadd.f32 0.0, %v3377
    %v3379 = vpop.f32.mrf.mxu0
    %3380 = vmatprep.mubr.f32.mxu0 0.0
    %3381 = vmatmul.mubr.f32.gmra.mxu0 %v3288
    %v3382 = vpop.f32.mrf.mxu0
    %v3383 = vadd.f32 0.0, %v3382
    %v3384 = vpop.f32.mrf.mxu0
    %3385 = vmatprep.mubr.f32.mxu0 0.0
    %3386 = vmatmul.mubr.f32.gmra.mxu0 %v3289
    %v3387 = vpop.f32.mrf.mxu0
    %v3388 = vadd.f32 0.0, %v3387
    %v3389 = vpop.f32.mrf.mxu0
    %3390 = vmatprep.mubr.f32.mxu0 0.0
    %3391 = vmatmul.mubr.f32.gmra.mxu0 %v3290
    %v3392 = vpop.f32.mrf.mxu0
    %v3393 = vadd.f32 0.0, %v3392
    %v3394 = vpop.f32.mrf.mxu0
    %3395 = vmatprep.mubr.f32.mxu0 0.0
    %3396 = vmatmul.mubr.f32.gmra.mxu0 %v3291
    %v3397 = vpop.f32.mrf.mxu0
    %v3398 = vadd.f32 0.0, %v3397
    %v3399 = vpop.f32.mrf.mxu0
    %3400 = vmatprep.mubr.f32.mxu0 0.0
    %3401 = vmatmul.mubr.f32.gmra.mxu0 %v3292
    %v3402 = vpop.f32.mrf.mxu0
    %v3403 = vadd.f32 0.0, %v3402
    %v3404 = vpop.f32.mrf.mxu0
    %3405 = vmatprep.mubr.f32.mxu0 0.0
    %3406 = vmatmul.mubr.f32.gmra.mxu0 %v3293
    %v3407 = vpop.f32.mrf.mxu0
    %v3408 = vadd.f32 0.0, %v3407
    %v3409 = vpop.f32.mrf.mxu0
    %3410 = vmatprep.mubr.f32.mxu0 0.0
    %3411 = vmatmul.mubr.f32.gmra.mxu0 %v3294
    %v3412 = vpop.f32.mrf.mxu0
    %v3413 = vadd.f32 0.0, %v3412
    %v3414 = vpop.f32.mrf.mxu0
    %3415 = vdwg.mxu0
    %3416 = vmatprep.subr.mxu0 0.0
    %3417 = vmatpush1.msra.mxu0 %v2988
    %3418 = vmatprep.subr.mxu0 0.0
    %3419 = vmatpush1.msra.mxu0 %v2987
    %3420 = vmatprep.subr.mxu0 0.0
    %3421 = vmatpush1.msra.mxu0 %v2986
    %3422 = vmatprep.subr.mxu0 0.0
    %3423 = vmatpush1.msra.mxu0 %v2985
    %3424 = vmatprep.subr.mxu0 0.0
    %3425 = vmatpush1.msra.mxu0 %v2984
    %3426 = vmatprep.subr.mxu0 0.0
    %3427 = vmatpush1.msra.mxu0 %v2983
    %3428 = vmatprep.subr.mxu0 0.0
    %3429 = vmatpush1.msra.mxu0 %v2982
    %3430 = vmatprep.subr.mxu0 0.0
    %3431 = vmatpush1.msra.mxu0 %v2981
    %3432 = vmatprep.subr.mxu0 0.0
    %3433 = vmatpush1.msra.mxu0 %v2980
    %3434 = vmatprep.subr.mxu0 0.0
    %3435 = vmatpush1.msra.mxu0 %v2979
    %3436 = vmatprep.subr.mxu0 0.0
    %3437 = vmatpush1.msra.mxu0 %v2978
    %3438 = vmatprep.subr.mxu0 0.0
    %3439 = vmatpush1.msra.mxu0 %v2977
    %3440 = vmatprep.subr.mxu0 0.0
    %3441 = vmatpush1.msra.mxu0 %v2976
    %3442 = vmatprep.subr.mxu0 0.0
    %3443 = vmatpush1.msra.mxu0 %v2975
    %3444 = vmatprep.subr.mxu0 0.0
    %3445 = vmatpush1.msra.mxu0 %v2974
    %3446 = vmatprep.subr.mxu0 0.0
    %3447 = vmatpush1.msra.mxu0 %v2973
    %3448 = vmatprep.subr.mxu0 0.0
    %3449 = vmatpush2.msra.mxu0 0.0
    %3450 = vmatprep.subr.mxu0 0.0
    %3451 = vmatpush2.msra.mxu0 0.0
    %3452 = vmatprep.subr.mxu0 0.0
    %3453 = vmatpush2.msra.mxu0 0.0
    %3454 = vmatprep.subr.mxu0 0.0
    %3455 = vmatpush2.msra.mxu0 0.0
    %3456 = vmatprep.subr.mxu0 0.0
    %3457 = vmatpush2.msra.mxu0 0.0
    %3458 = vmatprep.subr.mxu0 0.0
    %3459 = vmatpush2.msra.mxu0 0.0
    %3460 = vmatprep.subr.mxu0 0.0
    %3461 = vmatpush2.msra.mxu0 0.0
    %3462 = vmatprep.subr.mxu0 0.0
    %3463 = vmatpush2.msra.mxu0 0.0
    %3464 = vmatprep.subr.mxu0 0.0
    %3465 = vmatpush2.msra.mxu0 0.0
    %3466 = vmatprep.subr.mxu0 0.0
    %3467 = vmatpush2.msra.mxu0 0.0
    %3468 = vmatprep.subr.mxu0 0.0
    %3469 = vmatpush2.msra.mxu0 0.0
    %3470 = vmatprep.subr.mxu0 0.0
    %3471 = vmatpush2.msra.mxu0 0.0
    %3472 = vmatprep.subr.mxu0 0.0
    %3473 = vmatpush2.msra.mxu0 0.0
    %3474 = vmatprep.subr.mxu0 0.0
    %3475 = vmatpush2.msra.mxu0 0.0
    %3476 = vmatprep.subr.mxu0 0.0
    %3477 = vmatpush2.msra.mxu0 0.0
    %3478 = vmatprep.subr.mxu0 0.0
    %3479 = vmatpush2.msra.mxu0 0.0
    %3480 = vmatprep.mubr.f32.mxu0 0.0
    %3481 = vmatmul.mubr.f32.gmra.mxu0 %v2965
    %v3482 = vpop.f32.mrf.mxu0
    %v3483 = vadd.f32 %v3378, %v3482
    %v3484 = vpop.f32.mrf.mxu0
    %3485 = vmatprep.mubr.f32.mxu0 0.0
    %3486 = vmatmul.mubr.f32.gmra.mxu0 %v2966
    %v3487 = vpop.f32.mrf.mxu0
    %v3488 = vadd.f32 %v3383, %v3487
    %v3489 = vpop.f32.mrf.mxu0
    %3490 = vmatprep.mubr.f32.mxu0 0.0
    %3491 = vmatmul.mubr.f32.gmra.mxu0 %v2967
    %v3492 = vpop.f32.mrf.mxu0
    %v3493 = vadd.f32 %v3388, %v3492
    %v3494 = vpop.f32.mrf.mxu0
    %3495 = vmatprep.mubr.f32.mxu0 0.0
    %3496 = vmatmul.mubr.f32.gmra.mxu0 %v2968
    %v3497 = vpop.f32.mrf.mxu0
    %v3498 = vadd.f32 %v3393, %v3497
    %v3499 = vpop.f32.mrf.mxu0
    %3500 = vmatprep.mubr.f32.mxu0 0.0
    %3501 = vmatmul.mubr.f32.gmra.mxu0 %v2969
    %v3502 = vpop.f32.mrf.mxu0
    %v3503 = vadd.f32 %v3398, %v3502
    %v3504 = vpop.f32.mrf.mxu0
    %3505 = vmatprep.mubr.f32.mxu0 0.0
    %3506 = vmatmul.mubr.f32.gmra.mxu0 %v2970
    %v3507 = vpop.f32.mrf.mxu0
    %v3508 = vadd.f32 %v3403, %v3507
    %v3509 = vpop.f32.mrf.mxu0
    %3510 = vmatprep.mubr.f32.mxu0 0.0
    %3511 = vmatmul.mubr.f32.gmra.mxu0 %v2971
    %v3512 = vpop.f32.mrf.mxu0
    %v3513 = vadd.f32 %v3408, %v3512
    %v3514 = vpop.f32.mrf.mxu0
    %3515 = vmatprep.mubr.f32.mxu0 0.0
    %3516 = vmatmul.mubr.f32.gmra.mxu0 %v2972
    %v3517 = vpop.f32.mrf.mxu0
    %v3518 = vadd.f32 %v3413, %v3517
    %v3519 = vpop.f32.mrf.mxu0
    %3520 = vdwg.mxu0
    %v3521 = vld [vmem:[#allocation10 + $0x10] sm:$0xff]
    %v3522 = vld [vmem:[#allocation10 + $0x40] sm:$0xff]
    %v3523 = vld [vmem:[#allocation10 + $0x70] sm:$0xff]
    %v3524 = vld [vmem:[#allocation10 + $0xa0] sm:$0xff]
    %v3525 = vld [vmem:[#allocation10 + $0xd0] sm:$0xff]
    %v3526 = vld [vmem:[#allocation10 + $0x100] sm:$0xff]
    %v3527 = vld [vmem:[#allocation10 + $0x130] sm:$0xff]
    %v3528 = vld [vmem:[#allocation10 + $0x160] sm:$0xff]
    %v3529 = vld [vmem:[#allocation10 + $0x190] sm:$0xff]
    %v3530 = vld [vmem:[#allocation10 + $0x1c0] sm:$0xff]
    %v3531 = vld [vmem:[#allocation10 + $0x1f0] sm:$0xff]
    %v3532 = vld [vmem:[#allocation10 + $0x220] sm:$0xff]
    %v3533 = vld [vmem:[#allocation10 + $0x250] sm:$0xff]
    %v3534 = vld [vmem:[#allocation10 + $0x280] sm:$0xff]
    %v3535 = vld [vmem:[#allocation10 + $0x2b0] sm:$0xff]
    %v3536 = vld [vmem:[#allocation10 + $0x2e0] sm:$0xff]
    %3537 = vmatprep.subr.mxu0 0.0
    %3538 = vmatpush1.msra.mxu0 %v3536
    %3539 = vmatprep.subr.mxu0 0.0
    %3540 = vmatpush1.msra.mxu0 %v3535
    %3541 = vmatprep.subr.mxu0 0.0
    %3542 = vmatpush1.msra.mxu0 %v3534
    %3543 = vmatprep.subr.mxu0 0.0
    %3544 = vmatpush1.msra.mxu0 %v3533
    %3545 = vmatprep.subr.mxu0 0.0
    %3546 = vmatpush1.msra.mxu0 %v3532
    %3547 = vmatprep.subr.mxu0 0.0
    %3548 = vmatpush1.msra.mxu0 %v3531
    %3549 = vmatprep.subr.mxu0 0.0
    %3550 = vmatpush1.msra.mxu0 %v3530
    %3551 = vmatprep.subr.mxu0 0.0
    %3552 = vmatpush1.msra.mxu0 %v3529
    %3553 = vmatprep.subr.mxu0 0.0
    %3554 = vmatpush1.msra.mxu0 %v3528
    %3555 = vmatprep.subr.mxu0 0.0
    %3556 = vmatpush1.msra.mxu0 %v3527
    %3557 = vmatprep.subr.mxu0 0.0
    %3558 = vmatpush1.msra.mxu0 %v3526
    %3559 = vmatprep.subr.mxu0 0.0
    %3560 = vmatpush1.msra.mxu0 %v3525
    %3561 = vmatprep.subr.mxu0 0.0
    %3562 = vmatpush1.msra.mxu0 %v3524
    %3563 = vmatprep.subr.mxu0 0.0
    %3564 = vmatpush1.msra.mxu0 %v3523
    %3565 = vmatprep.subr.mxu0 0.0
    %3566 = vmatpush1.msra.mxu0 %v3522
    %3567 = vmatprep.subr.mxu0 0.0
    %3568 = vmatpush1.msra.mxu0 %v3521
    %3569 = vmatprep.subr.mxu0 0.0
    %3570 = vmatpush2.msra.mxu0 0.0
    %3571 = vmatprep.subr.mxu0 0.0
    %3572 = vmatpush2.msra.mxu0 0.0
    %3573 = vmatprep.subr.mxu0 0.0
    %3574 = vmatpush2.msra.mxu0 0.0
    %3575 = vmatprep.subr.mxu0 0.0
    %3576 = vmatpush2.msra.mxu0 0.0
    %3577 = vmatprep.subr.mxu0 0.0
    %3578 = vmatpush2.msra.mxu0 0.0
    %3579 = vmatprep.subr.mxu0 0.0
    %3580 = vmatpush2.msra.mxu0 0.0
    %3581 = vmatprep.subr.mxu0 0.0
    %3582 = vmatpush2.msra.mxu0 0.0
    %3583 = vmatprep.subr.mxu0 0.0
    %3584 = vmatpush2.msra.mxu0 0.0
    %3585 = vmatprep.subr.mxu0 0.0
    %3586 = vmatpush2.msra.mxu0 0.0
    %3587 = vmatprep.subr.mxu0 0.0
    %3588 = vmatpush2.msra.mxu0 0.0
    %3589 = vmatprep.subr.mxu0 0.0
    %3590 = vmatpush2.msra.mxu0 0.0
    %3591 = vmatprep.subr.mxu0 0.0
    %3592 = vmatpush2.msra.mxu0 0.0
    %3593 = vmatprep.subr.mxu0 0.0
    %3594 = vmatpush2.msra.mxu0 0.0
    %3595 = vmatprep.subr.mxu0 0.0
    %3596 = vmatpush2.msra.mxu0 0.0
    %3597 = vmatprep.subr.mxu0 0.0
    %3598 = vmatpush2.msra.mxu0 0.0
    %3599 = vmatprep.subr.mxu0 0.0
    %3600 = vmatpush2.msra.mxu0 0.0
    %3601 = vmatprep.mubr.f32.mxu0 0.0
    %3602 = vmatmul.mubr.f32.gmra.mxu0 %v2659
    %v3603 = vpop.f32.mrf.mxu0
    %v3604 = vadd.f32 0.0, %v3603
    %v3605 = vpop.f32.mrf.mxu0
    %3606 = vmatprep.mubr.f32.mxu0 0.0
    %3607 = vmatmul.mubr.f32.gmra.mxu0 %v2660
    %v3608 = vpop.f32.mrf.mxu0
    %v3609 = vadd.f32 0.0, %v3608
    %v3610 = vpop.f32.mrf.mxu0
    %3611 = vmatprep.mubr.f32.mxu0 0.0
    %3612 = vmatmul.mubr.f32.gmra.mxu0 %v2661
    %v3613 = vpop.f32.mrf.mxu0
    %v3614 = vadd.f32 0.0, %v3613
    %v3615 = vpop.f32.mrf.mxu0
    %3616 = vmatprep.mubr.f32.mxu0 0.0
    %3617 = vmatmul.mubr.f32.gmra.mxu0 %v2662
    %v3618 = vpop.f32.mrf.mxu0
    %v3619 = vadd.f32 0.0, %v3618
    %v3620 = vpop.f32.mrf.mxu0
    %3621 = vmatprep.mubr.f32.mxu0 0.0
    %3622 = vmatmul.mubr.f32.gmra.mxu0 %v2663
    %v3623 = vpop.f32.mrf.mxu0
    %v3624 = vadd.f32 0.0, %v3623
    %v3625 = vpop.f32.mrf.mxu0
    %3626 = vmatprep.mubr.f32.mxu0 0.0
    %3627 = vmatmul.mubr.f32.gmra.mxu0 %v2664
    %v3628 = vpop.f32.mrf.mxu0
    %v3629 = vadd.f32 0.0, %v3628
    %v3630 = vpop.f32.mrf.mxu0
    %3631 = vmatprep.mubr.f32.mxu0 0.0
    %3632 = vmatmul.mubr.f32.gmra.mxu0 %v2665
    %v3633 = vpop.f32.mrf.mxu0
    %v3634 = vadd.f32 0.0, %v3633
    %v3635 = vpop.f32.mrf.mxu0
    %3636 = vmatprep.mubr.f32.mxu0 0.0
    %3637 = vmatmul.mubr.f32.gmra.mxu0 %v2666
    %v3638 = vpop.f32.mrf.mxu0
    %v3639 = vadd.f32 0.0, %v3638
    %v3640 = vpop.f32.mrf.mxu0
    %3641 = vdwg.mxu0
    %v3642 = vld [vmem:[#allocation10 + $0x28] sm:$0xff]
    %v3643 = vld [vmem:[#allocation10 + $0x58] sm:$0xff]
    %v3644 = vld [vmem:[#allocation10 + $0x88] sm:$0xff]
    %v3645 = vld [vmem:[#allocation10 + $0xb8] sm:$0xff]
    %v3646 = vld [vmem:[#allocation10 + $0xe8] sm:$0xff]
    %v3647 = vld [vmem:[#allocation10 + $0x118] sm:$0xff]
    %v3648 = vld [vmem:[#allocation10 + $0x148] sm:$0xff]
    %v3649 = vld [vmem:[#allocation10 + $0x178] sm:$0xff]
    %v3650 = vld [vmem:[#allocation10 + $0x1a8] sm:$0xff]
    %v3651 = vld [vmem:[#allocation10 + $0x1d8] sm:$0xff]
    %v3652 = vld [vmem:[#allocation10 + $0x208] sm:$0xff]
    %v3653 = vld [vmem:[#allocation10 + $0x238] sm:$0xff]
    %v3654 = vld [vmem:[#allocation10 + $0x268] sm:$0xff]
    %v3655 = vld [vmem:[#allocation10 + $0x298] sm:$0xff]
    %v3656 = vld [vmem:[#allocation10 + $0x2c8] sm:$0xff]
    %v3657 = vld [vmem:[#allocation10 + $0x2f8] sm:$0xff]
    %3658 = vmatprep.subr.mxu0 0.0
    %3659 = vmatpush1.msra.mxu0 %v3657
    %3660 = vmatprep.subr.mxu0 0.0
    %3661 = vmatpush1.msra.mxu0 %v3656
    %3662 = vmatprep.subr.mxu0 0.0
    %3663 = vmatpush1.msra.mxu0 %v3655
    %3664 = vmatprep.subr.mxu0 0.0
    %3665 = vmatpush1.msra.mxu0 %v3654
    %3666 = vmatprep.subr.mxu0 0.0
    %3667 = vmatpush1.msra.mxu0 %v3653
    %3668 = vmatprep.subr.mxu0 0.0
    %3669 = vmatpush1.msra.mxu0 %v3652
    %3670 = vmatprep.subr.mxu0 0.0
    %3671 = vmatpush1.msra.mxu0 %v3651
    %3672 = vmatprep.subr.mxu0 0.0
    %3673 = vmatpush1.msra.mxu0 %v3650
    %3674 = vmatprep.subr.mxu0 0.0
    %3675 = vmatpush1.msra.mxu0 %v3649
    %3676 = vmatprep.subr.mxu0 0.0
    %3677 = vmatpush1.msra.mxu0 %v3648
    %3678 = vmatprep.subr.mxu0 0.0
    %3679 = vmatpush1.msra.mxu0 %v3647
    %3680 = vmatprep.subr.mxu0 0.0
    %3681 = vmatpush1.msra.mxu0 %v3646
    %3682 = vmatprep.subr.mxu0 0.0
    %3683 = vmatpush1.msra.mxu0 %v3645
    %3684 = vmatprep.subr.mxu0 0.0
    %3685 = vmatpush1.msra.mxu0 %v3644
    %3686 = vmatprep.subr.mxu0 0.0
    %3687 = vmatpush1.msra.mxu0 %v3643
    %3688 = vmatprep.subr.mxu0 0.0
    %3689 = vmatpush1.msra.mxu0 %v3642
    %3690 = vmatprep.subr.mxu0 0.0
    %3691 = vmatpush2.msra.mxu0 0.0
    %3692 = vmatprep.subr.mxu0 0.0
    %3693 = vmatpush2.msra.mxu0 0.0
    %3694 = vmatprep.subr.mxu0 0.0
    %3695 = vmatpush2.msra.mxu0 0.0
    %3696 = vmatprep.subr.mxu0 0.0
    %3697 = vmatpush2.msra.mxu0 0.0
    %3698 = vmatprep.subr.mxu0 0.0
    %3699 = vmatpush2.msra.mxu0 0.0
    %3700 = vmatprep.subr.mxu0 0.0
    %3701 = vmatpush2.msra.mxu0 0.0
    %3702 = vmatprep.subr.mxu0 0.0
    %3703 = vmatpush2.msra.mxu0 0.0
    %3704 = vmatprep.subr.mxu0 0.0
    %3705 = vmatpush2.msra.mxu0 0.0
    %3706 = vmatprep.subr.mxu0 0.0
    %3707 = vmatpush2.msra.mxu0 0.0
    %3708 = vmatprep.subr.mxu0 0.0
    %3709 = vmatpush2.msra.mxu0 0.0
    %3710 = vmatprep.subr.mxu0 0.0
    %3711 = vmatpush2.msra.mxu0 0.0
    %3712 = vmatprep.subr.mxu0 0.0
    %3713 = vmatpush2.msra.mxu0 0.0
    %3714 = vmatprep.subr.mxu0 0.0
    %3715 = vmatpush2.msra.mxu0 0.0
    %3716 = vmatprep.subr.mxu0 0.0
    %3717 = vmatpush2.msra.mxu0 0.0
    %3718 = vmatprep.subr.mxu0 0.0
    %3719 = vmatpush2.msra.mxu0 0.0
    %3720 = vmatprep.subr.mxu0 0.0
    %3721 = vmatpush2.msra.mxu0 0.0
    %3722 = vmatprep.mubr.f32.mxu0 0.0
    %3723 = vmatmul.mubr.f32.gmra.mxu0 %v2659
    %v3724 = vpop.f32.mrf.mxu0
    %v3725 = vadd.f32 0.0, %v3724
    %v3726 = vpop.f32.mrf.mxu0
    %3727 = vmatprep.mubr.f32.mxu0 0.0
    %3728 = vmatmul.mubr.f32.gmra.mxu0 %v2660
    %v3729 = vpop.f32.mrf.mxu0
    %v3730 = vadd.f32 0.0, %v3729
    %v3731 = vpop.f32.mrf.mxu0
    %3732 = vmatprep.mubr.f32.mxu0 0.0
    %3733 = vmatmul.mubr.f32.gmra.mxu0 %v2661
    %v3734 = vpop.f32.mrf.mxu0
    %v3735 = vadd.f32 0.0, %v3734
    %v3736 = vpop.f32.mrf.mxu0
    %3737 = vmatprep.mubr.f32.mxu0 0.0
    %3738 = vmatmul.mubr.f32.gmra.mxu0 %v2662
    %v3739 = vpop.f32.mrf.mxu0
    %v3740 = vadd.f32 0.0, %v3739
    %v3741 = vpop.f32.mrf.mxu0
    %3742 = vmatprep.mubr.f32.mxu0 0.0
    %3743 = vmatmul.mubr.f32.gmra.mxu0 %v2663
    %v3744 = vpop.f32.mrf.mxu0
    %v3745 = vadd.f32 0.0, %v3744
    %v3746 = vpop.f32.mrf.mxu0
    %3747 = vmatprep.mubr.f32.mxu0 0.0
    %3748 = vmatmul.mubr.f32.gmra.mxu0 %v2664
    %v3749 = vpop.f32.mrf.mxu0
    %v3750 = vadd.f32 0.0, %v3749
    %v3751 = vpop.f32.mrf.mxu0
    %3752 = vmatprep.mubr.f32.mxu0 0.0
    %3753 = vmatmul.mubr.f32.gmra.mxu0 %v2665
    %v3754 = vpop.f32.mrf.mxu0
    %v3755 = vadd.f32 0.0, %v3754
    %v3756 = vpop.f32.mrf.mxu0
    %3757 = vmatprep.mubr.f32.mxu0 0.0
    %3758 = vmatmul.mubr.f32.gmra.mxu0 %v2666
    %v3759 = vpop.f32.mrf.mxu0
    %v3760 = vadd.f32 0.0, %v3759
    %v3761 = vpop.f32.mrf.mxu0
    %3762 = vdwg.mxu0
    %v3763 = vxor.u32 %v3604, 2147483648
    %v3764 = vxor.u32 %v3609, 2147483648
    %v3765 = vxor.u32 %v3614, 2147483648
    %v3766 = vxor.u32 %v3619, 2147483648
    %v3767 = vxor.u32 %v3624, 2147483648
    %v3768 = vxor.u32 %v3629, 2147483648
    %v3769 = vxor.u32 %v3634, 2147483648
    %v3770 = vxor.u32 %v3639, 2147483648
    %v3771 = vmul.f32 %v3763, 1.442695
    %v3772 = vpow.pop %v3771
    %v3773 = vmul.f32 %v3764, 1.442695
    %v3774 = vpow.pop %v3773
    %v3775 = vmul.f32 %v3765, 1.442695
    %v3776 = vpow.pop %v3775
    %v3777 = vmul.f32 %v3766, 1.442695
    %v3778 = vpow.pop %v3777
    %v3779 = vmul.f32 %v3767, 1.442695
    %v3780 = vpow.pop %v3779
    %v3781 = vmul.f32 %v3768, 1.442695
    %v3782 = vpow.pop %v3781
    %v3783 = vmul.f32 %v3769, 1.442695
    %v3784 = vpow.pop %v3783
    %v3785 = vmul.f32 %v3770, 1.442695
    %v3786 = vpow.pop %v3785
    %v3787 = vadd.f32 %v3772, 1.0
    %v3788 = vadd.f32 %v3774, 1.0
    %v3789 = vadd.f32 %v3776, 1.0
    %v3790 = vadd.f32 %v3778, 1.0
    %v3791 = vadd.f32 %v3780, 1.0
    %v3792 = vadd.f32 %v3782, 1.0
    %v3793 = vadd.f32 %v3784, 1.0
    %v3794 = vadd.f32 %v3786, 1.0
    %v3795 = vrcp.pop %v3787
    %v3796 = vmul.f32 1.0, %v3795
    %v3797 = vrcp.pop %v3788
    %v3798 = vmul.f32 1.0, %v3797
    %v3799 = vrcp.pop %v3789
    %v3800 = vmul.f32 1.0, %v3799
    %v3801 = vrcp.pop %v3790
    %v3802 = vmul.f32 1.0, %v3801
    %v3803 = vrcp.pop %v3791
    %v3804 = vmul.f32 1.0, %v3803
    %v3805 = vrcp.pop %v3792
    %v3806 = vmul.f32 1.0, %v3805
    %v3807 = vrcp.pop %v3793
    %v3808 = vmul.f32 1.0, %v3807
    %v3809 = vrcp.pop %v3794
    %v3810 = vmul.f32 1.0, %v3809
    %v3811 = vmul.f32 %v3604, %v3796
    %v3812 = vmul.f32 %v3609, %v3798
    %v3813 = vmul.f32 %v3614, %v3800
    %v3814 = vmul.f32 %v3619, %v3802
    %v3815 = vmul.f32 %v3624, %v3804
    %v3816 = vmul.f32 %v3629, %v3806
    %v3817 = vmul.f32 %v3634, %v3808
    %v3818 = vmul.f32 %v3639, %v3810
    %v3819 = vmul.f32 %v3811, %v3725
    %v3820 = vmul.f32 %v3812, %v3730
    %v3821 = vmul.f32 %v3813, %v3735
    %v3822 = vmul.f32 %v3814, %v3740
    %v3823 = vmul.f32 %v3815, %v3745
    %v3824 = vmul.f32 %v3816, %v3750
    %v3825 = vmul.f32 %v3817, %v3755
    %v3826 = vmul.f32 %v3818, %v3760
    %v3827 = vld [vmem:[#allocation11 + $0x100] sm:$0xff]
    %v3828 = vld [vmem:[#allocation11 + $0x108] sm:$0xff]
    %v3829 = vld [vmem:[#allocation11 + $0x110] sm:$0xff]
    %v3830 = vld [vmem:[#allocation11 + $0x118] sm:$0xff]
    %v3831 = vld [vmem:[#allocation11 + $0x120] sm:$0xff]
    %v3832 = vld [vmem:[#allocation11 + $0x128] sm:$0xff]
    %v3833 = vld [vmem:[#allocation11 + $0x130] sm:$0xff]
    %v3834 = vld [vmem:[#allocation11 + $0x138] sm:$0xff]
    %v3835 = vld [vmem:[#allocation11 + $0x140] sm:$0xff]
    %v3836 = vld [vmem:[#allocation11 + $0x148] sm:$0xff]
    %v3837 = vld [vmem:[#allocation11 + $0x150] sm:$0xff]
    %v3838 = vld [vmem:[#allocation11 + $0x158] sm:$0xff]
    %v3839 = vld [vmem:[#allocation11 + $0x160] sm:$0xff]
    %v3840 = vld [vmem:[#allocation11 + $0x168] sm:$0xff]
    %v3841 = vld [vmem:[#allocation11 + $0x170] sm:$0xff]
    %v3842 = vld [vmem:[#allocation11 + $0x178] sm:$0xff]
    %3843 = vmatprep.subr.mxu0 0.0
    %3844 = vmatpush1.msra.mxu0 %v3842
    %3845 = vmatprep.subr.mxu0 0.0
    %3846 = vmatpush1.msra.mxu0 %v3841
    %3847 = vmatprep.subr.mxu0 0.0
    %3848 = vmatpush1.msra.mxu0 %v3840
    %3849 = vmatprep.subr.mxu0 0.0
    %3850 = vmatpush1.msra.mxu0 %v3839
    %3851 = vmatprep.subr.mxu0 0.0
    %3852 = vmatpush1.msra.mxu0 %v3838
    %3853 = vmatprep.subr.mxu0 0.0
    %3854 = vmatpush1.msra.mxu0 %v3837
    %3855 = vmatprep.subr.mxu0 0.0
    %3856 = vmatpush1.msra.mxu0 %v3836
    %3857 = vmatprep.subr.mxu0 0.0
    %3858 = vmatpush1.msra.mxu0 %v3835
    %3859 = vmatprep.subr.mxu0 0.0
    %3860 = vmatpush1.msra.mxu0 %v3834
    %3861 = vmatprep.subr.mxu0 0.0
    %3862 = vmatpush1.msra.mxu0 %v3833
    %3863 = vmatprep.subr.mxu0 0.0
    %3864 = vmatpush1.msra.mxu0 %v3832
    %3865 = vmatprep.subr.mxu0 0.0
    %3866 = vmatpush1.msra.mxu0 %v3831
    %3867 = vmatprep.subr.mxu0 0.0
    %3868 = vmatpush1.msra.mxu0 %v3830
    %3869 = vmatprep.subr.mxu0 0.0
    %3870 = vmatpush1.msra.mxu0 %v3829
    %3871 = vmatprep.subr.mxu0 0.0
    %3872 = vmatpush1.msra.mxu0 %v3828
    %3873 = vmatprep.subr.mxu0 0.0
    %3874 = vmatpush1.msra.mxu0 %v3827
    %3875 = vmatprep.subr.mxu0 0.0
    %3876 = vmatpush2.msra.mxu0 0.0
    %3877 = vmatprep.subr.mxu0 0.0
    %3878 = vmatpush2.msra.mxu0 0.0
    %3879 = vmatprep.subr.mxu0 0.0
    %3880 = vmatpush2.msra.mxu0 0.0
    %3881 = vmatprep.subr.mxu0 0.0
    %3882 = vmatpush2.msra.mxu0 0.0
    %3883 = vmatprep.subr.mxu0 0.0
    %3884 = vmatpush2.msra.mxu0 0.0
    %3885 = vmatprep.subr.mxu0 0.0
    %3886 = vmatpush2.msra.mxu0 0.0
    %3887 = vmatprep.subr.mxu0 0.0
    %3888 = vmatpush2.msra.mxu0 0.0
    %3889 = vmatprep.subr.mxu0 0.0
    %3890 = vmatpush2.msra.mxu0 0.0
    %3891 = vmatprep.subr.mxu0 0.0
    %3892 = vmatpush2.msra.mxu0 0.0
    %3893 = vmatprep.subr.mxu0 0.0
    %3894 = vmatpush2.msra.mxu0 0.0
    %3895 = vmatprep.subr.mxu0 0.0
    %3896 = vmatpush2.msra.mxu0 0.0
    %3897 = vmatprep.subr.mxu0 0.0
    %3898 = vmatpush2.msra.mxu0 0.0
    %3899 = vmatprep.subr.mxu0 0.0
    %3900 = vmatpush2.msra.mxu0 0.0
    %3901 = vmatprep.subr.mxu0 0.0
    %3902 = vmatpush2.msra.mxu0 0.0
    %3903 = vmatprep.subr.mxu0 0.0
    %3904 = vmatpush2.msra.mxu0 0.0
    %3905 = vmatprep.subr.mxu0 0.0
    %3906 = vmatpush2.msra.mxu0 0.0
    %3907 = vmatprep.mubr.f32.mxu0 0.0
    %3908 = vmatmul.mubr.f32.gmra.mxu0 %v3819
    %v3909 = vpop.f32.mrf.mxu0
    %v3910 = vadd.f32 0.0, %v3909
    %v3911 = vpop.f32.mrf.mxu0
    %3912 = vmatprep.mubr.f32.mxu0 0.0
    %3913 = vmatmul.mubr.f32.gmra.mxu0 %v3820
    %v3914 = vpop.f32.mrf.mxu0
    %v3915 = vadd.f32 0.0, %v3914
    %v3916 = vpop.f32.mrf.mxu0
    %3917 = vmatprep.mubr.f32.mxu0 0.0
    %3918 = vmatmul.mubr.f32.gmra.mxu0 %v3821
    %v3919 = vpop.f32.mrf.mxu0
    %v3920 = vadd.f32 0.0, %v3919
    %v3921 = vpop.f32.mrf.mxu0
    %3922 = vmatprep.mubr.f32.mxu0 0.0
    %3923 = vmatmul.mubr.f32.gmra.mxu0 %v3822
    %v3924 = vpop.f32.mrf.mxu0
    %v3925 = vadd.f32 0.0, %v3924
    %v3926 = vpop.f32.mrf.mxu0
    %3927 = vmatprep.mubr.f32.mxu0 0.0
    %3928 = vmatmul.mubr.f32.gmra.mxu0 %v3823
    %v3929 = vpop.f32.mrf.mxu0
    %v3930 = vadd.f32 0.0, %v3929
    %v3931 = vpop.f32.mrf.mxu0
    %3932 = vmatprep.mubr.f32.mxu0 0.0
    %3933 = vmatmul.mubr.f32.gmra.mxu0 %v3824
    %v3934 = vpop.f32.mrf.mxu0
    %v3935 = vadd.f32 0.0, %v3934
    %v3936 = vpop.f32.mrf.mxu0
    %3937 = vmatprep.mubr.f32.mxu0 0.0
    %3938 = vmatmul.mubr.f32.gmra.mxu0 %v3825
    %v3939 = vpop.f32.mrf.mxu0
    %v3940 = vadd.f32 0.0, %v3939
    %v3941 = vpop.f32.mrf.mxu0
    %3942 = vmatprep.mubr.f32.mxu0 0.0
    %3943 = vmatmul.mubr.f32.gmra.mxu0 %v3826
    %v3944 = vpop.f32.mrf.mxu0
    %v3945 = vadd.f32 0.0, %v3944
    %v3946 = vpop.f32.mrf.mxu0
    %3947 = vdwg.mxu0
    %v3948 = vadd.f32 %v3483, %v3910
    %v3949 = vadd.f32 %v3488, %v3915
    %v3950 = vadd.f32 %v3493, %v3920
    %v3951 = vadd.f32 %v3498, %v3925
    %v3952 = vadd.f32 %v3503, %v3930
    %v3953 = vadd.f32 %v3508, %v3935
    %v3954 = vadd.f32 %v3513, %v3940
    %v3955 = vadd.f32 %v3518, %v3945
    %v3956 = vadd.f32 %v2547, %v3948
    %v3957 = vadd.f32 %v2548, %v3949
    %v3958 = vadd.f32 %v2549, %v3950
    %v3959 = vadd.f32 %v2550, %v3951
    %v3960 = vadd.f32 %v2551, %v3952
    %v3961 = vadd.f32 %v2552, %v3953
    %v3962 = vadd.f32 %v2553, %v3954
    %v3963 = vadd.f32 %v2554, %v3955
    %3964 = vst [vmem:[#allocation13] sm:$0xff] %v3956
    %3965 = vst [vmem:[#allocation13 + $0x8] sm:$0xff] %v3957
    %3966 = vst [vmem:[#allocation13 + $0x10] sm:$0xff] %v3958
    %3967 = vst [vmem:[#allocation13 + $0x18] sm:$0xff] %v3959
    %3968 = vst [vmem:[#allocation13 + $0x20] sm:$0xff] %v3960
    %3969 = vst [vmem:[#allocation13 + $0x28] sm:$0xff] %v3961
    %3970 = vst [vmem:[#allocation13 + $0x30] sm:$0xff] %v3962
    %3971 = vst [vmem:[#allocation13 + $0x38] sm:$0xff] %v3963
    // Predicated region
    $region50: #{tpu_custom_call.1} parent=1 // pred_check
      _
    $region51: #{tpu_custom_call.1} parent=1 // pred_check_branch
      %3973 = sbr.rel (0) target = $region53
    $region52: #{tpu_custom_call.1} parent=1 // pred_region
      %s3975 = ssub.s32 1024, 1024
      %3976 = vsyncadd [#allocation4], %s3975
      %s3977 = sshll.u32 [#allocation13], 4
      %s3978 = int_to_ptr.vmem [resolvable:$true] %s3977
      %3983 = dma.vmem_to_hbm [thread:$0]  %s3978, 1024, %s6, [#allocation4], 128, 128, 8
    $region53: #{tpu_custom_call.1} parent=1 // pred_fallthru
      _
    // Predicated region
    $region54: #{tpu_custom_call.1} parent=1 // pred_check
      _
    $region55: #{tpu_custom_call.1} parent=1 // pred_check_branch
      %3985 = sbr.rel (0) target = $region57
    $region56: #{tpu_custom_call.1} parent=1 // pred_region
      %3986 = dma.done [#allocation4], 1024
    $region57: #{tpu_custom_call.1} parent=1 // pred_fallthru
      _
    %3987 = vsyncpa [#allocation3], 1
    %3988 = vsyncpa [#allocation6], 1
    %3989 = vsyncpa [#allocation9], 1
    %3990 = vsyncpa [#allocation12], 1
    %3991 = vsyncpa [#allocation4], 1

</llo_original>
